<compile_context>
chip_gen: v7x
topology: tpu7x:2x2x1
jax: 0.10.0
libtpu: 0.0.40
codegen_flags: <defaults>
</compile_context>

<pallas_src>
import jax
import jax.numpy as jnp
from jax.experimental import pallas as pl
from jax.experimental.pallas import tpu as pltpu


def _round_up(x, m):
    return (x + m - 1) // m * m


def _critic_kernel(x_ref, w1_ref, b1_ref, w2_ref, b2_ref, w3_ref, b3_ref, out_ref):
    """One batch tile of the critic MLP.

    x:  (TB, D_pad)       bf16
    w1: (D_pad, L1_pad)   bf16    b1: (1, L1_pad) f32
    w2: (L1_pad, L2_pad)  bf16    b2: (1, L2_pad) f32
    w3: (1, L2_pad)       f32     b3: (1,)        f32 (SMEM scalar)
    out:(TB, 1)           f32
    """
    # Layer 1: bf16 MXU matmul, f32 accumulation; bias + ReLU in f32 on the VPU.
    h1 = jnp.dot(x_ref[...], w1_ref[...], preferred_element_type=jnp.float32)
    h1 = jnp.maximum(h1 + b1_ref[...], 0.0)

    # Layer 2: cast activations to bf16 only as a dot operand (keeps VPU work in f32).
    h2 = jnp.dot(h1.astype(jnp.bfloat16), w2_ref[...],
                 preferred_element_type=jnp.float32)
    h2 = jnp.maximum(h2 + b2_ref[...], 0.0)

    # Layer 3 (out_features == 1): VPU broadcast-multiply + XLU lane reduction instead of
    # an N=1 MXU matmul. Padded L2 lanes of h2 are exactly 0, so they contribute nothing.
    v = jnp.sum(h2 * w3_ref[...], axis=-1, keepdims=True) + b3_ref[0]
    out_ref[...] = v.astype(out_ref.dtype)


@jax.jit
def critic_forward(state, w1, b1, w2, b2, w3, b3):
    """state: (B, D_in) f32. Packed/padded params from pack_params. Returns (B, 1) f32."""
    B, D_in = state.shape
    D_pad = w1.shape[0]

    # Batch tile: 128 rows for realistic PPO batches, 8-row minimum for tiny batches.
    TB = min(128, _round_up(B, 8))
    B_pad = _round_up(B, TB)

    # Zero-pad batch and feature dims; cast activations to bf16 for the MXU operand.
    x = jnp.zeros((B_pad, D_pad), jnp.bfloat16)
    x = x.at[:B, :D_in].set(state.astype(jnp.bfloat16))

    const = lambda i: (0, 0)  # weights/biases stay VMEM-resident across batch tiles

    out = pl.pallas_call(
        _critic_kernel,
        out_shape=jax.ShapeDtypeStruct((B_pad, 1), jnp.float32),
        grid=(B_pad // TB,),
        in_specs=[
            pl.BlockSpec((TB, D_pad), lambda i: (i, 0)),   # state tile, pipelined over batch
            pl.BlockSpec(w1.shape, const),
            pl.BlockSpec(b1.shape, const),
            pl.BlockSpec(w2.shape, const),
            pl.BlockSpec(b2.shape, const),
            pl.BlockSpec(w3.shape, const),
            pl.BlockSpec(memory_space=pltpu.MemorySpace.SMEM),  # b3 scalar
        ],
        out_specs=pl.BlockSpec((TB, 1), lambda i: (i, 0)),
        compiler_params=pltpu.CompilerParams(
            # Batch tiles are independent -> shard across v7x's 2 TensorCores.
            dimension_semantics=("parallel",),
        ),
    )(x, w1, b1, w2, b2, w3, b3)
    return out[:B]


def init_params(key, d_in, l1, l2):
    """Deterministic synthetic init (PyTorch-like uniform fan-in scaling), logical shapes."""
    ks = jax.random.split(key, 6)

    def lin(kw, kb, fan_in, fan_out):
        bound = 1.0 / jnp.sqrt(fan_in)
        w = jax.random.uniform(kw, (fan_in, fan_out), jnp.float32, -bound, bound)
        b = jax.random.uniform(kb, (fan_out,), jnp.float32, -bound, bound)
        return w, b

    w1, b1 = lin(ks[0], ks[1], d_in, l1)
    w2, b2 = lin(ks[2], ks[3], l1, l2)
    w3, b3 = lin(ks[4], ks[5], l2, 1)
    return w1, b1, w2, b2, w3, b3


def pack_params(w1, b1, w2, b2, w3, b3):
    """Zero-pad feature dims to multiples of 128 and cast the big weights to bf16."""
    d_in, l1 = w1.shape
    l2 = w2.shape[1]
    d_pad = _round_up(d_in, 128)
    l1_pad = _round_up(l1, 128)
    l2_pad = _round_up(l2, 128)

    def pad2(a, rows, cols):
        return jnp.pad(a, ((0, rows - a.shape[0]), (0, cols - a.shape[1])))

    w1p = pad2(w1, d_pad, l1_pad).astype(jnp.bfloat16)
    b1p = jnp.pad(b1, (0, l1_pad - l1)).reshape(1, l1_pad)               # f32
    w2p = pad2(w2, l1_pad, l2_pad).astype(jnp.bfloat16)
    b2p = jnp.pad(b2, (0, l2_pad - l2)).reshape(1, l2_pad)               # f32
    w3p = jnp.pad(w3.reshape(-1), (0, l2_pad - l2)).reshape(1, l2_pad)   # f32 row for VPU
    b3p = b3.reshape(1)                                                  # f32 scalar (SMEM)
    return w1p, b1p, w2p, b2p, w3p, b3p


if __name__ == "__main__":
    # Module-consistent small shapes:
    #   input_dims = (4, 4, 3) -> D_in = 48 (state arrives already flattened, as nn.Linear expects)
    #   Layer1_dims = 17*20 = 340, Layer2_dims = 119*20 = 2380 (module defaults), batch = 2
    input_dims = (4, 4, 3)
    d_in = input_dims[0] * input_dims[1] * input_dims[2]
    L1, L2 = 17 * 20, 119 * 20
    batch = 2

    key = jax.random.PRNGKey(0)
    k_state, k_params = jax.random.split(key)

    state = jax.random.normal(k_state, (batch, d_in), dtype=jnp.float32)
    raw_params = init_params(k_params, d_in, L1, L2)
    packed = pack_params(*raw_params)

    value = critic_forward(state, *packed)
    jax.block_until_ready(value)

    # Plain-JAX f32 reference of the same MLP (kernel uses bf16 weights -> looser tolerance).
    w1, b1, w2, b2, w3, b3 = raw_params
    ref = jnp.maximum(state @ w1 + b1, 0.0)
    ref = jnp.maximum(ref @ w2 + b2, 0.0)
    ref = ref @ w3 + b3

    assert value.shape == (batch, 1)
    assert jnp.allclose(value, ref, atol=5e-2, rtol=5e-2), (value, ref)

    print("KERNEL_OK")
</pallas_src>

<mosaic_0001>
module attributes {stable_mosaic.version = 11 : i64} {
  func.func @_critic_kernel(%arg0: i32, %arg1: memref<8x128xbf16, #tpu.memory_space<vmem>>, %arg2: memref<128x384xbf16, #tpu.memory_space<vmem>>, %arg3: memref<1x384xf32, #tpu.memory_space<vmem>>, %arg4: memref<384x2432xbf16, #tpu.memory_space<vmem>>, %arg5: memref<1x2432xf32, #tpu.memory_space<vmem>>, %arg6: memref<1x2432xf32, #tpu.memory_space<vmem>>, %arg7: memref<1xf32, #tpu.memory_space<smem>>, %arg8: memref<8x1xf32, #tpu.memory_space<vmem>>) attributes {dimension_semantics = [#tpu.dimension_semantics<parallel>], iteration_bounds = array<i64: 1>, scalar_prefetch = 0 : i64, scratch_operands = 0 : i64, tpu.core_type = #tpu.core_type<tc>, window_params = [{transform_indices = @transform_0, window_bounds = array<i64: 8, 128>}, {pipeline_mode = #tpu.pipeline_mode<synchronous>, transform_indices = @transform_1, window_bounds = array<i64: 128, 384>}, {pipeline_mode = #tpu.pipeline_mode<synchronous>, transform_indices = @transform_2, window_bounds = array<i64: 1, 384>}, {pipeline_mode = #tpu.pipeline_mode<synchronous>, transform_indices = @transform_3, window_bounds = array<i64: 384, 2432>}, {pipeline_mode = #tpu.pipeline_mode<synchronous>, transform_indices = @transform_4, window_bounds = array<i64: 1, 2432>}, {pipeline_mode = #tpu.pipeline_mode<synchronous>, transform_indices = @transform_5, window_bounds = array<i64: 1, 2432>}, {transform_indices = @transform_6, window_bounds = array<i64: 1>}, {transform_indices = @transform_7, window_bounds = array<i64: 8, 1>}]} {
    %c0 = arith.constant 0 : index
    %c0_0 = arith.constant 0 : index
    %0 = vector.load %arg1[%c0, %c0_0] : memref<8x128xbf16, #tpu.memory_space<vmem>>, vector<8x128xbf16>
    %c0_1 = arith.constant 0 : index
    %c0_2 = arith.constant 0 : index
    %1 = vector.load %arg2[%c0_1, %c0_2] : memref<128x384xbf16, #tpu.memory_space<vmem>>, vector<128x384xbf16>
    %cst = arith.constant dense<0.000000e+00> : vector<8x384xf32>
    %2 = tpu.matmul %0, %1, %cst {dimension_numbers = #tpu.dot_dimension_numbers<[1], [0], [0], [1], [0, 0, 1, 1], [], []>} : vector<8x128xbf16>, vector<128x384xbf16>, vector<8x384xf32> -> vector<8x384xf32>
    %c0_3 = arith.constant 0 : index
    %c0_4 = arith.constant 0 : index
    %3 = vector.load %arg3[%c0_3, %c0_4] : memref<1x384xf32, #tpu.memory_space<vmem>>, vector<1x384xf32>
    %4 = vector.broadcast %3 : vector<1x384xf32> to vector<8x384xf32>
    %5 = arith.addf %2, %4 : vector<8x384xf32>
    %cst_5 = arith.constant 0.000000e+00 : f32
    %6 = vector.broadcast %cst_5 : f32 to vector<8x384xf32>
    %7 = arith.maximumf %5, %6 : vector<8x384xf32>
    %8 = arith.truncf %7 : vector<8x384xf32> to vector<8x384xbf16>
    %c0_6 = arith.constant 0 : index
    %c0_7 = arith.constant 0 : index
    %9 = vector.load %arg4[%c0_6, %c0_7] : memref<384x2432xbf16, #tpu.memory_space<vmem>>, vector<384x2432xbf16>
    %cst_8 = arith.constant dense<0.000000e+00> : vector<8x2432xf32>
    %10 = tpu.matmul %8, %9, %cst_8 {dimension_numbers = #tpu.dot_dimension_numbers<[1], [0], [0], [1], [0, 0, 1, 1], [], []>} : vector<8x384xbf16>, vector<384x2432xbf16>, vector<8x2432xf32> -> vector<8x2432xf32>
    %c0_9 = arith.constant 0 : index
    %c0_10 = arith.constant 0 : index
    %11 = vector.load %arg5[%c0_9, %c0_10] : memref<1x2432xf32, #tpu.memory_space<vmem>>, vector<1x2432xf32>
    %12 = vector.broadcast %11 : vector<1x2432xf32> to vector<8x2432xf32>
    %13 = arith.addf %10, %12 : vector<8x2432xf32>
    %cst_11 = arith.constant 0.000000e+00 : f32
    %14 = vector.broadcast %cst_11 : f32 to vector<8x2432xf32>
    %15 = arith.maximumf %13, %14 : vector<8x2432xf32>
    %c0_12 = arith.constant 0 : index
    %c0_13 = arith.constant 0 : index
    %16 = vector.load %arg6[%c0_12, %c0_13] : memref<1x2432xf32, #tpu.memory_space<vmem>>, vector<1x2432xf32>
    %17 = vector.broadcast %16 : vector<1x2432xf32> to vector<8x2432xf32>
    %18 = arith.mulf %15, %17 : vector<8x2432xf32>
    %cst_14 = arith.constant dense<0.000000e+00> : vector<8xf32>
    %19 = vector.multi_reduction <add>, %18, %cst_14 [1] : vector<8x2432xf32> to vector<8xf32>
    %20 = vector.shape_cast %19 : vector<8xf32> to vector<8x1xf32>
    %c0_15 = arith.constant 0 : index
    %21 = memref.load %arg7[%c0_15] : memref<1xf32, #tpu.memory_space<smem>>
    %22 = vector.broadcast %21 : f32 to vector<8x1xf32>
    %23 = arith.addf %20, %22 : vector<8x1xf32>
    %c0_16 = arith.constant 0 : index
    %c0_17 = arith.constant 0 : index
    %24 = vector.load %arg8[%c0_16, %c0_17] : memref<8x1xf32, #tpu.memory_space<vmem>>, vector<8x1xf32>
    tpu.vector_store %arg8[%c0_16, %c0_17], %23 {strides = array<i32>} : memref<8x1xf32, #tpu.memory_space<vmem>>, vector<8x1xf32>,
    return
  }
  func.func @transform_0(%arg0: i32) -> (i32, i32) {
    %c0_i32 = arith.constant 0 : i32
    %c0_i32_0 = arith.constant 0 : i32
    return %arg0, %c0_i32 : i32, i32
  }
  func.func @transform_1(%arg0: i32) -> (i32, i32) {
    %c0_i32 = arith.constant 0 : i32
    %c0_i32_0 = arith.constant 0 : i32
    %c0_i32_1 = arith.constant 0 : i32
    return %c0_i32, %c0_i32_0 : i32, i32
  }
  func.func @transform_2(%arg0: i32) -> (i32, i32) {
    %c0_i32 = arith.constant 0 : i32
    %c0_i32_0 = arith.constant 0 : i32
    %c0_i32_1 = arith.constant 0 : i32
    return %c0_i32, %c0_i32_0 : i32, i32
  }
  func.func @transform_3(%arg0: i32) -> (i32, i32) {
    %c0_i32 = arith.constant 0 : i32
    %c0_i32_0 = arith.constant 0 : i32
    %c0_i32_1 = arith.constant 0 : i32
    return %c0_i32, %c0_i32_0 : i32, i32
  }
  func.func @transform_4(%arg0: i32) -> (i32, i32) {
    %c0_i32 = arith.constant 0 : i32
    %c0_i32_0 = arith.constant 0 : i32
    %c0_i32_1 = arith.constant 0 : i32
    return %c0_i32, %c0_i32_0 : i32, i32
  }
  func.func @transform_5(%arg0: i32) -> (i32, i32) {
    %c0_i32 = arith.constant 0 : i32
    %c0_i32_0 = arith.constant 0 : i32
    %c0_i32_1 = arith.constant 0 : i32
    return %c0_i32, %c0_i32_0 : i32, i32
  }
  func.func @transform_6(%arg0: i32) -> i32 {
    %c0_i32 = arith.constant 0 : i32
    %c0_i32_0 = arith.constant 0 : i32
    return %c0_i32 : i32
  }
  func.func @transform_7(%arg0: i32) -> (i32, i32) {
    %c0_i32 = arith.constant 0 : i32
    %c0_i32_0 = arith.constant 0 : i32
    return %arg0, %c0_i32 : i32, i32
  }
}

</mosaic_0001>

<llo_original>
// kernel: critic_forward.1
$region0: #{critic_forward.1}
  #allocation0 [shape = 'u32[]', space=smem, size = 0x4, offset = 0x4, fixed_abs, tag = 'smem constant byte address 0x4 - core index']
  #allocation1 [shape = 'u32[144,128]{1,0:T(1,128)}', space=vmem, size = 0x12000, scoped, tag = 'internal scratch']
  #allocation2 [shape = 'f32[1]{0:T(128)S(6)}', space=smem, size = 0x200, scoped, tag = 'scoped memory for critic_forward.1']
  %s0 = inlined_call_operand.vmem [shape: bf16[8,128], index: 0, kind: input, shape index: {}]
  %s1 = inlined_call_operand.hbm [shape: bf16[128,384], index: 1, kind: input, shape index: {}]
  %s2 = inlined_call_operand.hbm [shape: f32[1,384], index: 2, kind: input, shape index: {}]
  %s3 = inlined_call_operand.hbm [shape: bf16[384,2432], index: 3, kind: input, shape index: {}]
  %s4 = inlined_call_operand.hbm [shape: f32[1,2432], index: 4, kind: input, shape index: {}]
  %s5 = inlined_call_operand.hbm [shape: f32[1,2432], index: 5, kind: input, shape index: {}]
  %s6 = inlined_call_operand.<no memory space> [shape: f32[1], index: 6, kind: input, shape index: {}]
  %s7 = inlined_call_operand.vmem [shape: f32[8,1], index: 7, kind: output, shape index: {}]
  %s8 = sld [smem:[#allocation0]]
  $region58: #{critic_forward.1} parent=0
    _
  %s10 = ssub.s32 1, %s8
  %s11 = scalar_select 0, %s10, %s8
  %12 = sst [smem:[#allocation2]] %s6
  $region1: #{critic_forward.1} parent=0
    #allocation3 [shape = 'u8[98304]{0}', space=vmem, size = 0x18000, scoped, tag = 'input window, operand 1, single buffered']
    #allocation4 [shape = 's32[1]{0}', space=sflag, size = 0x4, scoped, tag = 'scoped memory for critic_forward.1']
    #allocation5 [shape = 'u8[1536]{0}', space=vmem, size = 0x800, scoped, tag = 'input window, operand 2, single buffered']
    #allocation6 [shape = 's32[1]{0}', space=sflag, size = 0x4, scoped, tag = 'scoped memory for critic_forward.1']
    #allocation7 [shape = 'u8[1867776]{0}', space=vmem, size = 0x1c8000, scoped, tag = 'input window, operand 3, single buffered']
    #allocation8 [shape = 'u8[9728]{0}', space=vmem, size = 0x2800, scoped, tag = 'input window, operand 4, single buffered']
    #allocation9 [shape = 's32[1]{0}', space=sflag, size = 0x4, scoped, tag = 'scoped memory for critic_forward.1']
    #allocation10 [shape = 'u8[9728]{0}', space=vmem, size = 0x2800, scoped, tag = 'input window, operand 5, single buffered']
    %13 = vsyncpa [#allocation4], 0
    %14 = vsyncpa [#allocation6], 0
    %15 = vsyncpa [#allocation9], 0
    // Predicated region
    $region2: #{critic_forward.1} parent=1 // pred_check
      _
    $region3: #{critic_forward.1} parent=1 // pred_check_branch
      %17 = sbr.rel (0) target = $region5
    $region4: #{critic_forward.1} parent=1 // pred_region
      _
    $region5: #{critic_forward.1} parent=1 // pred_fallthru
      _
    // Predicated region
    $region6: #{critic_forward.1} parent=1 // pred_check
      _
    $region7: #{critic_forward.1} parent=1 // pred_check_branch
      %19 = sbr.rel (0) target = $region9
    $region8: #{critic_forward.1} parent=1 // pred_region
      %s21 = ssub.s32 3072, 3072
      %22 = vsyncadd [#allocation4], %s21
      %s23 = sshll.u32 [#allocation3], 4
      %s24 = int_to_ptr.vmem [resolvable:$true] %s23
      %29 = dma.hbm_to_vmem [thread:$0]  %s1, 3072, %s24, [#allocation4], 192, 192, 12
    $region9: #{critic_forward.1} parent=1 // pred_fallthru
      _
    // Predicated region
    $region10: #{critic_forward.1} parent=1 // pred_check
      _
    $region11: #{critic_forward.1} parent=1 // pred_check_branch
      %31 = sbr.rel (0) target = $region13
    $region12: #{critic_forward.1} parent=1 // pred_region
      %s33 = ssub.s32 48, 48
      %34 = vsyncadd [#allocation6], %s33
      %s36 = sshll.u32 [#allocation5], 4
      %s37 = int_to_ptr.vmem [resolvable:$true] %s36
      %39 = dma.hbm_to_vmem [thread:$0]  %s2, 48, %s37, [#allocation6]
    $region13: #{critic_forward.1} parent=1 // pred_fallthru
      _
    // Predicated region
    $region14: #{critic_forward.1} parent=1 // pred_check
      _
    $region15: #{critic_forward.1} parent=1 // pred_check_branch
      %41 = sbr.rel (0) target = $region17
    $region16: #{critic_forward.1} parent=1 // pred_region
      %s43 = ssub.s32 58368, 58368
      %44 = vsyncadd [#allocation6], %s43
      %s45 = sshll.u32 [#allocation7], 4
      %s46 = int_to_ptr.vmem [resolvable:$true] %s45
      %51 = dma.hbm_to_vmem [thread:$0]  %s3, 58368, %s46, [#allocation6], 1216, 1216, 76
    $region17: #{critic_forward.1} parent=1 // pred_fallthru
      _
    // Predicated region
    $region18: #{critic_forward.1} parent=1 // pred_check
      _
    $region19: #{critic_forward.1} parent=1 // pred_check_branch
      %53 = sbr.rel (0) target = $region21
    $region20: #{critic_forward.1} parent=1 // pred_region
      %s55 = ssub.s32 304, 304
      %56 = vsyncadd [#allocation9], %s55
      %s58 = sshll.u32 [#allocation8], 4
      %s59 = int_to_ptr.vmem [resolvable:$true] %s58
      %61 = dma.hbm_to_vmem [thread:$0]  %s4, 304, %s59, [#allocation9]
    $region21: #{critic_forward.1} parent=1 // pred_fallthru
      _
    // Predicated region
    $region22: #{critic_forward.1} parent=1 // pred_check
      _
    $region23: #{critic_forward.1} parent=1 // pred_check_branch
      %63 = sbr.rel (0) target = $region25
    $region24: #{critic_forward.1} parent=1 // pred_region
      %s65 = ssub.s32 304, 304
      %66 = vsyncadd [#allocation9], %s65
      %s68 = sshll.u32 [#allocation10], 4
      %s69 = int_to_ptr.vmem [resolvable:$true] %s68
      %71 = dma.hbm_to_vmem [thread:$0]  %s5, 304, %s69, [#allocation9]
    $region25: #{critic_forward.1} parent=1 // pred_fallthru
      _
    // Predicated region
    $region26: #{critic_forward.1} parent=1 // pred_check
      _
    $region27: #{critic_forward.1} parent=1 // pred_check_branch
      %73 = sbr.rel (0) target = $region29
    $region28: #{critic_forward.1} parent=1 // pred_region
      _
    $region29: #{critic_forward.1} parent=1 // pred_fallthru
      _
    // Predicated region
    $region30: #{critic_forward.1} parent=1 // pred_check
      _
    $region31: #{critic_forward.1} parent=1 // pred_check_branch
      %75 = sbr.rel (0) target = $region33
    $region32: #{critic_forward.1} parent=1 // pred_region
      %76 = dma.done [#allocation4], 3072
    $region33: #{critic_forward.1} parent=1 // pred_fallthru
      _
    // Predicated region
    $region34: #{critic_forward.1} parent=1 // pred_check
      _
    $region35: #{critic_forward.1} parent=1 // pred_check_branch
      %78 = sbr.rel (0) target = $region37
    $region36: #{critic_forward.1} parent=1 // pred_region
      %79 = dma.done [#allocation6], 48
    $region37: #{critic_forward.1} parent=1 // pred_fallthru
      _
    // Predicated region
    $region38: #{critic_forward.1} parent=1 // pred_check
      _
    $region39: #{critic_forward.1} parent=1 // pred_check_branch
      %81 = sbr.rel (0) target = $region41
    $region40: #{critic_forward.1} parent=1 // pred_region
      %82 = dma.done [#allocation6], 58368
    $region41: #{critic_forward.1} parent=1 // pred_fallthru
      _
    // Predicated region
    $region42: #{critic_forward.1} parent=1 // pred_check
      _
    $region43: #{critic_forward.1} parent=1 // pred_check_branch
      %84 = sbr.rel (0) target = $region45
    $region44: #{critic_forward.1} parent=1 // pred_region
      %85 = dma.done [#allocation9], 304
    $region45: #{critic_forward.1} parent=1 // pred_fallthru
      _
    // Predicated region
    $region46: #{critic_forward.1} parent=1 // pred_check
      _
    $region47: #{critic_forward.1} parent=1 // pred_check_branch
      %87 = sbr.rel (0) target = $region49
    $region48: #{critic_forward.1} parent=1 // pred_region
      %88 = dma.done [#allocation9], 304
    $region49: #{critic_forward.1} parent=1 // pred_fallthru
      _
    %v90 = vld [vmem:[%s0] sm:$0xf]
    %v91 = vld [vmem:[#allocation3] sm:$0xff]
    %v92 = vld [vmem:[#allocation3 + $0x8] sm:$0xf]
    %v93 = vld [vmem:[#allocation3 + $0xc] sm:$0xff]
    %v94 = vld [vmem:[#allocation3 + $0x14] sm:$0xf]
    %v95 = vld [vmem:[#allocation3 + $0x18] sm:$0xff]
    %v96 = vld [vmem:[#allocation3 + $0x20] sm:$0xf]
    %v97 = vld [vmem:[#allocation3 + $0x24] sm:$0xff]
    %v98 = vld [vmem:[#allocation3 + $0x2c] sm:$0xf]
    %v99 = vld [vmem:[#allocation3 + $0x30] sm:$0xff]
    %v100 = vld [vmem:[#allocation3 + $0x38] sm:$0xf]
    %v101 = vld [vmem:[#allocation3 + $0x3c] sm:$0xff]
    %v102 = vld [vmem:[#allocation3 + $0x44] sm:$0xf]
    %v103 = vld [vmem:[#allocation3 + $0x48] sm:$0xff]
    %v104 = vld [vmem:[#allocation3 + $0x50] sm:$0xf]
    %v105 = vld [vmem:[#allocation3 + $0x54] sm:$0xff]
    %v106 = vld [vmem:[#allocation3 + $0x5c] sm:$0xf]
    %v107 = vld [vmem:[#allocation3 + $0x60] sm:$0xff]
    %v108 = vld [vmem:[#allocation3 + $0x68] sm:$0xf]
    %v109 = vld [vmem:[#allocation3 + $0x6c] sm:$0xff]
    %v110 = vld [vmem:[#allocation3 + $0x74] sm:$0xf]
    %v111 = vld [vmem:[#allocation3 + $0x78] sm:$0xff]
    %v112 = vld [vmem:[#allocation3 + $0x80] sm:$0xf]
    %v113 = vld [vmem:[#allocation3 + $0x84] sm:$0xff]
    %v114 = vld [vmem:[#allocation3 + $0x8c] sm:$0xf]
    %v115 = vld [vmem:[#allocation3 + $0x90] sm:$0xff]
    %v116 = vld [vmem:[#allocation3 + $0x98] sm:$0xf]
    %v117 = vld [vmem:[#allocation3 + $0x9c] sm:$0xff]
    %v118 = vld [vmem:[#allocation3 + $0xa4] sm:$0xf]
    %v119 = vld [vmem:[#allocation3 + $0xa8] sm:$0xff]
    %v120 = vld [vmem:[#allocation3 + $0xb0] sm:$0xf]
    %v121 = vld [vmem:[#allocation3 + $0xb4] sm:$0xff]
    %v122 = vld [vmem:[#allocation3 + $0xbc] sm:$0xf]
    %v123 = vld [vmem:[#allocation5] sm:$0x7]
    %v125 = vlaneseq
    %v126 = vshrl.u32 %v125, 7
    %v127 = vsub.s32 0, %v126
    %v128 = vrot.slane %v123, %v127
    %v129 = vlaneseq
    %v130 = vshrl.u32 %v129, 7
    %v131 = vsub.s32 1, %v130
    %v132 = vrot.slane %v123, %v131
    %v133 = vlaneseq
    %v134 = vshrl.u32 %v133, 7
    %v135 = vsub.s32 2, %v134
    %v136 = vrot.slane %v123, %v135
    %v172 = vunpack.c.l.b16 %v91
    %v173 = vunpack.c.h.b16 %v91
    %v174 = vunpack.c.l.b16 %v92
    %v175 = vunpack.c.l.b16 %v93
    %v176 = vunpack.c.h.b16 %v93
    %v177 = vunpack.c.l.b16 %v94
    %v178 = vunpack.c.l.b16 %v95
    %v179 = vunpack.c.h.b16 %v95
    %v180 = vunpack.c.l.b16 %v96
    %v181 = vunpack.c.l.b16 %v97
    %v182 = vunpack.c.h.b16 %v97
    %v183 = vunpack.c.l.b16 %v98
    %v184 = vunpack.c.l.b16 %v99
    %v185 = vunpack.c.h.b16 %v99
    %v186 = vunpack.c.l.b16 %v100
    %v187 = vunpack.c.l.b16 %v101
    %v188 = vunpack.c.h.b16 %v101
    %v189 = vunpack.c.l.b16 %v102
    %v190 = vunpack.c.l.b16 %v103
    %v191 = vunpack.c.h.b16 %v103
    %v192 = vunpack.c.l.b16 %v104
    %v193 = vunpack.c.l.b16 %v105
    %v194 = vunpack.c.h.b16 %v105
    %v195 = vunpack.c.l.b16 %v106
    %v196 = vunpack.c.l.b16 %v107
    %v197 = vunpack.c.h.b16 %v107
    %v198 = vunpack.c.l.b16 %v108
    %v199 = vunpack.c.l.b16 %v109
    %v200 = vunpack.c.h.b16 %v109
    %v201 = vunpack.c.l.b16 %v110
    %v202 = vunpack.c.l.b16 %v111
    %v203 = vunpack.c.h.b16 %v111
    %v204 = vunpack.c.l.b16 %v112
    %v205 = vunpack.c.l.b16 %v113
    %v206 = vunpack.c.h.b16 %v113
    %v207 = vunpack.c.l.b16 %v114
    %v208 = vunpack.c.l.b16 %v115
    %v209 = vunpack.c.h.b16 %v115
    %v210 = vunpack.c.l.b16 %v116
    %v211 = vunpack.c.l.b16 %v117
    %v212 = vunpack.c.h.b16 %v117
    %v213 = vunpack.c.l.b16 %v118
    %v214 = vunpack.c.l.b16 %v119
    %v215 = vunpack.c.h.b16 %v119
    %v216 = vunpack.c.l.b16 %v120
    %v217 = vunpack.c.l.b16 %v121
    %v218 = vunpack.c.h.b16 %v121
    %v219 = vunpack.c.l.b16 %v122
    %v220 = vpack.c.b16 %v175, %v172
    %v221 = vpack.c.b16 %v176, %v173
    %v222 = vpack.c.b16 %v177, %v174
    %v223 = vpack.c.b16 %v181, %v178
    %v224 = vpack.c.b16 %v182, %v179
    %v225 = vpack.c.b16 %v183, %v180
    %v226 = vpack.c.b16 %v187, %v184
    %v227 = vpack.c.b16 %v188, %v185
    %v228 = vpack.c.b16 %v189, %v186
    %v229 = vpack.c.b16 %v193, %v190
    %v230 = vpack.c.b16 %v194, %v191
    %v231 = vpack.c.b16 %v195, %v192
    %v232 = vpack.c.b16 %v199, %v196
    %v233 = vpack.c.b16 %v200, %v197
    %v234 = vpack.c.b16 %v201, %v198
    %v235 = vpack.c.b16 %v205, %v202
    %v236 = vpack.c.b16 %v206, %v203
    %v237 = vpack.c.b16 %v207, %v204
    %v238 = vpack.c.b16 %v211, %v208
    %v239 = vpack.c.b16 %v212, %v209
    %v240 = vpack.c.b16 %v213, %v210
    %v241 = vpack.c.b16 %v217, %v214
    %v242 = vpack.c.b16 %v218, %v215
    %v243 = vpack.c.b16 %v219, %v216
    %268 = vmatprep.subr.bf16.mxu0 %v221
    %269 = vmatpush1.bf16.msra.mxu0 %v220
    %270 = vmatprep.subr.bf16.mxu0 %v224
    %271 = vmatpush1.bf16.msra.mxu0 %v223
    %272 = vmatprep.subr.bf16.mxu0 %v227
    %273 = vmatpush1.bf16.msra.mxu0 %v226
    %274 = vmatprep.subr.bf16.mxu0 %v230
    %275 = vmatpush1.bf16.msra.mxu0 %v229
    %276 = vmatprep.subr.bf16.mxu0 %v233
    %277 = vmatpush1.bf16.msra.mxu0 %v232
    %278 = vmatprep.subr.bf16.mxu0 %v236
    %279 = vmatpush1.bf16.msra.mxu0 %v235
    %280 = vmatprep.subr.bf16.mxu0 %v239
    %281 = vmatpush1.bf16.msra.mxu0 %v238
    %282 = vmatprep.subr.bf16.mxu0 %v242
    %283 = vmatpush1.bf16.msra.mxu0 %v241
    %284 = vmatprep.subr.bf16.mxu0 0
    %285 = vmatpush1.bf16.msra.mxu0 0
    %286 = vmatprep.subr.bf16.mxu0 0
    %287 = vmatpush1.bf16.msra.mxu0 0
    %288 = vmatprep.subr.bf16.mxu0 0
    %289 = vmatpush1.bf16.msra.mxu0 0
    %290 = vmatprep.subr.bf16.mxu0 0
    %291 = vmatpush1.bf16.msra.mxu0 0
    %292 = vmatprep.subr.bf16.mxu0 0
    %293 = vmatpush1.bf16.msra.mxu0 0
    %294 = vmatprep.subr.bf16.mxu0 0
    %295 = vmatpush1.bf16.msra.mxu0 0
    %296 = vmatprep.subr.bf16.mxu0 0
    %297 = vmatpush1.bf16.msra.mxu0 0
    %298 = vmatprep.subr.bf16.mxu0 0
    %299 = vmatpush1.bf16.msra.mxu0 0
    %300 = vmatprep.mubr.bf16.mxu0 0
    %301 = vmatmul.mubr.bf16.gmra.mrb[0].mxu0 %v90
    %v302 = vpop.f32.mrb[0].mxu0
    %v303 = vadd.f32 %v128, %v302
    %v304 = vpop.f32.mrb[0].mxu0
    %v305 = vadd.f32 %v132, %v304
    %v306 = vpop.f32.mrb[0].mxu0
    %v307 = vpop.f32.mrb[0].mxu0
    %308 = vdwg.mxu0
    %309 = vmatprep.subr.bf16.mxu0 0
    %310 = vmatpush1.bf16.msra.mxu0 %v222
    %311 = vmatprep.subr.bf16.mxu0 0
    %312 = vmatpush1.bf16.msra.mxu0 %v225
    %313 = vmatprep.subr.bf16.mxu0 0
    %314 = vmatpush1.bf16.msra.mxu0 %v228
    %315 = vmatprep.subr.bf16.mxu0 0
    %316 = vmatpush1.bf16.msra.mxu0 %v231
    %317 = vmatprep.subr.bf16.mxu0 0
    %318 = vmatpush1.bf16.msra.mxu0 %v234
    %319 = vmatprep.subr.bf16.mxu0 0
    %320 = vmatpush1.bf16.msra.mxu0 %v237
    %321 = vmatprep.subr.bf16.mxu0 0
    %322 = vmatpush1.bf16.msra.mxu0 %v240
    %323 = vmatprep.subr.bf16.mxu0 0
    %324 = vmatpush1.bf16.msra.mxu0 %v243
    %325 = vmatprep.subr.bf16.mxu0 0
    %326 = vmatpush1.bf16.msra.mxu0 0
    %327 = vmatprep.subr.bf16.mxu0 0
    %328 = vmatpush1.bf16.msra.mxu0 0
    %329 = vmatprep.subr.bf16.mxu0 0
    %330 = vmatpush1.bf16.msra.mxu0 0
    %331 = vmatprep.subr.bf16.mxu0 0
    %332 = vmatpush1.bf16.msra.mxu0 0
    %333 = vmatprep.subr.bf16.mxu0 0
    %334 = vmatpush1.bf16.msra.mxu0 0
    %335 = vmatprep.subr.bf16.mxu0 0
    %336 = vmatpush1.bf16.msra.mxu0 0
    %337 = vmatprep.subr.bf16.mxu0 0
    %338 = vmatpush1.bf16.msra.mxu0 0
    %339 = vmatprep.subr.bf16.mxu0 0
    %340 = vmatpush1.bf16.msra.mxu0 0
    %341 = vmatprep.mubr.bf16.mxu0 0
    %342 = vmatmul.mubr.bf16.gmra.mrb[0].mxu0 %v90
    %v343 = vpop.f32.mrb[0].mxu0
    %v344 = vadd.f32 %v136, %v343
    %v345 = vpop.f32.mrb[0].mxu0
    %v346 = vpop.f32.mrb[0].mxu0
    %v347 = vpop.f32.mrb[0].mxu0
    %348 = vdwg.mxu0
    %v349 = vmax.f32 %v303, 0.0
    %v350 = vmax.f32 %v305, 0.0
    %v351 = vmax.f32 %v344, 0.0
    %v352 = vpack.c.bf16 %v349, %v349
    %v353 = vpack.c.bf16 %v350, %v350
    %v354 = vpack.c.bf16 %v351, %v351
    %v355 = vld [vmem:[#allocation7] sm:$0xff]
    %v356 = vld [vmem:[#allocation7 + $0x8] sm:$0xff]
    %v357 = vld [vmem:[#allocation7 + $0x10] sm:$0xff]
    %v358 = vld [vmem:[#allocation7 + $0x18] sm:$0xff]
    %v359 = vld [vmem:[#allocation7 + $0x20] sm:$0xff]
    %v360 = vld [vmem:[#allocation7 + $0x28] sm:$0xff]
    %v361 = vld [vmem:[#allocation7 + $0x30] sm:$0xff]
    %v362 = vld [vmem:[#allocation7 + $0x38] sm:$0xff]
    %v363 = vld [vmem:[#allocation7 + $0x40] sm:$0xff]
    %v364 = vld [vmem:[#allocation7 + $0x48] sm:$0xf]
    %v365 = vld [vmem:[#allocation7 + $0x4c] sm:$0xff]
    %v366 = vld [vmem:[#allocation7 + $0x54] sm:$0xff]
    %v367 = vld [vmem:[#allocation7 + $0x5c] sm:$0xff]
    %v368 = vld [vmem:[#allocation7 + $0x64] sm:$0xff]
    %v369 = vld [vmem:[#allocation7 + $0x6c] sm:$0xff]
    %v370 = vld [vmem:[#allocation7 + $0x74] sm:$0xff]
    %v371 = vld [vmem:[#allocation7 + $0x7c] sm:$0xff]
    %v372 = vld [vmem:[#allocation7 + $0x84] sm:$0xff]
    %v373 = vld [vmem:[#allocation7 + $0x8c] sm:$0xff]
    %v374 = vld [vmem:[#allocation7 + $0x94] sm:$0xf]
    %v375 = vld [vmem:[#allocation7 + $0x98] sm:$0xff]
    %v376 = vld [vmem:[#allocation7 + $0xa0] sm:$0xff]
    %v377 = vld [vmem:[#allocation7 + $0xa8] sm:$0xff]
    %v378 = vld [vmem:[#allocation7 + $0xb0] sm:$0xff]
    %v379 = vld [vmem:[#allocation7 + $0xb8] sm:$0xff]
    %v380 = vld [vmem:[#allocation7 + $0xc0] sm:$0xff]
    %v381 = vld [vmem:[#allocation7 + $0xc8] sm:$0xff]
    %v382 = vld [vmem:[#allocation7 + $0xd0] sm:$0xff]
    %v383 = vld [vmem:[#allocation7 + $0xd8] sm:$0xff]
    %v384 = vld [vmem:[#allocation7 + $0xe0] sm:$0xf]
    %v385 = vld [vmem:[#allocation7 + $0xe4] sm:$0xff]
    %v386 = vld [vmem:[#allocation7 + $0xec] sm:$0xff]
    %v387 = vld [vmem:[#allocation7 + $0xf4] sm:$0xff]
    %v388 = vld [vmem:[#allocation7 + $0xfc] sm:$0xff]
    %v389 = vld [vmem:[#allocation7 + $0x104] sm:$0xff]
    %v390 = vld [vmem:[#allocation7 + $0x10c] sm:$0xff]
    %v391 = vld [vmem:[#allocation7 + $0x114] sm:$0xff]
    %v392 = vld [vmem:[#allocation7 + $0x11c] sm:$0xff]
    %v393 = vld [vmem:[#allocation7 + $0x124] sm:$0xff]
    %v394 = vld [vmem:[#allocation7 + $0x12c] sm:$0xf]
    %v395 = vld [vmem:[#allocation7 + $0x130] sm:$0xff]
    %v396 = vld [vmem:[#allocation7 + $0x138] sm:$0xff]
    %v397 = vld [vmem:[#allocation7 + $0x140] sm:$0xff]
    %v398 = vld [vmem:[#allocation7 + $0x148] sm:$0xff]
    %v399 = vld [vmem:[#allocation7 + $0x150] sm:$0xff]
    %v400 = vld [vmem:[#allocation7 + $0x158] sm:$0xff]
    %v401 = vld [vmem:[#allocation7 + $0x160] sm:$0xff]
    %v402 = vld [vmem:[#allocation7 + $0x168] sm:$0xff]
    %v403 = vld [vmem:[#allocation7 + $0x170] sm:$0xff]
    %v404 = vld [vmem:[#allocation7 + $0x178] sm:$0xf]
    %v405 = vld [vmem:[#allocation7 + $0x17c] sm:$0xff]
    %v406 = vld [vmem:[#allocation7 + $0x184] sm:$0xff]
    %v407 = vld [vmem:[#allocation7 + $0x18c] sm:$0xff]
    %v408 = vld [vmem:[#allocation7 + $0x194] sm:$0xff]
    %v409 = vld [vmem:[#allocation7 + $0x19c] sm:$0xff]
    %v410 = vld [vmem:[#allocation7 + $0x1a4] sm:$0xff]
    %v411 = vld [vmem:[#allocation7 + $0x1ac] sm:$0xff]
    %v412 = vld [vmem:[#allocation7 + $0x1b4] sm:$0xff]
    %v413 = vld [vmem:[#allocation7 + $0x1bc] sm:$0xff]
    %v414 = vld [vmem:[#allocation7 + $0x1c4] sm:$0xf]
    %v415 = vld [vmem:[#allocation7 + $0x1c8] sm:$0xff]
    %v416 = vld [vmem:[#allocation7 + $0x1d0] sm:$0xff]
    %v417 = vld [vmem:[#allocation7 + $0x1d8] sm:$0xff]
    %v418 = vld [vmem:[#allocation7 + $0x1e0] sm:$0xff]
    %v419 = vld [vmem:[#allocation7 + $0x1e8] sm:$0xff]
    %v420 = vld [vmem:[#allocation7 + $0x1f0] sm:$0xff]
    %v421 = vld [vmem:[#allocation7 + $0x1f8] sm:$0xff]
    %v422 = vld [vmem:[#allocation7 + $0x200] sm:$0xff]
    %v423 = vld [vmem:[#allocation7 + $0x208] sm:$0xff]
    %v424 = vld [vmem:[#allocation7 + $0x210] sm:$0xf]
    %v425 = vld [vmem:[#allocation7 + $0x214] sm:$0xff]
    %v426 = vld [vmem:[#allocation7 + $0x21c] sm:$0xff]
    %v427 = vld [vmem:[#allocation7 + $0x224] sm:$0xff]
    %v428 = vld [vmem:[#allocation7 + $0x22c] sm:$0xff]
    %v429 = vld [vmem:[#allocation7 + $0x234] sm:$0xff]
    %v430 = vld [vmem:[#allocation7 + $0x23c] sm:$0xff]
    %v431 = vld [vmem:[#allocation7 + $0x244] sm:$0xff]
    %v432 = vld [vmem:[#allocation7 + $0x24c] sm:$0xff]
    %v433 = vld [vmem:[#allocation7 + $0x254] sm:$0xff]
    %v434 = vld [vmem:[#allocation7 + $0x25c] sm:$0xf]
    %v435 = vld [vmem:[#allocation7 + $0x260] sm:$0xff]
    %v436 = vld [vmem:[#allocation7 + $0x268] sm:$0xff]
    %v437 = vld [vmem:[#allocation7 + $0x270] sm:$0xff]
    %v438 = vld [vmem:[#allocation7 + $0x278] sm:$0xff]
    %v439 = vld [vmem:[#allocation7 + $0x280] sm:$0xff]
    %v440 = vld [vmem:[#allocation7 + $0x288] sm:$0xff]
    %v441 = vld [vmem:[#allocation7 + $0x290] sm:$0xff]
    %v442 = vld [vmem:[#allocation7 + $0x298] sm:$0xff]
    %v443 = vld [vmem:[#allocation7 + $0x2a0] sm:$0xff]
    %v444 = vld [vmem:[#allocation7 + $0x2a8] sm:$0xf]
    %v445 = vld [vmem:[#allocation7 + $0x2ac] sm:$0xff]
    %v446 = vld [vmem:[#allocation7 + $0x2b4] sm:$0xff]
    %v447 = vld [vmem:[#allocation7 + $0x2bc] sm:$0xff]
    %v448 = vld [vmem:[#allocation7 + $0x2c4] sm:$0xff]
    %v449 = vld [vmem:[#allocation7 + $0x2cc] sm:$0xff]
    %v450 = vld [vmem:[#allocation7 + $0x2d4] sm:$0xff]
    %v451 = vld [vmem:[#allocation7 + $0x2dc] sm:$0xff]
    %v452 = vld [vmem:[#allocation7 + $0x2e4] sm:$0xff]
    %v453 = vld [vmem:[#allocation7 + $0x2ec] sm:$0xff]
    %v454 = vld [vmem:[#allocation7 + $0x2f4] sm:$0xf]
    %v455 = vld [vmem:[#allocation7 + $0x2f8] sm:$0xff]
    %v456 = vld [vmem:[#allocation7 + $0x300] sm:$0xff]
    %v457 = vld [vmem:[#allocation7 + $0x308] sm:$0xff]
    %v458 = vld [vmem:[#allocation7 + $0x310] sm:$0xff]
    %v459 = vld [vmem:[#allocation7 + $0x318] sm:$0xff]
    %v460 = vld [vmem:[#allocation7 + $0x320] sm:$0xff]
    %v461 = vld [vmem:[#allocation7 + $0x328] sm:$0xff]
    %v462 = vld [vmem:[#allocation7 + $0x330] sm:$0xff]
    %v463 = vld [vmem:[#allocation7 + $0x338] sm:$0xff]
    %v464 = vld [vmem:[#allocation7 + $0x340] sm:$0xf]
    %v465 = vld [vmem:[#allocation7 + $0x344] sm:$0xff]
    %v466 = vld [vmem:[#allocation7 + $0x34c] sm:$0xff]
    %v467 = vld [vmem:[#allocation7 + $0x354] sm:$0xff]
    %v468 = vld [vmem:[#allocation7 + $0x35c] sm:$0xff]
    %v469 = vld [vmem:[#allocation7 + $0x364] sm:$0xff]
    %v470 = vld [vmem:[#allocation7 + $0x36c] sm:$0xff]
    %v471 = vld [vmem:[#allocation7 + $0x374] sm:$0xff]
    %v472 = vld [vmem:[#allocation7 + $0x37c] sm:$0xff]
    %v473 = vld [vmem:[#allocation7 + $0x384] sm:$0xff]
    %v474 = vld [vmem:[#allocation7 + $0x38c] sm:$0xf]
    %v475 = vld [vmem:[#allocation7 + $0x390] sm:$0xff]
    %v476 = vld [vmem:[#allocation7 + $0x398] sm:$0xff]
    %v477 = vld [vmem:[#allocation7 + $0x3a0] sm:$0xff]
    %v478 = vld [vmem:[#allocation7 + $0x3a8] sm:$0xff]
    %v479 = vld [vmem:[#allocation7 + $0x3b0] sm:$0xff]
    %v480 = vld [vmem:[#allocation7 + $0x3b8] sm:$0xff]
    %v481 = vld [vmem:[#allocation7 + $0x3c0] sm:$0xff]
    %v482 = vld [vmem:[#allocation7 + $0x3c8] sm:$0xff]
    %v483 = vld [vmem:[#allocation7 + $0x3d0] sm:$0xff]
    %v484 = vld [vmem:[#allocation7 + $0x3d8] sm:$0xf]
    %v485 = vld [vmem:[#allocation7 + $0x3dc] sm:$0xff]
    %v486 = vld [vmem:[#allocation7 + $0x3e4] sm:$0xff]
    %v487 = vld [vmem:[#allocation7 + $0x3ec] sm:$0xff]
    %v488 = vld [vmem:[#allocation7 + $0x3f4] sm:$0xff]
    %v489 = vld [vmem:[#allocation7 + $0x3fc] sm:$0xff]
    %v490 = vld [vmem:[#allocation7 + $0x404] sm:$0xff]
    %v491 = vld [vmem:[#allocation7 + $0x40c] sm:$0xff]
    %v492 = vld [vmem:[#allocation7 + $0x414] sm:$0xff]
    %v493 = vld [vmem:[#allocation7 + $0x41c] sm:$0xff]
    %v494 = vld [vmem:[#allocation7 + $0x424] sm:$0xf]
    %v495 = vld [vmem:[#allocation7 + $0x428] sm:$0xff]
    %v496 = vld [vmem:[#allocation7 + $0x430] sm:$0xff]
    %v497 = vld [vmem:[#allocation7 + $0x438] sm:$0xff]
    %v498 = vld [vmem:[#allocation7 + $0x440] sm:$0xff]
    %v499 = vld [vmem:[#allocation7 + $0x448] sm:$0xff]
    %v500 = vld [vmem:[#allocation7 + $0x450] sm:$0xff]
    %v501 = vld [vmem:[#allocation7 + $0x458] sm:$0xff]
    %v502 = vld [vmem:[#allocation7 + $0x460] sm:$0xff]
    %v503 = vld [vmem:[#allocation7 + $0x468] sm:$0xff]
    %v504 = vld [vmem:[#allocation7 + $0x470] sm:$0xf]
    %v505 = vld [vmem:[#allocation7 + $0x474] sm:$0xff]
    %v506 = vld [vmem:[#allocation7 + $0x47c] sm:$0xff]
    %v507 = vld [vmem:[#allocation7 + $0x484] sm:$0xff]
    %v508 = vld [vmem:[#allocation7 + $0x48c] sm:$0xff]
    %v509 = vld [vmem:[#allocation7 + $0x494] sm:$0xff]
    %v510 = vld [vmem:[#allocation7 + $0x49c] sm:$0xff]
    %v511 = vld [vmem:[#allocation7 + $0x4a4] sm:$0xff]
    %v512 = vld [vmem:[#allocation7 + $0x4ac] sm:$0xff]
    %v513 = vld [vmem:[#allocation7 + $0x4b4] sm:$0xff]
    %v514 = vld [vmem:[#allocation7 + $0x4bc] sm:$0xf]
    %v515 = vld [vmem:[#allocation7 + $0x4c0] sm:$0xff]
    %v516 = vld [vmem:[#allocation7 + $0x4c8] sm:$0xff]
    %v517 = vld [vmem:[#allocation7 + $0x4d0] sm:$0xff]
    %v518 = vld [vmem:[#allocation7 + $0x4d8] sm:$0xff]
    %v519 = vld [vmem:[#allocation7 + $0x4e0] sm:$0xff]
    %v520 = vld [vmem:[#allocation7 + $0x4e8] sm:$0xff]
    %v521 = vld [vmem:[#allocation7 + $0x4f0] sm:$0xff]
    %v522 = vld [vmem:[#allocation7 + $0x4f8] sm:$0xff]
    %v523 = vld [vmem:[#allocation7 + $0x500] sm:$0xff]
    %v524 = vld [vmem:[#allocation7 + $0x508] sm:$0xf]
    %v525 = vld [vmem:[#allocation7 + $0x50c] sm:$0xff]
    %v526 = vld [vmem:[#allocation7 + $0x514] sm:$0xff]
    %v527 = vld [vmem:[#allocation7 + $0x51c] sm:$0xff]
    %v528 = vld [vmem:[#allocation7 + $0x524] sm:$0xff]
    %v529 = vld [vmem:[#allocation7 + $0x52c] sm:$0xff]
    %v530 = vld [vmem:[#allocation7 + $0x534] sm:$0xff]
    %v531 = vld [vmem:[#allocation7 + $0x53c] sm:$0xff]
    %v532 = vld [vmem:[#allocation7 + $0x544] sm:$0xff]
    %v533 = vld [vmem:[#allocation7 + $0x54c] sm:$0xff]
    %v534 = vld [vmem:[#allocation7 + $0x554] sm:$0xf]
    %v535 = vld [vmem:[#allocation7 + $0x558] sm:$0xff]
    %v536 = vld [vmem:[#allocation7 + $0x560] sm:$0xff]
    %v537 = vld [vmem:[#allocation7 + $0x568] sm:$0xff]
    %v538 = vld [vmem:[#allocation7 + $0x570] sm:$0xff]
    %v539 = vld [vmem:[#allocation7 + $0x578] sm:$0xff]
    %v540 = vld [vmem:[#allocation7 + $0x580] sm:$0xff]
    %v541 = vld [vmem:[#allocation7 + $0x588] sm:$0xff]
    %v542 = vld [vmem:[#allocation7 + $0x590] sm:$0xff]
    %v543 = vld [vmem:[#allocation7 + $0x598] sm:$0xff]
    %v544 = vld [vmem:[#allocation7 + $0x5a0] sm:$0xf]
    %v545 = vld [vmem:[#allocation7 + $0x5a4] sm:$0xff]
    %v546 = vld [vmem:[#allocation7 + $0x5ac] sm:$0xff]
    %v547 = vld [vmem:[#allocation7 + $0x5b4] sm:$0xff]
    %v548 = vld [vmem:[#allocation7 + $0x5bc] sm:$0xff]
    %v549 = vld [vmem:[#allocation7 + $0x5c4] sm:$0xff]
    %v550 = vld [vmem:[#allocation7 + $0x5cc] sm:$0xff]
    %v551 = vld [vmem:[#allocation7 + $0x5d4] sm:$0xff]
    %v552 = vld [vmem:[#allocation7 + $0x5dc] sm:$0xff]
    %v553 = vld [vmem:[#allocation7 + $0x5e4] sm:$0xff]
    %v554 = vld [vmem:[#allocation7 + $0x5ec] sm:$0xf]
    %v555 = vld [vmem:[#allocation7 + $0x5f0] sm:$0xff]
    %v556 = vld [vmem:[#allocation7 + $0x5f8] sm:$0xff]
    %v557 = vld [vmem:[#allocation7 + $0x600] sm:$0xff]
    %v558 = vld [vmem:[#allocation7 + $0x608] sm:$0xff]
    %v559 = vld [vmem:[#allocation7 + $0x610] sm:$0xff]
    %v560 = vld [vmem:[#allocation7 + $0x618] sm:$0xff]
    %v561 = vld [vmem:[#allocation7 + $0x620] sm:$0xff]
    %v562 = vld [vmem:[#allocation7 + $0x628] sm:$0xff]
    %v563 = vld [vmem:[#allocation7 + $0x630] sm:$0xff]
    %v564 = vld [vmem:[#allocation7 + $0x638] sm:$0xf]
    %v565 = vld [vmem:[#allocation7 + $0x63c] sm:$0xff]
    %v566 = vld [vmem:[#allocation7 + $0x644] sm:$0xff]
    %v567 = vld [vmem:[#allocation7 + $0x64c] sm:$0xff]
    %v568 = vld [vmem:[#allocation7 + $0x654] sm:$0xff]
    %v569 = vld [vmem:[#allocation7 + $0x65c] sm:$0xff]
    %v570 = vld [vmem:[#allocation7 + $0x664] sm:$0xff]
    %v571 = vld [vmem:[#allocation7 + $0x66c] sm:$0xff]
    %v572 = vld [vmem:[#allocation7 + $0x674] sm:$0xff]
    %v573 = vld [vmem:[#allocation7 + $0x67c] sm:$0xff]
    %v574 = vld [vmem:[#allocation7 + $0x684] sm:$0xf]
    %v575 = vld [vmem:[#allocation7 + $0x688] sm:$0xff]
    %v576 = vld [vmem:[#allocation7 + $0x690] sm:$0xff]
    %v577 = vld [vmem:[#allocation7 + $0x698] sm:$0xff]
    %v578 = vld [vmem:[#allocation7 + $0x6a0] sm:$0xff]
    %v579 = vld [vmem:[#allocation7 + $0x6a8] sm:$0xff]
    %v580 = vld [vmem:[#allocation7 + $0x6b0] sm:$0xff]
    %v581 = vld [vmem:[#allocation7 + $0x6b8] sm:$0xff]
    %v582 = vld [vmem:[#allocation7 + $0x6c0] sm:$0xff]
    %v583 = vld [vmem:[#allocation7 + $0x6c8] sm:$0xff]
    %v584 = vld [vmem:[#allocation7 + $0x6d0] sm:$0xf]
    %v585 = vld [vmem:[#allocation7 + $0x6d4] sm:$0xff]
    %v586 = vld [vmem:[#allocation7 + $0x6dc] sm:$0xff]
    %v587 = vld [vmem:[#allocation7 + $0x6e4] sm:$0xff]
    %v588 = vld [vmem:[#allocation7 + $0x6ec] sm:$0xff]
    %v589 = vld [vmem:[#allocation7 + $0x6f4] sm:$0xff]
    %v590 = vld [vmem:[#allocation7 + $0x6fc] sm:$0xff]
    %v591 = vld [vmem:[#allocation7 + $0x704] sm:$0xff]
    %v592 = vld [vmem:[#allocation7 + $0x70c] sm:$0xff]
    %v593 = vld [vmem:[#allocation7 + $0x714] sm:$0xff]
    %v594 = vld [vmem:[#allocation7 + $0x71c] sm:$0xf]
    %v595 = vld [vmem:[#allocation7 + $0x720] sm:$0xff]
    %v596 = vld [vmem:[#allocation7 + $0x728] sm:$0xff]
    %v597 = vld [vmem:[#allocation7 + $0x730] sm:$0xff]
    %v598 = vld [vmem:[#allocation7 + $0x738] sm:$0xff]
    %v599 = vld [vmem:[#allocation7 + $0x740] sm:$0xff]
    %v600 = vld [vmem:[#allocation7 + $0x748] sm:$0xff]
    %v601 = vld [vmem:[#allocation7 + $0x750] sm:$0xff]
    %v602 = vld [vmem:[#allocation7 + $0x758] sm:$0xff]
    %v603 = vld [vmem:[#allocation7 + $0x760] sm:$0xff]
    %v604 = vld [vmem:[#allocation7 + $0x768] sm:$0xf]
    %v605 = vld [vmem:[#allocation7 + $0x76c] sm:$0xff]
    %v606 = vld [vmem:[#allocation7 + $0x774] sm:$0xff]
    %v607 = vld [vmem:[#allocation7 + $0x77c] sm:$0xff]
    %v608 = vld [vmem:[#allocation7 + $0x784] sm:$0xff]
    %v609 = vld [vmem:[#allocation7 + $0x78c] sm:$0xff]
    %v610 = vld [vmem:[#allocation7 + $0x794] sm:$0xff]
    %v611 = vld [vmem:[#allocation7 + $0x79c] sm:$0xff]
    %v612 = vld [vmem:[#allocation7 + $0x7a4] sm:$0xff]
    %v613 = vld [vmem:[#allocation7 + $0x7ac] sm:$0xff]
    %v614 = vld [vmem:[#allocation7 + $0x7b4] sm:$0xf]
    %v615 = vld [vmem:[#allocation7 + $0x7b8] sm:$0xff]
    %v616 = vld [vmem:[#allocation7 + $0x7c0] sm:$0xff]
    %v617 = vld [vmem:[#allocation7 + $0x7c8] sm:$0xff]
    %v618 = vld [vmem:[#allocation7 + $0x7d0] sm:$0xff]
    %v619 = vld [vmem:[#allocation7 + $0x7d8] sm:$0xff]
    %v620 = vld [vmem:[#allocation7 + $0x7e0] sm:$0xff]
    %v621 = vld [vmem:[#allocation7 + $0x7e8] sm:$0xff]
    %v622 = vld [vmem:[#allocation7 + $0x7f0] sm:$0xff]
    %v623 = vld [vmem:[#allocation7 + $0x7f8] sm:$0xff]
    %v624 = vld [vmem:[#allocation7 + $0x800] sm:$0xf]
    %v625 = vld [vmem:[#allocation7 + $0x804] sm:$0xff]
    %v626 = vld [vmem:[#allocation7 + $0x80c] sm:$0xff]
    %v627 = vld [vmem:[#allocation7 + $0x814] sm:$0xff]
    %v628 = vld [vmem:[#allocation7 + $0x81c] sm:$0xff]
    %v629 = vld [vmem:[#allocation7 + $0x824] sm:$0xff]
    %v630 = vld [vmem:[#allocation7 + $0x82c] sm:$0xff]
    %v631 = vld [vmem:[#allocation7 + $0x834] sm:$0xff]
    %v632 = vld [vmem:[#allocation7 + $0x83c] sm:$0xff]
    %v633 = vld [vmem:[#allocation7 + $0x844] sm:$0xff]
    %v634 = vld [vmem:[#allocation7 + $0x84c] sm:$0xf]
    %v635 = vld [vmem:[#allocation7 + $0x850] sm:$0xff]
    %v636 = vld [vmem:[#allocation7 + $0x858] sm:$0xff]
    %v637 = vld [vmem:[#allocation7 + $0x860] sm:$0xff]
    %v638 = vld [vmem:[#allocation7 + $0x868] sm:$0xff]
    %v639 = vld [vmem:[#allocation7 + $0x870] sm:$0xff]
    %v640 = vld [vmem:[#allocation7 + $0x878] sm:$0xff]
    %v641 = vld [vmem:[#allocation7 + $0x880] sm:$0xff]
    %v642 = vld [vmem:[#allocation7 + $0x888] sm:$0xff]
    %v643 = vld [vmem:[#allocation7 + $0x890] sm:$0xff]
    %v644 = vld [vmem:[#allocation7 + $0x898] sm:$0xf]
    %v645 = vld [vmem:[#allocation7 + $0x89c] sm:$0xff]
    %v646 = vld [vmem:[#allocation7 + $0x8a4] sm:$0xff]
    %v647 = vld [vmem:[#allocation7 + $0x8ac] sm:$0xff]
    %v648 = vld [vmem:[#allocation7 + $0x8b4] sm:$0xff]
    %v649 = vld [vmem:[#allocation7 + $0x8bc] sm:$0xff]
    %v650 = vld [vmem:[#allocation7 + $0x8c4] sm:$0xff]
    %v651 = vld [vmem:[#allocation7 + $0x8cc] sm:$0xff]
    %v652 = vld [vmem:[#allocation7 + $0x8d4] sm:$0xff]
    %v653 = vld [vmem:[#allocation7 + $0x8dc] sm:$0xff]
    %v654 = vld [vmem:[#allocation7 + $0x8e4] sm:$0xf]
    %v655 = vld [vmem:[#allocation7 + $0x8e8] sm:$0xff]
    %v656 = vld [vmem:[#allocation7 + $0x8f0] sm:$0xff]
    %v657 = vld [vmem:[#allocation7 + $0x8f8] sm:$0xff]
    %v658 = vld [vmem:[#allocation7 + $0x900] sm:$0xff]
    %v659 = vld [vmem:[#allocation7 + $0x908] sm:$0xff]
    %v660 = vld [vmem:[#allocation7 + $0x910] sm:$0xff]
    %v661 = vld [vmem:[#allocation7 + $0x918] sm:$0xff]
    %v662 = vld [vmem:[#allocation7 + $0x920] sm:$0xff]
    %v663 = vld [vmem:[#allocation7 + $0x928] sm:$0xff]
    %v664 = vld [vmem:[#allocation7 + $0x930] sm:$0xf]
    %v665 = vld [vmem:[#allocation7 + $0x934] sm:$0xff]
    %v666 = vld [vmem:[#allocation7 + $0x93c] sm:$0xff]
    %v667 = vld [vmem:[#allocation7 + $0x944] sm:$0xff]
    %v668 = vld [vmem:[#allocation7 + $0x94c] sm:$0xff]
    %v669 = vld [vmem:[#allocation7 + $0x954] sm:$0xff]
    %v670 = vld [vmem:[#allocation7 + $0x95c] sm:$0xff]
    %v671 = vld [vmem:[#allocation7 + $0x964] sm:$0xff]
    %v672 = vld [vmem:[#allocation7 + $0x96c] sm:$0xff]
    %v673 = vld [vmem:[#allocation7 + $0x974] sm:$0xff]
    %v674 = vld [vmem:[#allocation7 + $0x97c] sm:$0xf]
    %v675 = vld [vmem:[#allocation7 + $0x980] sm:$0xff]
    %v676 = vld [vmem:[#allocation7 + $0x988] sm:$0xff]
    %v677 = vld [vmem:[#allocation7 + $0x990] sm:$0xff]
    %v678 = vld [vmem:[#allocation7 + $0x998] sm:$0xff]
    %v679 = vld [vmem:[#allocation7 + $0x9a0] sm:$0xff]
    %v680 = vld [vmem:[#allocation7 + $0x9a8] sm:$0xff]
    %v681 = vld [vmem:[#allocation7 + $0x9b0] sm:$0xff]
    %v682 = vld [vmem:[#allocation7 + $0x9b8] sm:$0xff]
    %v683 = vld [vmem:[#allocation7 + $0x9c0] sm:$0xff]
    %v684 = vld [vmem:[#allocation7 + $0x9c8] sm:$0xf]
    %v685 = vld [vmem:[#allocation7 + $0x9cc] sm:$0xff]
    %v686 = vld [vmem:[#allocation7 + $0x9d4] sm:$0xff]
    %v687 = vld [vmem:[#allocation7 + $0x9dc] sm:$0xff]
    %v688 = vld [vmem:[#allocation7 + $0x9e4] sm:$0xff]
    %v689 = vld [vmem:[#allocation7 + $0x9ec] sm:$0xff]
    %v690 = vld [vmem:[#allocation7 + $0x9f4] sm:$0xff]
    %v691 = vld [vmem:[#allocation7 + $0x9fc] sm:$0xff]
    %v692 = vld [vmem:[#allocation7 + $0xa04] sm:$0xff]
    %v693 = vld [vmem:[#allocation7 + $0xa0c] sm:$0xff]
    %v694 = vld [vmem:[#allocation7 + $0xa14] sm:$0xf]
    %v695 = vld [vmem:[#allocation7 + $0xa18] sm:$0xff]
    %v696 = vld [vmem:[#allocation7 + $0xa20] sm:$0xff]
    %v697 = vld [vmem:[#allocation7 + $0xa28] sm:$0xff]
    %v698 = vld [vmem:[#allocation7 + $0xa30] sm:$0xff]
    %v699 = vld [vmem:[#allocation7 + $0xa38] sm:$0xff]
    %v700 = vld [vmem:[#allocation7 + $0xa40] sm:$0xff]
    %v701 = vld [vmem:[#allocation7 + $0xa48] sm:$0xff]
    %v702 = vld [vmem:[#allocation7 + $0xa50] sm:$0xff]
    %v703 = vld [vmem:[#allocation7 + $0xa58] sm:$0xff]
    %v704 = vld [vmem:[#allocation7 + $0xa60] sm:$0xf]
    %v705 = vld [vmem:[#allocation7 + $0xa64] sm:$0xff]
    %v706 = vld [vmem:[#allocation7 + $0xa6c] sm:$0xff]
    %v707 = vld [vmem:[#allocation7 + $0xa74] sm:$0xff]
    %v708 = vld [vmem:[#allocation7 + $0xa7c] sm:$0xff]
    %v709 = vld [vmem:[#allocation7 + $0xa84] sm:$0xff]
    %v710 = vld [vmem:[#allocation7 + $0xa8c] sm:$0xff]
    %v711 = vld [vmem:[#allocation7 + $0xa94] sm:$0xff]
    %v712 = vld [vmem:[#allocation7 + $0xa9c] sm:$0xff]
    %v713 = vld [vmem:[#allocation7 + $0xaa4] sm:$0xff]
    %v714 = vld [vmem:[#allocation7 + $0xaac] sm:$0xf]
    %v715 = vld [vmem:[#allocation7 + $0xab0] sm:$0xff]
    %v716 = vld [vmem:[#allocation7 + $0xab8] sm:$0xff]
    %v717 = vld [vmem:[#allocation7 + $0xac0] sm:$0xff]
    %v718 = vld [vmem:[#allocation7 + $0xac8] sm:$0xff]
    %v719 = vld [vmem:[#allocation7 + $0xad0] sm:$0xff]
    %v720 = vld [vmem:[#allocation7 + $0xad8] sm:$0xff]
    %v721 = vld [vmem:[#allocation7 + $0xae0] sm:$0xff]
    %v722 = vld [vmem:[#allocation7 + $0xae8] sm:$0xff]
    %v723 = vld [vmem:[#allocation7 + $0xaf0] sm:$0xff]
    %v724 = vld [vmem:[#allocation7 + $0xaf8] sm:$0xf]
    %v725 = vld [vmem:[#allocation7 + $0xafc] sm:$0xff]
    %v726 = vld [vmem:[#allocation7 + $0xb04] sm:$0xff]
    %v727 = vld [vmem:[#allocation7 + $0xb0c] sm:$0xff]
    %v728 = vld [vmem:[#allocation7 + $0xb14] sm:$0xff]
    %v729 = vld [vmem:[#allocation7 + $0xb1c] sm:$0xff]
    %v730 = vld [vmem:[#allocation7 + $0xb24] sm:$0xff]
    %v731 = vld [vmem:[#allocation7 + $0xb2c] sm:$0xff]
    %v732 = vld [vmem:[#allocation7 + $0xb34] sm:$0xff]
    %v733 = vld [vmem:[#allocation7 + $0xb3c] sm:$0xff]
    %v734 = vld [vmem:[#allocation7 + $0xb44] sm:$0xf]
    %v735 = vld [vmem:[#allocation7 + $0xb48] sm:$0xff]
    %v736 = vld [vmem:[#allocation7 + $0xb50] sm:$0xff]
    %v737 = vld [vmem:[#allocation7 + $0xb58] sm:$0xff]
    %v738 = vld [vmem:[#allocation7 + $0xb60] sm:$0xff]
    %v739 = vld [vmem:[#allocation7 + $0xb68] sm:$0xff]
    %v740 = vld [vmem:[#allocation7 + $0xb70] sm:$0xff]
    %v741 = vld [vmem:[#allocation7 + $0xb78] sm:$0xff]
    %v742 = vld [vmem:[#allocation7 + $0xb80] sm:$0xff]
    %v743 = vld [vmem:[#allocation7 + $0xb88] sm:$0xff]
    %v744 = vld [vmem:[#allocation7 + $0xb90] sm:$0xf]
    %v745 = vld [vmem:[#allocation7 + $0xb94] sm:$0xff]
    %v746 = vld [vmem:[#allocation7 + $0xb9c] sm:$0xff]
    %v747 = vld [vmem:[#allocation7 + $0xba4] sm:$0xff]
    %v748 = vld [vmem:[#allocation7 + $0xbac] sm:$0xff]
    %v749 = vld [vmem:[#allocation7 + $0xbb4] sm:$0xff]
    %v750 = vld [vmem:[#allocation7 + $0xbbc] sm:$0xff]
    %v751 = vld [vmem:[#allocation7 + $0xbc4] sm:$0xff]
    %v752 = vld [vmem:[#allocation7 + $0xbcc] sm:$0xff]
    %v753 = vld [vmem:[#allocation7 + $0xbd4] sm:$0xff]
    %v754 = vld [vmem:[#allocation7 + $0xbdc] sm:$0xf]
    %v755 = vld [vmem:[#allocation7 + $0xbe0] sm:$0xff]
    %v756 = vld [vmem:[#allocation7 + $0xbe8] sm:$0xff]
    %v757 = vld [vmem:[#allocation7 + $0xbf0] sm:$0xff]
    %v758 = vld [vmem:[#allocation7 + $0xbf8] sm:$0xff]
    %v759 = vld [vmem:[#allocation7 + $0xc00] sm:$0xff]
    %v760 = vld [vmem:[#allocation7 + $0xc08] sm:$0xff]
    %v761 = vld [vmem:[#allocation7 + $0xc10] sm:$0xff]
    %v762 = vld [vmem:[#allocation7 + $0xc18] sm:$0xff]
    %v763 = vld [vmem:[#allocation7 + $0xc20] sm:$0xff]
    %v764 = vld [vmem:[#allocation7 + $0xc28] sm:$0xf]
    %v765 = vld [vmem:[#allocation7 + $0xc2c] sm:$0xff]
    %v766 = vld [vmem:[#allocation7 + $0xc34] sm:$0xff]
    %v767 = vld [vmem:[#allocation7 + $0xc3c] sm:$0xff]
    %v768 = vld [vmem:[#allocation7 + $0xc44] sm:$0xff]
    %v769 = vld [vmem:[#allocation7 + $0xc4c] sm:$0xff]
    %v770 = vld [vmem:[#allocation7 + $0xc54] sm:$0xff]
    %v771 = vld [vmem:[#allocation7 + $0xc5c] sm:$0xff]
    %v772 = vld [vmem:[#allocation7 + $0xc64] sm:$0xff]
    %v773 = vld [vmem:[#allocation7 + $0xc6c] sm:$0xff]
    %v774 = vld [vmem:[#allocation7 + $0xc74] sm:$0xf]
    %v775 = vld [vmem:[#allocation7 + $0xc78] sm:$0xff]
    %v776 = vld [vmem:[#allocation7 + $0xc80] sm:$0xff]
    %v777 = vld [vmem:[#allocation7 + $0xc88] sm:$0xff]
    %v778 = vld [vmem:[#allocation7 + $0xc90] sm:$0xff]
    %v779 = vld [vmem:[#allocation7 + $0xc98] sm:$0xff]
    %v780 = vld [vmem:[#allocation7 + $0xca0] sm:$0xff]
    %v781 = vld [vmem:[#allocation7 + $0xca8] sm:$0xff]
    %v782 = vld [vmem:[#allocation7 + $0xcb0] sm:$0xff]
    %v783 = vld [vmem:[#allocation7 + $0xcb8] sm:$0xff]
    %v784 = vld [vmem:[#allocation7 + $0xcc0] sm:$0xf]
    %v785 = vld [vmem:[#allocation7 + $0xcc4] sm:$0xff]
    %v786 = vld [vmem:[#allocation7 + $0xccc] sm:$0xff]
    %v787 = vld [vmem:[#allocation7 + $0xcd4] sm:$0xff]
    %v788 = vld [vmem:[#allocation7 + $0xcdc] sm:$0xff]
    %v789 = vld [vmem:[#allocation7 + $0xce4] sm:$0xff]
    %v790 = vld [vmem:[#allocation7 + $0xcec] sm:$0xff]
    %v791 = vld [vmem:[#allocation7 + $0xcf4] sm:$0xff]
    %v792 = vld [vmem:[#allocation7 + $0xcfc] sm:$0xff]
    %v793 = vld [vmem:[#allocation7 + $0xd04] sm:$0xff]
    %v794 = vld [vmem:[#allocation7 + $0xd0c] sm:$0xf]
    %v795 = vld [vmem:[#allocation7 + $0xd10] sm:$0xff]
    %v796 = vld [vmem:[#allocation7 + $0xd18] sm:$0xff]
    %v797 = vld [vmem:[#allocation7 + $0xd20] sm:$0xff]
    %v798 = vld [vmem:[#allocation7 + $0xd28] sm:$0xff]
    %v799 = vld [vmem:[#allocation7 + $0xd30] sm:$0xff]
    %v800 = vld [vmem:[#allocation7 + $0xd38] sm:$0xff]
    %v801 = vld [vmem:[#allocation7 + $0xd40] sm:$0xff]
    %v802 = vld [vmem:[#allocation7 + $0xd48] sm:$0xff]
    %v803 = vld [vmem:[#allocation7 + $0xd50] sm:$0xff]
    %v804 = vld [vmem:[#allocation7 + $0xd58] sm:$0xf]
    %v805 = vld [vmem:[#allocation7 + $0xd5c] sm:$0xff]
    %v806 = vld [vmem:[#allocation7 + $0xd64] sm:$0xff]
    %v807 = vld [vmem:[#allocation7 + $0xd6c] sm:$0xff]
    %v808 = vld [vmem:[#allocation7 + $0xd74] sm:$0xff]
    %v809 = vld [vmem:[#allocation7 + $0xd7c] sm:$0xff]
    %v810 = vld [vmem:[#allocation7 + $0xd84] sm:$0xff]
    %v811 = vld [vmem:[#allocation7 + $0xd8c] sm:$0xff]
    %v812 = vld [vmem:[#allocation7 + $0xd94] sm:$0xff]
    %v813 = vld [vmem:[#allocation7 + $0xd9c] sm:$0xff]
    %v814 = vld [vmem:[#allocation7 + $0xda4] sm:$0xf]
    %v815 = vld [vmem:[#allocation7 + $0xda8] sm:$0xff]
    %v816 = vld [vmem:[#allocation7 + $0xdb0] sm:$0xff]
    %v817 = vld [vmem:[#allocation7 + $0xdb8] sm:$0xff]
    %v818 = vld [vmem:[#allocation7 + $0xdc0] sm:$0xff]
    %v819 = vld [vmem:[#allocation7 + $0xdc8] sm:$0xff]
    %v820 = vld [vmem:[#allocation7 + $0xdd0] sm:$0xff]
    %v821 = vld [vmem:[#allocation7 + $0xdd8] sm:$0xff]
    %v822 = vld [vmem:[#allocation7 + $0xde0] sm:$0xff]
    %v823 = vld [vmem:[#allocation7 + $0xde8] sm:$0xff]
    %v824 = vld [vmem:[#allocation7 + $0xdf0] sm:$0xf]
    %v825 = vld [vmem:[#allocation7 + $0xdf4] sm:$0xff]
    %v826 = vld [vmem:[#allocation7 + $0xdfc] sm:$0xff]
    %v827 = vld [vmem:[#allocation7 + $0xe04] sm:$0xff]
    %v828 = vld [vmem:[#allocation7 + $0xe0c] sm:$0xff]
    %v829 = vld [vmem:[#allocation7 + $0xe14] sm:$0xff]
    %v830 = vld [vmem:[#allocation7 + $0xe1c] sm:$0xff]
    %v831 = vld [vmem:[#allocation7 + $0xe24] sm:$0xff]
    %v832 = vld [vmem:[#allocation7 + $0xe2c] sm:$0xff]
    %v833 = vld [vmem:[#allocation7 + $0xe34] sm:$0xff]
    %v834 = vld [vmem:[#allocation7 + $0xe3c] sm:$0xf]
    %v835 = vld [vmem:[#allocation8] sm:$0xff]
    %v836 = vld [vmem:[#allocation8 + $0x8] sm:$0xff]
    %v837 = vld [vmem:[#allocation8 + $0x10] sm:$0x7]
    %v841 = vlaneseq
    %v842 = vshrl.u32 %v841, 7
    %v843 = vsub.s32 0, %v842
    %v844 = vrot.slane %v835, %v843
    %v845 = vlaneseq
    %v846 = vshrl.u32 %v845, 7
    %v847 = vsub.s32 1, %v846
    %v848 = vrot.slane %v835, %v847
    %v849 = vlaneseq
    %v850 = vshrl.u32 %v849, 7
    %v851 = vsub.s32 2, %v850
    %v852 = vrot.slane %v835, %v851
    %v853 = vlaneseq
    %v854 = vshrl.u32 %v853, 7
    %v855 = vsub.s32 3, %v854
    %v856 = vrot.slane %v835, %v855
    %v857 = vlaneseq
    %v858 = vshrl.u32 %v857, 7
    %v859 = vsub.s32 4, %v858
    %v860 = vrot.slane %v835, %v859
    %v861 = vlaneseq
    %v862 = vshrl.u32 %v861, 7
    %v863 = vsub.s32 5, %v862
    %v864 = vrot.slane %v835, %v863
    %v865 = vlaneseq
    %v866 = vshrl.u32 %v865, 7
    %v867 = vsub.s32 6, %v866
    %v868 = vrot.slane %v835, %v867
    %v869 = vlaneseq
    %v870 = vshrl.u32 %v869, 7
    %v871 = vsub.s32 7, %v870
    %v872 = vrot.slane %v835, %v871
    %v873 = vlaneseq
    %v874 = vshrl.u32 %v873, 7
    %v875 = vsub.s32 0, %v874
    %v876 = vrot.slane %v836, %v875
    %v877 = vlaneseq
    %v878 = vshrl.u32 %v877, 7
    %v879 = vsub.s32 1, %v878
    %v880 = vrot.slane %v836, %v879
    %v881 = vlaneseq
    %v882 = vshrl.u32 %v881, 7
    %v883 = vsub.s32 2, %v882
    %v884 = vrot.slane %v836, %v883
    %v885 = vlaneseq
    %v886 = vshrl.u32 %v885, 7
    %v887 = vsub.s32 3, %v886
    %v888 = vrot.slane %v836, %v887
    %v889 = vlaneseq
    %v890 = vshrl.u32 %v889, 7
    %v891 = vsub.s32 4, %v890
    %v892 = vrot.slane %v836, %v891
    %v893 = vlaneseq
    %v894 = vshrl.u32 %v893, 7
    %v895 = vsub.s32 5, %v894
    %v896 = vrot.slane %v836, %v895
    %v897 = vlaneseq
    %v898 = vshrl.u32 %v897, 7
    %v899 = vsub.s32 6, %v898
    %v900 = vrot.slane %v836, %v899
    %v901 = vlaneseq
    %v902 = vshrl.u32 %v901, 7
    %v903 = vsub.s32 7, %v902
    %v904 = vrot.slane %v836, %v903
    %v905 = vlaneseq
    %v906 = vshrl.u32 %v905, 7
    %v907 = vsub.s32 0, %v906
    %v908 = vrot.slane %v837, %v907
    %v909 = vlaneseq
    %v910 = vshrl.u32 %v909, 7
    %v911 = vsub.s32 1, %v910
    %v912 = vrot.slane %v837, %v911
    %v913 = vlaneseq
    %v914 = vshrl.u32 %v913, 7
    %v915 = vsub.s32 2, %v914
    %v916 = vrot.slane %v837, %v915
    %v1416 = vunpack.c.l.b16 %v355
    %v1417 = vunpack.c.h.b16 %v355
    %v1418 = vunpack.c.l.b16 %v356
    %v1419 = vunpack.c.h.b16 %v356
    %v1420 = vunpack.c.l.b16 %v357
    %v1421 = vunpack.c.h.b16 %v357
    %v1422 = vunpack.c.l.b16 %v358
    %v1423 = vunpack.c.h.b16 %v358
    %v1424 = vunpack.c.l.b16 %v359
    %v1425 = vunpack.c.h.b16 %v359
    %v1426 = vunpack.c.l.b16 %v360
    %v1427 = vunpack.c.h.b16 %v360
    %v1428 = vunpack.c.l.b16 %v361
    %v1429 = vunpack.c.h.b16 %v361
    %v1430 = vunpack.c.l.b16 %v362
    %v1431 = vunpack.c.h.b16 %v362
    %v1432 = vunpack.c.l.b16 %v363
    %v1433 = vunpack.c.h.b16 %v363
    %v1434 = vunpack.c.l.b16 %v364
    %v1435 = vunpack.c.l.b16 %v365
    %v1436 = vunpack.c.h.b16 %v365
    %v1437 = vunpack.c.l.b16 %v366
    %v1438 = vunpack.c.h.b16 %v366
    %v1439 = vunpack.c.l.b16 %v367
    %v1440 = vunpack.c.h.b16 %v367
    %v1441 = vunpack.c.l.b16 %v368
    %v1442 = vunpack.c.h.b16 %v368
    %v1443 = vunpack.c.l.b16 %v369
    %v1444 = vunpack.c.h.b16 %v369
    %v1445 = vunpack.c.l.b16 %v370
    %v1446 = vunpack.c.h.b16 %v370
    %v1447 = vunpack.c.l.b16 %v371
    %v1448 = vunpack.c.h.b16 %v371
    %v1449 = vunpack.c.l.b16 %v372
    %v1450 = vunpack.c.h.b16 %v372
    %v1451 = vunpack.c.l.b16 %v373
    %v1452 = vunpack.c.h.b16 %v373
    %v1453 = vunpack.c.l.b16 %v374
    %v1454 = vunpack.c.l.b16 %v375
    %v1455 = vunpack.c.h.b16 %v375
    %v1456 = vunpack.c.l.b16 %v376
    %v1457 = vunpack.c.h.b16 %v376
    %v1458 = vunpack.c.l.b16 %v377
    %v1459 = vunpack.c.h.b16 %v377
    %v1460 = vunpack.c.l.b16 %v378
    %v1461 = vunpack.c.h.b16 %v378
    %v1462 = vunpack.c.l.b16 %v379
    %v1463 = vunpack.c.h.b16 %v379
    %v1464 = vunpack.c.l.b16 %v380
    %v1465 = vunpack.c.h.b16 %v380
    %v1466 = vunpack.c.l.b16 %v381
    %v1467 = vunpack.c.h.b16 %v381
    %v1468 = vunpack.c.l.b16 %v382
    %v1469 = vunpack.c.h.b16 %v382
    %v1470 = vunpack.c.l.b16 %v383
    %v1471 = vunpack.c.h.b16 %v383
    %v1472 = vunpack.c.l.b16 %v384
    %v1473 = vunpack.c.l.b16 %v385
    %v1474 = vunpack.c.h.b16 %v385
    %v1475 = vunpack.c.l.b16 %v386
    %v1476 = vunpack.c.h.b16 %v386
    %v1477 = vunpack.c.l.b16 %v387
    %v1478 = vunpack.c.h.b16 %v387
    %v1479 = vunpack.c.l.b16 %v388
    %v1480 = vunpack.c.h.b16 %v388
    %v1481 = vunpack.c.l.b16 %v389
    %v1482 = vunpack.c.h.b16 %v389
    %v1483 = vunpack.c.l.b16 %v390
    %v1484 = vunpack.c.h.b16 %v390
    %v1485 = vunpack.c.l.b16 %v391
    %v1486 = vunpack.c.h.b16 %v391
    %v1487 = vunpack.c.l.b16 %v392
    %v1488 = vunpack.c.h.b16 %v392
    %v1489 = vunpack.c.l.b16 %v393
    %v1490 = vunpack.c.h.b16 %v393
    %v1491 = vunpack.c.l.b16 %v394
    %v1492 = vunpack.c.l.b16 %v395
    %v1493 = vunpack.c.h.b16 %v395
    %v1494 = vunpack.c.l.b16 %v396
    %v1495 = vunpack.c.h.b16 %v396
    %v1496 = vunpack.c.l.b16 %v397
    %v1497 = vunpack.c.h.b16 %v397
    %v1498 = vunpack.c.l.b16 %v398
    %v1499 = vunpack.c.h.b16 %v398
    %v1500 = vunpack.c.l.b16 %v399
    %v1501 = vunpack.c.h.b16 %v399
    %v1502 = vunpack.c.l.b16 %v400
    %v1503 = vunpack.c.h.b16 %v400
    %v1504 = vunpack.c.l.b16 %v401
    %v1505 = vunpack.c.h.b16 %v401
    %v1506 = vunpack.c.l.b16 %v402
    %v1507 = vunpack.c.h.b16 %v402
    %v1508 = vunpack.c.l.b16 %v403
    %v1509 = vunpack.c.h.b16 %v403
    %v1510 = vunpack.c.l.b16 %v404
    %v1511 = vunpack.c.l.b16 %v405
    %v1512 = vunpack.c.h.b16 %v405
    %v1513 = vunpack.c.l.b16 %v406
    %v1514 = vunpack.c.h.b16 %v406
    %v1515 = vunpack.c.l.b16 %v407
    %v1516 = vunpack.c.h.b16 %v407
    %v1517 = vunpack.c.l.b16 %v408
    %v1518 = vunpack.c.h.b16 %v408
    %v1519 = vunpack.c.l.b16 %v409
    %v1520 = vunpack.c.h.b16 %v409
    %v1521 = vunpack.c.l.b16 %v410
    %v1522 = vunpack.c.h.b16 %v410
    %v1523 = vunpack.c.l.b16 %v411
    %v1524 = vunpack.c.h.b16 %v411
    %v1525 = vunpack.c.l.b16 %v412
    %v1526 = vunpack.c.h.b16 %v412
    %v1527 = vunpack.c.l.b16 %v413
    %v1528 = vunpack.c.h.b16 %v413
    %v1529 = vunpack.c.l.b16 %v414
    %v1530 = vunpack.c.l.b16 %v415
    %v1531 = vunpack.c.h.b16 %v415
    %v1532 = vunpack.c.l.b16 %v416
    %v1533 = vunpack.c.h.b16 %v416
    %v1534 = vunpack.c.l.b16 %v417
    %v1535 = vunpack.c.h.b16 %v417
    %v1536 = vunpack.c.l.b16 %v418
    %v1537 = vunpack.c.h.b16 %v418
    %v1538 = vunpack.c.l.b16 %v419
    %v1539 = vunpack.c.h.b16 %v419
    %v1540 = vunpack.c.l.b16 %v420
    %v1541 = vunpack.c.h.b16 %v420
    %v1542 = vunpack.c.l.b16 %v421
    %v1543 = vunpack.c.h.b16 %v421
    %v1544 = vunpack.c.l.b16 %v422
    %v1545 = vunpack.c.h.b16 %v422
    %v1546 = vunpack.c.l.b16 %v423
    %v1547 = vunpack.c.h.b16 %v423
    %v1548 = vunpack.c.l.b16 %v424
    %v1549 = vunpack.c.l.b16 %v425
    %v1550 = vunpack.c.h.b16 %v425
    %v1551 = vunpack.c.l.b16 %v426
    %v1552 = vunpack.c.h.b16 %v426
    %v1553 = vunpack.c.l.b16 %v427
    %v1554 = vunpack.c.h.b16 %v427
    %v1555 = vunpack.c.l.b16 %v428
    %v1556 = vunpack.c.h.b16 %v428
    %v1557 = vunpack.c.l.b16 %v429
    %v1558 = vunpack.c.h.b16 %v429
    %v1559 = vunpack.c.l.b16 %v430
    %v1560 = vunpack.c.h.b16 %v430
    %v1561 = vunpack.c.l.b16 %v431
    %v1562 = vunpack.c.h.b16 %v431
    %v1563 = vunpack.c.l.b16 %v432
    %v1564 = vunpack.c.h.b16 %v432
    %v1565 = vunpack.c.l.b16 %v433
    %v1566 = vunpack.c.h.b16 %v433
    %v1567 = vunpack.c.l.b16 %v434
    %v1568 = vunpack.c.l.b16 %v435
    %v1569 = vunpack.c.h.b16 %v435
    %v1570 = vunpack.c.l.b16 %v436
    %v1571 = vunpack.c.h.b16 %v436
    %v1572 = vunpack.c.l.b16 %v437
    %v1573 = vunpack.c.h.b16 %v437
    %v1574 = vunpack.c.l.b16 %v438
    %v1575 = vunpack.c.h.b16 %v438
    %v1576 = vunpack.c.l.b16 %v439
    %v1577 = vunpack.c.h.b16 %v439
    %v1578 = vunpack.c.l.b16 %v440
    %v1579 = vunpack.c.h.b16 %v440
    %v1580 = vunpack.c.l.b16 %v441
    %v1581 = vunpack.c.h.b16 %v441
    %v1582 = vunpack.c.l.b16 %v442
    %v1583 = vunpack.c.h.b16 %v442
    %v1584 = vunpack.c.l.b16 %v443
    %v1585 = vunpack.c.h.b16 %v443
    %v1586 = vunpack.c.l.b16 %v444
    %v1587 = vunpack.c.l.b16 %v445
    %v1588 = vunpack.c.h.b16 %v445
    %v1589 = vunpack.c.l.b16 %v446
    %v1590 = vunpack.c.h.b16 %v446
    %v1591 = vunpack.c.l.b16 %v447
    %v1592 = vunpack.c.h.b16 %v447
    %v1593 = vunpack.c.l.b16 %v448
    %v1594 = vunpack.c.h.b16 %v448
    %v1595 = vunpack.c.l.b16 %v449
    %v1596 = vunpack.c.h.b16 %v449
    %v1597 = vunpack.c.l.b16 %v450
    %v1598 = vunpack.c.h.b16 %v450
    %v1599 = vunpack.c.l.b16 %v451
    %v1600 = vunpack.c.h.b16 %v451
    %v1601 = vunpack.c.l.b16 %v452
    %v1602 = vunpack.c.h.b16 %v452
    %v1603 = vunpack.c.l.b16 %v453
    %v1604 = vunpack.c.h.b16 %v453
    %v1605 = vunpack.c.l.b16 %v454
    %v1606 = vunpack.c.l.b16 %v455
    %v1607 = vunpack.c.h.b16 %v455
    %v1608 = vunpack.c.l.b16 %v456
    %v1609 = vunpack.c.h.b16 %v456
    %v1610 = vunpack.c.l.b16 %v457
    %v1611 = vunpack.c.h.b16 %v457
    %v1612 = vunpack.c.l.b16 %v458
    %v1613 = vunpack.c.h.b16 %v458
    %v1614 = vunpack.c.l.b16 %v459
    %v1615 = vunpack.c.h.b16 %v459
    %v1616 = vunpack.c.l.b16 %v460
    %v1617 = vunpack.c.h.b16 %v460
    %v1618 = vunpack.c.l.b16 %v461
    %v1619 = vunpack.c.h.b16 %v461
    %v1620 = vunpack.c.l.b16 %v462
    %v1621 = vunpack.c.h.b16 %v462
    %v1622 = vunpack.c.l.b16 %v463
    %v1623 = vunpack.c.h.b16 %v463
    %v1624 = vunpack.c.l.b16 %v464
    %v1625 = vunpack.c.l.b16 %v465
    %v1626 = vunpack.c.h.b16 %v465
    %v1627 = vunpack.c.l.b16 %v466
    %v1628 = vunpack.c.h.b16 %v466
    %v1629 = vunpack.c.l.b16 %v467
    %v1630 = vunpack.c.h.b16 %v467
    %v1631 = vunpack.c.l.b16 %v468
    %v1632 = vunpack.c.h.b16 %v468
    %v1633 = vunpack.c.l.b16 %v469
    %v1634 = vunpack.c.h.b16 %v469
    %v1635 = vunpack.c.l.b16 %v470
    %v1636 = vunpack.c.h.b16 %v470
    %v1637 = vunpack.c.l.b16 %v471
    %v1638 = vunpack.c.h.b16 %v471
    %v1639 = vunpack.c.l.b16 %v472
    %v1640 = vunpack.c.h.b16 %v472
    %v1641 = vunpack.c.l.b16 %v473
    %v1642 = vunpack.c.h.b16 %v473
    %v1643 = vunpack.c.l.b16 %v474
    %v1644 = vunpack.c.l.b16 %v475
    %v1645 = vunpack.c.h.b16 %v475
    %v1646 = vunpack.c.l.b16 %v476
    %v1647 = vunpack.c.h.b16 %v476
    %v1648 = vunpack.c.l.b16 %v477
    %v1649 = vunpack.c.h.b16 %v477
    %v1650 = vunpack.c.l.b16 %v478
    %v1651 = vunpack.c.h.b16 %v478
    %v1652 = vunpack.c.l.b16 %v479
    %v1653 = vunpack.c.h.b16 %v479
    %v1654 = vunpack.c.l.b16 %v480
    %v1655 = vunpack.c.h.b16 %v480
    %v1656 = vunpack.c.l.b16 %v481
    %v1657 = vunpack.c.h.b16 %v481
    %v1658 = vunpack.c.l.b16 %v482
    %v1659 = vunpack.c.h.b16 %v482
    %v1660 = vunpack.c.l.b16 %v483
    %v1661 = vunpack.c.h.b16 %v483
    %v1662 = vunpack.c.l.b16 %v484
    %v1663 = vunpack.c.l.b16 %v485
    %v1664 = vunpack.c.h.b16 %v485
    %v1665 = vunpack.c.l.b16 %v486
    %v1666 = vunpack.c.h.b16 %v486
    %v1667 = vunpack.c.l.b16 %v487
    %v1668 = vunpack.c.h.b16 %v487
    %v1669 = vunpack.c.l.b16 %v488
    %v1670 = vunpack.c.h.b16 %v488
    %v1671 = vunpack.c.l.b16 %v489
    %v1672 = vunpack.c.h.b16 %v489
    %v1673 = vunpack.c.l.b16 %v490
    %v1674 = vunpack.c.h.b16 %v490
    %v1675 = vunpack.c.l.b16 %v491
    %v1676 = vunpack.c.h.b16 %v491
    %v1677 = vunpack.c.l.b16 %v492
    %v1678 = vunpack.c.h.b16 %v492
    %v1679 = vunpack.c.l.b16 %v493
    %v1680 = vunpack.c.h.b16 %v493
    %v1681 = vunpack.c.l.b16 %v494
    %v1682 = vunpack.c.l.b16 %v495
    %v1683 = vunpack.c.h.b16 %v495
    %v1684 = vunpack.c.l.b16 %v496
    %v1685 = vunpack.c.h.b16 %v496
    %v1686 = vunpack.c.l.b16 %v497
    %v1687 = vunpack.c.h.b16 %v497
    %v1688 = vunpack.c.l.b16 %v498
    %v1689 = vunpack.c.h.b16 %v498
    %v1690 = vunpack.c.l.b16 %v499
    %v1691 = vunpack.c.h.b16 %v499
    %v1692 = vunpack.c.l.b16 %v500
    %v1693 = vunpack.c.h.b16 %v500
    %v1694 = vunpack.c.l.b16 %v501
    %v1695 = vunpack.c.h.b16 %v501
    %v1696 = vunpack.c.l.b16 %v502
    %v1697 = vunpack.c.h.b16 %v502
    %v1698 = vunpack.c.l.b16 %v503
    %v1699 = vunpack.c.h.b16 %v503
    %v1700 = vunpack.c.l.b16 %v504
    %v1701 = vunpack.c.l.b16 %v505
    %v1702 = vunpack.c.h.b16 %v505
    %v1703 = vunpack.c.l.b16 %v506
    %v1704 = vunpack.c.h.b16 %v506
    %v1705 = vunpack.c.l.b16 %v507
    %v1706 = vunpack.c.h.b16 %v507
    %v1707 = vunpack.c.l.b16 %v508
    %v1708 = vunpack.c.h.b16 %v508
    %v1709 = vunpack.c.l.b16 %v509
    %v1710 = vunpack.c.h.b16 %v509
    %v1711 = vunpack.c.l.b16 %v510
    %v1712 = vunpack.c.h.b16 %v510
    %v1713 = vunpack.c.l.b16 %v511
    %v1714 = vunpack.c.h.b16 %v511
    %v1715 = vunpack.c.l.b16 %v512
    %v1716 = vunpack.c.h.b16 %v512
    %v1717 = vunpack.c.l.b16 %v513
    %v1718 = vunpack.c.h.b16 %v513
    %v1719 = vunpack.c.l.b16 %v514
    %v1720 = vunpack.c.l.b16 %v515
    %v1721 = vunpack.c.h.b16 %v515
    %v1722 = vunpack.c.l.b16 %v516
    %v1723 = vunpack.c.h.b16 %v516
    %v1724 = vunpack.c.l.b16 %v517
    %v1725 = vunpack.c.h.b16 %v517
    %v1726 = vunpack.c.l.b16 %v518
    %v1727 = vunpack.c.h.b16 %v518
    %v1728 = vunpack.c.l.b16 %v519
    %v1729 = vunpack.c.h.b16 %v519
    %v1730 = vunpack.c.l.b16 %v520
    %v1731 = vunpack.c.h.b16 %v520
    %v1732 = vunpack.c.l.b16 %v521
    %v1733 = vunpack.c.h.b16 %v521
    %v1734 = vunpack.c.l.b16 %v522
    %v1735 = vunpack.c.h.b16 %v522
    %v1736 = vunpack.c.l.b16 %v523
    %v1737 = vunpack.c.h.b16 %v523
    %v1738 = vunpack.c.l.b16 %v524
    %v1739 = vunpack.c.l.b16 %v525
    %v1740 = vunpack.c.h.b16 %v525
    %v1741 = vunpack.c.l.b16 %v526
    %v1742 = vunpack.c.h.b16 %v526
    %v1743 = vunpack.c.l.b16 %v527
    %v1744 = vunpack.c.h.b16 %v527
    %v1745 = vunpack.c.l.b16 %v528
    %v1746 = vunpack.c.h.b16 %v528
    %v1747 = vunpack.c.l.b16 %v529
    %v1748 = vunpack.c.h.b16 %v529
    %v1749 = vunpack.c.l.b16 %v530
    %v1750 = vunpack.c.h.b16 %v530
    %v1751 = vunpack.c.l.b16 %v531
    %v1752 = vunpack.c.h.b16 %v531
    %v1753 = vunpack.c.l.b16 %v532
    %v1754 = vunpack.c.h.b16 %v532
    %v1755 = vunpack.c.l.b16 %v533
    %v1756 = vunpack.c.h.b16 %v533
    %v1757 = vunpack.c.l.b16 %v534
    %v1758 = vunpack.c.l.b16 %v535
    %v1759 = vunpack.c.h.b16 %v535
    %v1760 = vunpack.c.l.b16 %v536
    %v1761 = vunpack.c.h.b16 %v536
    %v1762 = vunpack.c.l.b16 %v537
    %v1763 = vunpack.c.h.b16 %v537
    %v1764 = vunpack.c.l.b16 %v538
    %v1765 = vunpack.c.h.b16 %v538
    %v1766 = vunpack.c.l.b16 %v539
    %v1767 = vunpack.c.h.b16 %v539
    %v1768 = vunpack.c.l.b16 %v540
    %v1769 = vunpack.c.h.b16 %v540
    %v1770 = vunpack.c.l.b16 %v541
    %v1771 = vunpack.c.h.b16 %v541
    %v1772 = vunpack.c.l.b16 %v542
    %v1773 = vunpack.c.h.b16 %v542
    %v1774 = vunpack.c.l.b16 %v543
    %v1775 = vunpack.c.h.b16 %v543
    %v1776 = vunpack.c.l.b16 %v544
    %v1777 = vunpack.c.l.b16 %v545
    %v1778 = vunpack.c.h.b16 %v545
    %v1779 = vunpack.c.l.b16 %v546
    %v1780 = vunpack.c.h.b16 %v546
    %v1781 = vunpack.c.l.b16 %v547
    %v1782 = vunpack.c.h.b16 %v547
    %v1783 = vunpack.c.l.b16 %v548
    %v1784 = vunpack.c.h.b16 %v548
    %v1785 = vunpack.c.l.b16 %v549
    %v1786 = vunpack.c.h.b16 %v549
    %v1787 = vunpack.c.l.b16 %v550
    %v1788 = vunpack.c.h.b16 %v550
    %v1789 = vunpack.c.l.b16 %v551
    %v1790 = vunpack.c.h.b16 %v551
    %v1791 = vunpack.c.l.b16 %v552
    %v1792 = vunpack.c.h.b16 %v552
    %v1793 = vunpack.c.l.b16 %v553
    %v1794 = vunpack.c.h.b16 %v553
    %v1795 = vunpack.c.l.b16 %v554
    %v1796 = vunpack.c.l.b16 %v555
    %v1797 = vunpack.c.h.b16 %v555
    %v1798 = vunpack.c.l.b16 %v556
    %v1799 = vunpack.c.h.b16 %v556
    %v1800 = vunpack.c.l.b16 %v557
    %v1801 = vunpack.c.h.b16 %v557
    %v1802 = vunpack.c.l.b16 %v558
    %v1803 = vunpack.c.h.b16 %v558
    %v1804 = vunpack.c.l.b16 %v559
    %v1805 = vunpack.c.h.b16 %v559
    %v1806 = vunpack.c.l.b16 %v560
    %v1807 = vunpack.c.h.b16 %v560
    %v1808 = vunpack.c.l.b16 %v561
    %v1809 = vunpack.c.h.b16 %v561
    %v1810 = vunpack.c.l.b16 %v562
    %v1811 = vunpack.c.h.b16 %v562
    %v1812 = vunpack.c.l.b16 %v563
    %v1813 = vunpack.c.h.b16 %v563
    %v1814 = vunpack.c.l.b16 %v564
    %v1815 = vunpack.c.l.b16 %v565
    %v1816 = vunpack.c.h.b16 %v565
    %v1817 = vunpack.c.l.b16 %v566
    %v1818 = vunpack.c.h.b16 %v566
    %v1819 = vunpack.c.l.b16 %v567
    %v1820 = vunpack.c.h.b16 %v567
    %v1821 = vunpack.c.l.b16 %v568
    %v1822 = vunpack.c.h.b16 %v568
    %v1823 = vunpack.c.l.b16 %v569
    %v1824 = vunpack.c.h.b16 %v569
    %v1825 = vunpack.c.l.b16 %v570
    %v1826 = vunpack.c.h.b16 %v570
    %v1827 = vunpack.c.l.b16 %v571
    %v1828 = vunpack.c.h.b16 %v571
    %v1829 = vunpack.c.l.b16 %v572
    %v1830 = vunpack.c.h.b16 %v572
    %v1831 = vunpack.c.l.b16 %v573
    %v1832 = vunpack.c.h.b16 %v573
    %v1833 = vunpack.c.l.b16 %v574
    %v1834 = vunpack.c.l.b16 %v575
    %v1835 = vunpack.c.h.b16 %v575
    %v1836 = vunpack.c.l.b16 %v576
    %v1837 = vunpack.c.h.b16 %v576
    %v1838 = vunpack.c.l.b16 %v577
    %v1839 = vunpack.c.h.b16 %v577
    %v1840 = vunpack.c.l.b16 %v578
    %v1841 = vunpack.c.h.b16 %v578
    %v1842 = vunpack.c.l.b16 %v579
    %v1843 = vunpack.c.h.b16 %v579
    %v1844 = vunpack.c.l.b16 %v580
    %v1845 = vunpack.c.h.b16 %v580
    %v1846 = vunpack.c.l.b16 %v581
    %v1847 = vunpack.c.h.b16 %v581
    %v1848 = vunpack.c.l.b16 %v582
    %v1849 = vunpack.c.h.b16 %v582
    %v1850 = vunpack.c.l.b16 %v583
    %v1851 = vunpack.c.h.b16 %v583
    %v1852 = vunpack.c.l.b16 %v584
    %v1853 = vunpack.c.l.b16 %v585
    %v1854 = vunpack.c.h.b16 %v585
    %v1855 = vunpack.c.l.b16 %v586
    %v1856 = vunpack.c.h.b16 %v586
    %v1857 = vunpack.c.l.b16 %v587
    %v1858 = vunpack.c.h.b16 %v587
    %v1859 = vunpack.c.l.b16 %v588
    %v1860 = vunpack.c.h.b16 %v588
    %v1861 = vunpack.c.l.b16 %v589
    %v1862 = vunpack.c.h.b16 %v589
    %v1863 = vunpack.c.l.b16 %v590
    %v1864 = vunpack.c.h.b16 %v590
    %v1865 = vunpack.c.l.b16 %v591
    %v1866 = vunpack.c.h.b16 %v591
    %v1867 = vunpack.c.l.b16 %v592
    %v1868 = vunpack.c.h.b16 %v592
    %v1869 = vunpack.c.l.b16 %v593
    %v1870 = vunpack.c.h.b16 %v593
    %v1871 = vunpack.c.l.b16 %v594
    %v1872 = vunpack.c.l.b16 %v595
    %v1873 = vunpack.c.h.b16 %v595
    %v1874 = vunpack.c.l.b16 %v596
    %v1875 = vunpack.c.h.b16 %v596
    %v1876 = vunpack.c.l.b16 %v597
    %v1877 = vunpack.c.h.b16 %v597
    %v1878 = vunpack.c.l.b16 %v598
    %v1879 = vunpack.c.h.b16 %v598
    %v1880 = vunpack.c.l.b16 %v599
    %v1881 = vunpack.c.h.b16 %v599
    %v1882 = vunpack.c.l.b16 %v600
    %v1883 = vunpack.c.h.b16 %v600
    %v1884 = vunpack.c.l.b16 %v601
    %v1885 = vunpack.c.h.b16 %v601
    %v1886 = vunpack.c.l.b16 %v602
    %v1887 = vunpack.c.h.b16 %v602
    %v1888 = vunpack.c.l.b16 %v603
    %v1889 = vunpack.c.h.b16 %v603
    %v1890 = vunpack.c.l.b16 %v604
    %v1891 = vunpack.c.l.b16 %v605
    %v1892 = vunpack.c.h.b16 %v605
    %v1893 = vunpack.c.l.b16 %v606
    %v1894 = vunpack.c.h.b16 %v606
    %v1895 = vunpack.c.l.b16 %v607
    %v1896 = vunpack.c.h.b16 %v607
    %v1897 = vunpack.c.l.b16 %v608
    %v1898 = vunpack.c.h.b16 %v608
    %v1899 = vunpack.c.l.b16 %v609
    %v1900 = vunpack.c.h.b16 %v609
    %v1901 = vunpack.c.l.b16 %v610
    %v1902 = vunpack.c.h.b16 %v610
    %v1903 = vunpack.c.l.b16 %v611
    %v1904 = vunpack.c.h.b16 %v611
    %v1905 = vunpack.c.l.b16 %v612
    %v1906 = vunpack.c.h.b16 %v612
    %v1907 = vunpack.c.l.b16 %v613
    %v1908 = vunpack.c.h.b16 %v613
    %v1909 = vunpack.c.l.b16 %v614
    %v1910 = vunpack.c.l.b16 %v615
    %v1911 = vunpack.c.h.b16 %v615
    %v1912 = vunpack.c.l.b16 %v616
    %v1913 = vunpack.c.h.b16 %v616
    %v1914 = vunpack.c.l.b16 %v617
    %v1915 = vunpack.c.h.b16 %v617
    %v1916 = vunpack.c.l.b16 %v618
    %v1917 = vunpack.c.h.b16 %v618
    %v1918 = vunpack.c.l.b16 %v619
    %v1919 = vunpack.c.h.b16 %v619
    %v1920 = vunpack.c.l.b16 %v620
    %v1921 = vunpack.c.h.b16 %v620
    %v1922 = vunpack.c.l.b16 %v621
    %v1923 = vunpack.c.h.b16 %v621
    %v1924 = vunpack.c.l.b16 %v622
    %v1925 = vunpack.c.h.b16 %v622
    %v1926 = vunpack.c.l.b16 %v623
    %v1927 = vunpack.c.h.b16 %v623
    %v1928 = vunpack.c.l.b16 %v624
    %v1929 = vunpack.c.l.b16 %v625
    %v1930 = vunpack.c.h.b16 %v625
    %v1931 = vunpack.c.l.b16 %v626
    %v1932 = vunpack.c.h.b16 %v626
    %v1933 = vunpack.c.l.b16 %v627
    %v1934 = vunpack.c.h.b16 %v627
    %v1935 = vunpack.c.l.b16 %v628
    %v1936 = vunpack.c.h.b16 %v628
    %v1937 = vunpack.c.l.b16 %v629
    %v1938 = vunpack.c.h.b16 %v629
    %v1939 = vunpack.c.l.b16 %v630
    %v1940 = vunpack.c.h.b16 %v630
    %v1941 = vunpack.c.l.b16 %v631
    %v1942 = vunpack.c.h.b16 %v631
    %v1943 = vunpack.c.l.b16 %v632
    %v1944 = vunpack.c.h.b16 %v632
    %v1945 = vunpack.c.l.b16 %v633
    %v1946 = vunpack.c.h.b16 %v633
    %v1947 = vunpack.c.l.b16 %v634
    %v1948 = vunpack.c.l.b16 %v635
    %v1949 = vunpack.c.h.b16 %v635
    %v1950 = vunpack.c.l.b16 %v636
    %v1951 = vunpack.c.h.b16 %v636
    %v1952 = vunpack.c.l.b16 %v637
    %v1953 = vunpack.c.h.b16 %v637
    %v1954 = vunpack.c.l.b16 %v638
    %v1955 = vunpack.c.h.b16 %v638
    %v1956 = vunpack.c.l.b16 %v639
    %v1957 = vunpack.c.h.b16 %v639
    %v1958 = vunpack.c.l.b16 %v640
    %v1959 = vunpack.c.h.b16 %v640
    %v1960 = vunpack.c.l.b16 %v641
    %v1961 = vunpack.c.h.b16 %v641
    %v1962 = vunpack.c.l.b16 %v642
    %v1963 = vunpack.c.h.b16 %v642
    %v1964 = vunpack.c.l.b16 %v643
    %v1965 = vunpack.c.h.b16 %v643
    %v1966 = vunpack.c.l.b16 %v644
    %v1967 = vunpack.c.l.b16 %v645
    %v1968 = vunpack.c.h.b16 %v645
    %v1969 = vunpack.c.l.b16 %v646
    %v1970 = vunpack.c.h.b16 %v646
    %v1971 = vunpack.c.l.b16 %v647
    %v1972 = vunpack.c.h.b16 %v647
    %v1973 = vunpack.c.l.b16 %v648
    %v1974 = vunpack.c.h.b16 %v648
    %v1975 = vunpack.c.l.b16 %v649
    %v1976 = vunpack.c.h.b16 %v649
    %v1977 = vunpack.c.l.b16 %v650
    %v1978 = vunpack.c.h.b16 %v650
    %v1979 = vunpack.c.l.b16 %v651
    %v1980 = vunpack.c.h.b16 %v651
    %v1981 = vunpack.c.l.b16 %v652
    %v1982 = vunpack.c.h.b16 %v652
    %v1983 = vunpack.c.l.b16 %v653
    %v1984 = vunpack.c.h.b16 %v653
    %v1985 = vunpack.c.l.b16 %v654
    %v1986 = vunpack.c.l.b16 %v655
    %v1987 = vunpack.c.h.b16 %v655
    %v1988 = vunpack.c.l.b16 %v656
    %v1989 = vunpack.c.h.b16 %v656
    %v1990 = vunpack.c.l.b16 %v657
    %v1991 = vunpack.c.h.b16 %v657
    %v1992 = vunpack.c.l.b16 %v658
    %v1993 = vunpack.c.h.b16 %v658
    %v1994 = vunpack.c.l.b16 %v659
    %v1995 = vunpack.c.h.b16 %v659
    %v1996 = vunpack.c.l.b16 %v660
    %v1997 = vunpack.c.h.b16 %v660
    %v1998 = vunpack.c.l.b16 %v661
    %v1999 = vunpack.c.h.b16 %v661
    %v2000 = vunpack.c.l.b16 %v662
    %v2001 = vunpack.c.h.b16 %v662
    %v2002 = vunpack.c.l.b16 %v663
    %v2003 = vunpack.c.h.b16 %v663
    %v2004 = vunpack.c.l.b16 %v664
    %v2005 = vunpack.c.l.b16 %v665
    %v2006 = vunpack.c.h.b16 %v665
    %v2007 = vunpack.c.l.b16 %v666
    %v2008 = vunpack.c.h.b16 %v666
    %v2009 = vunpack.c.l.b16 %v667
    %v2010 = vunpack.c.h.b16 %v667
    %v2011 = vunpack.c.l.b16 %v668
    %v2012 = vunpack.c.h.b16 %v668
    %v2013 = vunpack.c.l.b16 %v669
    %v2014 = vunpack.c.h.b16 %v669
    %v2015 = vunpack.c.l.b16 %v670
    %v2016 = vunpack.c.h.b16 %v670
    %v2017 = vunpack.c.l.b16 %v671
    %v2018 = vunpack.c.h.b16 %v671
    %v2019 = vunpack.c.l.b16 %v672
    %v2020 = vunpack.c.h.b16 %v672
    %v2021 = vunpack.c.l.b16 %v673
    %v2022 = vunpack.c.h.b16 %v673
    %v2023 = vunpack.c.l.b16 %v674
    %v2024 = vunpack.c.l.b16 %v675
    %v2025 = vunpack.c.h.b16 %v675
    %v2026 = vunpack.c.l.b16 %v676
    %v2027 = vunpack.c.h.b16 %v676
    %v2028 = vunpack.c.l.b16 %v677
    %v2029 = vunpack.c.h.b16 %v677
    %v2030 = vunpack.c.l.b16 %v678
    %v2031 = vunpack.c.h.b16 %v678
    %v2032 = vunpack.c.l.b16 %v679
    %v2033 = vunpack.c.h.b16 %v679
    %v2034 = vunpack.c.l.b16 %v680
    %v2035 = vunpack.c.h.b16 %v680
    %v2036 = vunpack.c.l.b16 %v681
    %v2037 = vunpack.c.h.b16 %v681
    %v2038 = vunpack.c.l.b16 %v682
    %v2039 = vunpack.c.h.b16 %v682
    %v2040 = vunpack.c.l.b16 %v683
    %v2041 = vunpack.c.h.b16 %v683
    %v2042 = vunpack.c.l.b16 %v684
    %v2043 = vunpack.c.l.b16 %v685
    %v2044 = vunpack.c.h.b16 %v685
    %v2045 = vunpack.c.l.b16 %v686
    %v2046 = vunpack.c.h.b16 %v686
    %v2047 = vunpack.c.l.b16 %v687
    %v2048 = vunpack.c.h.b16 %v687
    %v2049 = vunpack.c.l.b16 %v688
    %v2050 = vunpack.c.h.b16 %v688
    %v2051 = vunpack.c.l.b16 %v689
    %v2052 = vunpack.c.h.b16 %v689
    %v2053 = vunpack.c.l.b16 %v690
    %v2054 = vunpack.c.h.b16 %v690
    %v2055 = vunpack.c.l.b16 %v691
    %v2056 = vunpack.c.h.b16 %v691
    %v2057 = vunpack.c.l.b16 %v692
    %v2058 = vunpack.c.h.b16 %v692
    %v2059 = vunpack.c.l.b16 %v693
    %v2060 = vunpack.c.h.b16 %v693
    %v2061 = vunpack.c.l.b16 %v694
    %v2062 = vunpack.c.l.b16 %v695
    %v2063 = vunpack.c.h.b16 %v695
    %v2064 = vunpack.c.l.b16 %v696
    %v2065 = vunpack.c.h.b16 %v696
    %v2066 = vunpack.c.l.b16 %v697
    %v2067 = vunpack.c.h.b16 %v697
    %v2068 = vunpack.c.l.b16 %v698
    %v2069 = vunpack.c.h.b16 %v698
    %v2070 = vunpack.c.l.b16 %v699
    %v2071 = vunpack.c.h.b16 %v699
    %v2072 = vunpack.c.l.b16 %v700
    %v2073 = vunpack.c.h.b16 %v700
    %v2074 = vunpack.c.l.b16 %v701
    %v2075 = vunpack.c.h.b16 %v701
    %v2076 = vunpack.c.l.b16 %v702
    %v2077 = vunpack.c.h.b16 %v702
    %v2078 = vunpack.c.l.b16 %v703
    %v2079 = vunpack.c.h.b16 %v703
    %v2080 = vunpack.c.l.b16 %v704
    %v2081 = vunpack.c.l.b16 %v705
    %v2082 = vunpack.c.h.b16 %v705
    %v2083 = vunpack.c.l.b16 %v706
    %v2084 = vunpack.c.h.b16 %v706
    %v2085 = vunpack.c.l.b16 %v707
    %v2086 = vunpack.c.h.b16 %v707
    %v2087 = vunpack.c.l.b16 %v708
    %v2088 = vunpack.c.h.b16 %v708
    %v2089 = vunpack.c.l.b16 %v709
    %v2090 = vunpack.c.h.b16 %v709
    %v2091 = vunpack.c.l.b16 %v710
    %v2092 = vunpack.c.h.b16 %v710
    %v2093 = vunpack.c.l.b16 %v711
    %v2094 = vunpack.c.h.b16 %v711
    %v2095 = vunpack.c.l.b16 %v712
    %v2096 = vunpack.c.h.b16 %v712
    %v2097 = vunpack.c.l.b16 %v713
    %v2098 = vunpack.c.h.b16 %v713
    %v2099 = vunpack.c.l.b16 %v714
    %v2100 = vunpack.c.l.b16 %v715
    %v2101 = vunpack.c.h.b16 %v715
    %v2102 = vunpack.c.l.b16 %v716
    %v2103 = vunpack.c.h.b16 %v716
    %v2104 = vunpack.c.l.b16 %v717
    %v2105 = vunpack.c.h.b16 %v717
    %v2106 = vunpack.c.l.b16 %v718
    %v2107 = vunpack.c.h.b16 %v718
    %v2108 = vunpack.c.l.b16 %v719
    %v2109 = vunpack.c.h.b16 %v719
    %v2110 = vunpack.c.l.b16 %v720
    %v2111 = vunpack.c.h.b16 %v720
    %v2112 = vunpack.c.l.b16 %v721
    %v2113 = vunpack.c.h.b16 %v721
    %v2114 = vunpack.c.l.b16 %v722
    %v2115 = vunpack.c.h.b16 %v722
    %v2116 = vunpack.c.l.b16 %v723
    %v2117 = vunpack.c.h.b16 %v723
    %v2118 = vunpack.c.l.b16 %v724
    %v2119 = vunpack.c.l.b16 %v725
    %v2120 = vunpack.c.h.b16 %v725
    %v2121 = vunpack.c.l.b16 %v726
    %v2122 = vunpack.c.h.b16 %v726
    %v2123 = vunpack.c.l.b16 %v727
    %v2124 = vunpack.c.h.b16 %v727
    %v2125 = vunpack.c.l.b16 %v728
    %v2126 = vunpack.c.h.b16 %v728
    %v2127 = vunpack.c.l.b16 %v729
    %v2128 = vunpack.c.h.b16 %v729
    %v2129 = vunpack.c.l.b16 %v730
    %v2130 = vunpack.c.h.b16 %v730
    %v2131 = vunpack.c.l.b16 %v731
    %v2132 = vunpack.c.h.b16 %v731
    %v2133 = vunpack.c.l.b16 %v732
    %v2134 = vunpack.c.h.b16 %v732
    %v2135 = vunpack.c.l.b16 %v733
    %v2136 = vunpack.c.h.b16 %v733
    %v2137 = vunpack.c.l.b16 %v734
    %v2138 = vunpack.c.l.b16 %v735
    %v2139 = vunpack.c.h.b16 %v735
    %v2140 = vunpack.c.l.b16 %v736
    %v2141 = vunpack.c.h.b16 %v736
    %v2142 = vunpack.c.l.b16 %v737
    %v2143 = vunpack.c.h.b16 %v737
    %v2144 = vunpack.c.l.b16 %v738
    %v2145 = vunpack.c.h.b16 %v738
    %v2146 = vunpack.c.l.b16 %v739
    %v2147 = vunpack.c.h.b16 %v739
    %v2148 = vunpack.c.l.b16 %v740
    %v2149 = vunpack.c.h.b16 %v740
    %v2150 = vunpack.c.l.b16 %v741
    %v2151 = vunpack.c.h.b16 %v741
    %v2152 = vunpack.c.l.b16 %v742
    %v2153 = vunpack.c.h.b16 %v742
    %v2154 = vunpack.c.l.b16 %v743
    %v2155 = vunpack.c.h.b16 %v743
    %v2156 = vunpack.c.l.b16 %v744
    %v2157 = vunpack.c.l.b16 %v745
    %v2158 = vunpack.c.h.b16 %v745
    %v2159 = vunpack.c.l.b16 %v746
    %v2160 = vunpack.c.h.b16 %v746
    %v2161 = vunpack.c.l.b16 %v747
    %v2162 = vunpack.c.h.b16 %v747
    %v2163 = vunpack.c.l.b16 %v748
    %v2164 = vunpack.c.h.b16 %v748
    %v2165 = vunpack.c.l.b16 %v749
    %v2166 = vunpack.c.h.b16 %v749
    %v2167 = vunpack.c.l.b16 %v750
    %v2168 = vunpack.c.h.b16 %v750
    %v2169 = vunpack.c.l.b16 %v751
    %v2170 = vunpack.c.h.b16 %v751
    %v2171 = vunpack.c.l.b16 %v752
    %v2172 = vunpack.c.h.b16 %v752
    %v2173 = vunpack.c.l.b16 %v753
    %v2174 = vunpack.c.h.b16 %v753
    %v2175 = vunpack.c.l.b16 %v754
    %v2176 = vunpack.c.l.b16 %v755
    %v2177 = vunpack.c.h.b16 %v755
    %v2178 = vunpack.c.l.b16 %v756
    %v2179 = vunpack.c.h.b16 %v756
    %v2180 = vunpack.c.l.b16 %v757
    %v2181 = vunpack.c.h.b16 %v757
    %v2182 = vunpack.c.l.b16 %v758
    %v2183 = vunpack.c.h.b16 %v758
    %v2184 = vunpack.c.l.b16 %v759
    %v2185 = vunpack.c.h.b16 %v759
    %v2186 = vunpack.c.l.b16 %v760
    %v2187 = vunpack.c.h.b16 %v760
    %v2188 = vunpack.c.l.b16 %v761
    %v2189 = vunpack.c.h.b16 %v761
    %v2190 = vunpack.c.l.b16 %v762
    %v2191 = vunpack.c.h.b16 %v762
    %v2192 = vunpack.c.l.b16 %v763
    %v2193 = vunpack.c.h.b16 %v763
    %v2194 = vunpack.c.l.b16 %v764
    %v2195 = vunpack.c.l.b16 %v765
    %v2196 = vunpack.c.h.b16 %v765
    %v2197 = vunpack.c.l.b16 %v766
    %v2198 = vunpack.c.h.b16 %v766
    %v2199 = vunpack.c.l.b16 %v767
    %v2200 = vunpack.c.h.b16 %v767
    %v2201 = vunpack.c.l.b16 %v768
    %v2202 = vunpack.c.h.b16 %v768
    %v2203 = vunpack.c.l.b16 %v769
    %v2204 = vunpack.c.h.b16 %v769
    %v2205 = vunpack.c.l.b16 %v770
    %v2206 = vunpack.c.h.b16 %v770
    %v2207 = vunpack.c.l.b16 %v771
    %v2208 = vunpack.c.h.b16 %v771
    %v2209 = vunpack.c.l.b16 %v772
    %v2210 = vunpack.c.h.b16 %v772
    %v2211 = vunpack.c.l.b16 %v773
    %v2212 = vunpack.c.h.b16 %v773
    %v2213 = vunpack.c.l.b16 %v774
    %v2214 = vunpack.c.l.b16 %v775
    %v2215 = vunpack.c.h.b16 %v775
    %v2216 = vunpack.c.l.b16 %v776
    %v2217 = vunpack.c.h.b16 %v776
    %v2218 = vunpack.c.l.b16 %v777
    %v2219 = vunpack.c.h.b16 %v777
    %v2220 = vunpack.c.l.b16 %v778
    %v2221 = vunpack.c.h.b16 %v778
    %v2222 = vunpack.c.l.b16 %v779
    %v2223 = vunpack.c.h.b16 %v779
    %v2224 = vunpack.c.l.b16 %v780
    %v2225 = vunpack.c.h.b16 %v780
    %v2226 = vunpack.c.l.b16 %v781
    %v2227 = vunpack.c.h.b16 %v781
    %v2228 = vunpack.c.l.b16 %v782
    %v2229 = vunpack.c.h.b16 %v782
    %v2230 = vunpack.c.l.b16 %v783
    %v2231 = vunpack.c.h.b16 %v783
    %v2232 = vunpack.c.l.b16 %v784
    %v2233 = vunpack.c.l.b16 %v785
    %v2234 = vunpack.c.h.b16 %v785
    %v2235 = vunpack.c.l.b16 %v786
    %v2236 = vunpack.c.h.b16 %v786
    %v2237 = vunpack.c.l.b16 %v787
    %v2238 = vunpack.c.h.b16 %v787
    %v2239 = vunpack.c.l.b16 %v788
    %v2240 = vunpack.c.h.b16 %v788
    %v2241 = vunpack.c.l.b16 %v789
    %v2242 = vunpack.c.h.b16 %v789
    %v2243 = vunpack.c.l.b16 %v790
    %v2244 = vunpack.c.h.b16 %v790
    %v2245 = vunpack.c.l.b16 %v791
    %v2246 = vunpack.c.h.b16 %v791
    %v2247 = vunpack.c.l.b16 %v792
    %v2248 = vunpack.c.h.b16 %v792
    %v2249 = vunpack.c.l.b16 %v793
    %v2250 = vunpack.c.h.b16 %v793
    %v2251 = vunpack.c.l.b16 %v794
    %v2252 = vunpack.c.l.b16 %v795
    %v2253 = vunpack.c.h.b16 %v795
    %v2254 = vunpack.c.l.b16 %v796
    %v2255 = vunpack.c.h.b16 %v796
    %v2256 = vunpack.c.l.b16 %v797
    %v2257 = vunpack.c.h.b16 %v797
    %v2258 = vunpack.c.l.b16 %v798
    %v2259 = vunpack.c.h.b16 %v798
    %v2260 = vunpack.c.l.b16 %v799
    %v2261 = vunpack.c.h.b16 %v799
    %v2262 = vunpack.c.l.b16 %v800
    %v2263 = vunpack.c.h.b16 %v800
    %v2264 = vunpack.c.l.b16 %v801
    %v2265 = vunpack.c.h.b16 %v801
    %v2266 = vunpack.c.l.b16 %v802
    %v2267 = vunpack.c.h.b16 %v802
    %v2268 = vunpack.c.l.b16 %v803
    %v2269 = vunpack.c.h.b16 %v803
    %v2270 = vunpack.c.l.b16 %v804
    %v2271 = vunpack.c.l.b16 %v805
    %v2272 = vunpack.c.h.b16 %v805
    %v2273 = vunpack.c.l.b16 %v806
    %v2274 = vunpack.c.h.b16 %v806
    %v2275 = vunpack.c.l.b16 %v807
    %v2276 = vunpack.c.h.b16 %v807
    %v2277 = vunpack.c.l.b16 %v808
    %v2278 = vunpack.c.h.b16 %v808
    %v2279 = vunpack.c.l.b16 %v809
    %v2280 = vunpack.c.h.b16 %v809
    %v2281 = vunpack.c.l.b16 %v810
    %v2282 = vunpack.c.h.b16 %v810
    %v2283 = vunpack.c.l.b16 %v811
    %v2284 = vunpack.c.h.b16 %v811
    %v2285 = vunpack.c.l.b16 %v812
    %v2286 = vunpack.c.h.b16 %v812
    %v2287 = vunpack.c.l.b16 %v813
    %v2288 = vunpack.c.h.b16 %v813
    %v2289 = vunpack.c.l.b16 %v814
    %v2290 = vunpack.c.l.b16 %v815
    %v2291 = vunpack.c.h.b16 %v815
    %v2292 = vunpack.c.l.b16 %v816
    %v2293 = vunpack.c.h.b16 %v816
    %v2294 = vunpack.c.l.b16 %v817
    %v2295 = vunpack.c.h.b16 %v817
    %v2296 = vunpack.c.l.b16 %v818
    %v2297 = vunpack.c.h.b16 %v818
    %v2298 = vunpack.c.l.b16 %v819
    %v2299 = vunpack.c.h.b16 %v819
    %v2300 = vunpack.c.l.b16 %v820
    %v2301 = vunpack.c.h.b16 %v820
    %v2302 = vunpack.c.l.b16 %v821
    %v2303 = vunpack.c.h.b16 %v821
    %v2304 = vunpack.c.l.b16 %v822
    %v2305 = vunpack.c.h.b16 %v822
    %v2306 = vunpack.c.l.b16 %v823
    %v2307 = vunpack.c.h.b16 %v823
    %v2308 = vunpack.c.l.b16 %v824
    %v2309 = vunpack.c.l.b16 %v825
    %v2310 = vunpack.c.h.b16 %v825
    %v2311 = vunpack.c.l.b16 %v826
    %v2312 = vunpack.c.h.b16 %v826
    %v2313 = vunpack.c.l.b16 %v827
    %v2314 = vunpack.c.h.b16 %v827
    %v2315 = vunpack.c.l.b16 %v828
    %v2316 = vunpack.c.h.b16 %v828
    %v2317 = vunpack.c.l.b16 %v829
    %v2318 = vunpack.c.h.b16 %v829
    %v2319 = vunpack.c.l.b16 %v830
    %v2320 = vunpack.c.h.b16 %v830
    %v2321 = vunpack.c.l.b16 %v831
    %v2322 = vunpack.c.h.b16 %v831
    %v2323 = vunpack.c.l.b16 %v832
    %v2324 = vunpack.c.h.b16 %v832
    %v2325 = vunpack.c.l.b16 %v833
    %v2326 = vunpack.c.h.b16 %v833
    %v2327 = vunpack.c.l.b16 %v834
    %v2328 = vpack.c.b16 %v1435, %v1416
    %v2329 = vpack.c.b16 %v1436, %v1417
    %v2330 = vpack.c.b16 %v1437, %v1418
    %v2331 = vpack.c.b16 %v1438, %v1419
    %v2332 = vpack.c.b16 %v1439, %v1420
    %v2333 = vpack.c.b16 %v1440, %v1421
    %v2334 = vpack.c.b16 %v1441, %v1422
    %v2335 = vpack.c.b16 %v1442, %v1423
    %v2336 = vpack.c.b16 %v1443, %v1424
    %v2337 = vpack.c.b16 %v1444, %v1425
    %v2338 = vpack.c.b16 %v1445, %v1426
    %v2339 = vpack.c.b16 %v1446, %v1427
    %v2340 = vpack.c.b16 %v1447, %v1428
    %v2341 = vpack.c.b16 %v1448, %v1429
    %v2342 = vpack.c.b16 %v1449, %v1430
    %v2343 = vpack.c.b16 %v1450, %v1431
    %v2344 = vpack.c.b16 %v1451, %v1432
    %v2345 = vpack.c.b16 %v1452, %v1433
    %v2346 = vpack.c.b16 %v1453, %v1434
    %v2347 = vpack.c.b16 %v1473, %v1454
    %v2348 = vpack.c.b16 %v1474, %v1455
    %v2349 = vpack.c.b16 %v1475, %v1456
    %v2350 = vpack.c.b16 %v1476, %v1457
    %v2351 = vpack.c.b16 %v1477, %v1458
    %v2352 = vpack.c.b16 %v1478, %v1459
    %v2353 = vpack.c.b16 %v1479, %v1460
    %v2354 = vpack.c.b16 %v1480, %v1461
    %v2355 = vpack.c.b16 %v1481, %v1462
    %v2356 = vpack.c.b16 %v1482, %v1463
    %v2357 = vpack.c.b16 %v1483, %v1464
    %v2358 = vpack.c.b16 %v1484, %v1465
    %v2359 = vpack.c.b16 %v1485, %v1466
    %v2360 = vpack.c.b16 %v1486, %v1467
    %v2361 = vpack.c.b16 %v1487, %v1468
    %v2362 = vpack.c.b16 %v1488, %v1469
    %v2363 = vpack.c.b16 %v1489, %v1470
    %v2364 = vpack.c.b16 %v1490, %v1471
    %v2365 = vpack.c.b16 %v1491, %v1472
    %v2366 = vpack.c.b16 %v1511, %v1492
    %v2367 = vpack.c.b16 %v1512, %v1493
    %v2368 = vpack.c.b16 %v1513, %v1494
    %v2369 = vpack.c.b16 %v1514, %v1495
    %v2370 = vpack.c.b16 %v1515, %v1496
    %v2371 = vpack.c.b16 %v1516, %v1497
    %v2372 = vpack.c.b16 %v1517, %v1498
    %v2373 = vpack.c.b16 %v1518, %v1499
    %v2374 = vpack.c.b16 %v1519, %v1500
    %v2375 = vpack.c.b16 %v1520, %v1501
    %v2376 = vpack.c.b16 %v1521, %v1502
    %v2377 = vpack.c.b16 %v1522, %v1503
    %v2378 = vpack.c.b16 %v1523, %v1504
    %v2379 = vpack.c.b16 %v1524, %v1505
    %v2380 = vpack.c.b16 %v1525, %v1506
    %v2381 = vpack.c.b16 %v1526, %v1507
    %v2382 = vpack.c.b16 %v1527, %v1508
    %v2383 = vpack.c.b16 %v1528, %v1509
    %v2384 = vpack.c.b16 %v1529, %v1510
    %v2385 = vpack.c.b16 %v1549, %v1530
    %v2386 = vpack.c.b16 %v1550, %v1531
    %v2387 = vpack.c.b16 %v1551, %v1532
    %v2388 = vpack.c.b16 %v1552, %v1533
    %v2389 = vpack.c.b16 %v1553, %v1534
    %v2390 = vpack.c.b16 %v1554, %v1535
    %v2391 = vpack.c.b16 %v1555, %v1536
    %v2392 = vpack.c.b16 %v1556, %v1537
    %v2393 = vpack.c.b16 %v1557, %v1538
    %v2394 = vpack.c.b16 %v1558, %v1539
    %v2395 = vpack.c.b16 %v1559, %v1540
    %v2396 = vpack.c.b16 %v1560, %v1541
    %v2397 = vpack.c.b16 %v1561, %v1542
    %v2398 = vpack.c.b16 %v1562, %v1543
    %v2399 = vpack.c.b16 %v1563, %v1544
    %v2400 = vpack.c.b16 %v1564, %v1545
    %v2401 = vpack.c.b16 %v1565, %v1546
    %v2402 = vpack.c.b16 %v1566, %v1547
    %v2403 = vpack.c.b16 %v1567, %v1548
    %v2404 = vpack.c.b16 %v1587, %v1568
    %v2405 = vpack.c.b16 %v1588, %v1569
    %v2406 = vpack.c.b16 %v1589, %v1570
    %v2407 = vpack.c.b16 %v1590, %v1571
    %v2408 = vpack.c.b16 %v1591, %v1572
    %v2409 = vpack.c.b16 %v1592, %v1573
    %v2410 = vpack.c.b16 %v1593, %v1574
    %v2411 = vpack.c.b16 %v1594, %v1575
    %v2412 = vpack.c.b16 %v1595, %v1576
    %v2413 = vpack.c.b16 %v1596, %v1577
    %v2414 = vpack.c.b16 %v1597, %v1578
    %v2415 = vpack.c.b16 %v1598, %v1579
    %v2416 = vpack.c.b16 %v1599, %v1580
    %v2417 = vpack.c.b16 %v1600, %v1581
    %v2418 = vpack.c.b16 %v1601, %v1582
    %v2419 = vpack.c.b16 %v1602, %v1583
    %v2420 = vpack.c.b16 %v1603, %v1584
    %v2421 = vpack.c.b16 %v1604, %v1585
    %v2422 = vpack.c.b16 %v1605, %v1586
    %v2423 = vpack.c.b16 %v1625, %v1606
    %v2424 = vpack.c.b16 %v1626, %v1607
    %v2425 = vpack.c.b16 %v1627, %v1608
    %v2426 = vpack.c.b16 %v1628, %v1609
    %v2427 = vpack.c.b16 %v1629, %v1610
    %v2428 = vpack.c.b16 %v1630, %v1611
    %v2429 = vpack.c.b16 %v1631, %v1612
    %v2430 = vpack.c.b16 %v1632, %v1613
    %v2431 = vpack.c.b16 %v1633, %v1614
    %v2432 = vpack.c.b16 %v1634, %v1615
    %v2433 = vpack.c.b16 %v1635, %v1616
    %v2434 = vpack.c.b16 %v1636, %v1617
    %v2435 = vpack.c.b16 %v1637, %v1618
    %v2436 = vpack.c.b16 %v1638, %v1619
    %v2437 = vpack.c.b16 %v1639, %v1620
    %v2438 = vpack.c.b16 %v1640, %v1621
    %v2439 = vpack.c.b16 %v1641, %v1622
    %v2440 = vpack.c.b16 %v1642, %v1623
    %v2441 = vpack.c.b16 %v1643, %v1624
    %v2442 = vpack.c.b16 %v1663, %v1644
    %v2443 = vpack.c.b16 %v1664, %v1645
    %v2444 = vpack.c.b16 %v1665, %v1646
    %v2445 = vpack.c.b16 %v1666, %v1647
    %v2446 = vpack.c.b16 %v1667, %v1648
    %v2447 = vpack.c.b16 %v1668, %v1649
    %v2448 = vpack.c.b16 %v1669, %v1650
    %v2449 = vpack.c.b16 %v1670, %v1651
    %v2450 = vpack.c.b16 %v1671, %v1652
    %v2451 = vpack.c.b16 %v1672, %v1653
    %v2452 = vpack.c.b16 %v1673, %v1654
    %v2453 = vpack.c.b16 %v1674, %v1655
    %v2454 = vpack.c.b16 %v1675, %v1656
    %v2455 = vpack.c.b16 %v1676, %v1657
    %v2456 = vpack.c.b16 %v1677, %v1658
    %v2457 = vpack.c.b16 %v1678, %v1659
    %v2458 = vpack.c.b16 %v1679, %v1660
    %v2459 = vpack.c.b16 %v1680, %v1661
    %v2460 = vpack.c.b16 %v1681, %v1662
    %v2461 = vpack.c.b16 %v1701, %v1682
    %v2462 = vpack.c.b16 %v1702, %v1683
    %v2463 = vpack.c.b16 %v1703, %v1684
    %v2464 = vpack.c.b16 %v1704, %v1685
    %v2465 = vpack.c.b16 %v1705, %v1686
    %v2466 = vpack.c.b16 %v1706, %v1687
    %v2467 = vpack.c.b16 %v1707, %v1688
    %v2468 = vpack.c.b16 %v1708, %v1689
    %v2469 = vpack.c.b16 %v1709, %v1690
    %v2470 = vpack.c.b16 %v1710, %v1691
    %v2471 = vpack.c.b16 %v1711, %v1692
    %v2472 = vpack.c.b16 %v1712, %v1693
    %v2473 = vpack.c.b16 %v1713, %v1694
    %v2474 = vpack.c.b16 %v1714, %v1695
    %v2475 = vpack.c.b16 %v1715, %v1696
    %v2476 = vpack.c.b16 %v1716, %v1697
    %v2477 = vpack.c.b16 %v1717, %v1698
    %v2478 = vpack.c.b16 %v1718, %v1699
    %v2479 = vpack.c.b16 %v1719, %v1700
    %v2480 = vpack.c.b16 %v1739, %v1720
    %v2481 = vpack.c.b16 %v1740, %v1721
    %v2482 = vpack.c.b16 %v1741, %v1722
    %v2483 = vpack.c.b16 %v1742, %v1723
    %v2484 = vpack.c.b16 %v1743, %v1724
    %v2485 = vpack.c.b16 %v1744, %v1725
    %v2486 = vpack.c.b16 %v1745, %v1726
    %v2487 = vpack.c.b16 %v1746, %v1727
    %v2488 = vpack.c.b16 %v1747, %v1728
    %v2489 = vpack.c.b16 %v1748, %v1729
    %v2490 = vpack.c.b16 %v1749, %v1730
    %v2491 = vpack.c.b16 %v1750, %v1731
    %v2492 = vpack.c.b16 %v1751, %v1732
    %v2493 = vpack.c.b16 %v1752, %v1733
    %v2494 = vpack.c.b16 %v1753, %v1734
    %v2495 = vpack.c.b16 %v1754, %v1735
    %v2496 = vpack.c.b16 %v1755, %v1736
    %v2497 = vpack.c.b16 %v1756, %v1737
    %v2498 = vpack.c.b16 %v1757, %v1738
    %v2499 = vpack.c.b16 %v1777, %v1758
    %v2500 = vpack.c.b16 %v1778, %v1759
    %v2501 = vpack.c.b16 %v1779, %v1760
    %v2502 = vpack.c.b16 %v1780, %v1761
    %v2503 = vpack.c.b16 %v1781, %v1762
    %v2504 = vpack.c.b16 %v1782, %v1763
    %v2505 = vpack.c.b16 %v1783, %v1764
    %v2506 = vpack.c.b16 %v1784, %v1765
    %v2507 = vpack.c.b16 %v1785, %v1766
    %v2508 = vpack.c.b16 %v1786, %v1767
    %v2509 = vpack.c.b16 %v1787, %v1768
    %v2510 = vpack.c.b16 %v1788, %v1769
    %v2511 = vpack.c.b16 %v1789, %v1770
    %v2512 = vpack.c.b16 %v1790, %v1771
    %v2513 = vpack.c.b16 %v1791, %v1772
    %v2514 = vpack.c.b16 %v1792, %v1773
    %v2515 = vpack.c.b16 %v1793, %v1774
    %v2516 = vpack.c.b16 %v1794, %v1775
    %v2517 = vpack.c.b16 %v1795, %v1776
    %v2518 = vpack.c.b16 %v1815, %v1796
    %v2519 = vpack.c.b16 %v1816, %v1797
    %v2520 = vpack.c.b16 %v1817, %v1798
    %v2521 = vpack.c.b16 %v1818, %v1799
    %v2522 = vpack.c.b16 %v1819, %v1800
    %v2523 = vpack.c.b16 %v1820, %v1801
    %v2524 = vpack.c.b16 %v1821, %v1802
    %v2525 = vpack.c.b16 %v1822, %v1803
    %v2526 = vpack.c.b16 %v1823, %v1804
    %v2527 = vpack.c.b16 %v1824, %v1805
    %v2528 = vpack.c.b16 %v1825, %v1806
    %v2529 = vpack.c.b16 %v1826, %v1807
    %v2530 = vpack.c.b16 %v1827, %v1808
    %v2531 = vpack.c.b16 %v1828, %v1809
    %v2532 = vpack.c.b16 %v1829, %v1810
    %v2533 = vpack.c.b16 %v1830, %v1811
    %v2534 = vpack.c.b16 %v1831, %v1812
    %v2535 = vpack.c.b16 %v1832, %v1813
    %v2536 = vpack.c.b16 %v1833, %v1814
    %v2537 = vpack.c.b16 %v1853, %v1834
    %v2538 = vpack.c.b16 %v1854, %v1835
    %v2539 = vpack.c.b16 %v1855, %v1836
    %v2540 = vpack.c.b16 %v1856, %v1837
    %v2541 = vpack.c.b16 %v1857, %v1838
    %v2542 = vpack.c.b16 %v1858, %v1839
    %v2543 = vpack.c.b16 %v1859, %v1840
    %v2544 = vpack.c.b16 %v1860, %v1841
    %v2545 = vpack.c.b16 %v1861, %v1842
    %v2546 = vpack.c.b16 %v1862, %v1843
    %v2547 = vpack.c.b16 %v1863, %v1844
    %v2548 = vpack.c.b16 %v1864, %v1845
    %v2549 = vpack.c.b16 %v1865, %v1846
    %v2550 = vpack.c.b16 %v1866, %v1847
    %v2551 = vpack.c.b16 %v1867, %v1848
    %v2552 = vpack.c.b16 %v1868, %v1849
    %v2553 = vpack.c.b16 %v1869, %v1850
    %v2554 = vpack.c.b16 %v1870, %v1851
    %v2555 = vpack.c.b16 %v1871, %v1852
    %v2556 = vpack.c.b16 %v1891, %v1872
    %v2557 = vpack.c.b16 %v1892, %v1873
    %v2558 = vpack.c.b16 %v1893, %v1874
    %v2559 = vpack.c.b16 %v1894, %v1875
    %v2560 = vpack.c.b16 %v1895, %v1876
    %v2561 = vpack.c.b16 %v1896, %v1877
    %v2562 = vpack.c.b16 %v1897, %v1878
    %v2563 = vpack.c.b16 %v1898, %v1879
    %v2564 = vpack.c.b16 %v1899, %v1880
    %v2565 = vpack.c.b16 %v1900, %v1881
    %v2566 = vpack.c.b16 %v1901, %v1882
    %v2567 = vpack.c.b16 %v1902, %v1883
    %v2568 = vpack.c.b16 %v1903, %v1884
    %v2569 = vpack.c.b16 %v1904, %v1885
    %v2570 = vpack.c.b16 %v1905, %v1886
    %v2571 = vpack.c.b16 %v1906, %v1887
    %v2572 = vpack.c.b16 %v1907, %v1888
    %v2573 = vpack.c.b16 %v1908, %v1889
    %v2574 = vpack.c.b16 %v1909, %v1890
    %v2575 = vpack.c.b16 %v1929, %v1910
    %v2576 = vpack.c.b16 %v1930, %v1911
    %v2577 = vpack.c.b16 %v1931, %v1912
    %v2578 = vpack.c.b16 %v1932, %v1913
    %v2579 = vpack.c.b16 %v1933, %v1914
    %v2580 = vpack.c.b16 %v1934, %v1915
    %v2581 = vpack.c.b16 %v1935, %v1916
    %v2582 = vpack.c.b16 %v1936, %v1917
    %v2583 = vpack.c.b16 %v1937, %v1918
    %v2584 = vpack.c.b16 %v1938, %v1919
    %v2585 = vpack.c.b16 %v1939, %v1920
    %v2586 = vpack.c.b16 %v1940, %v1921
    %v2587 = vpack.c.b16 %v1941, %v1922
    %v2588 = vpack.c.b16 %v1942, %v1923
    %v2589 = vpack.c.b16 %v1943, %v1924
    %v2590 = vpack.c.b16 %v1944, %v1925
    %v2591 = vpack.c.b16 %v1945, %v1926
    %v2592 = vpack.c.b16 %v1946, %v1927
    %v2593 = vpack.c.b16 %v1947, %v1928
    %v2594 = vpack.c.b16 %v1967, %v1948
    %v2595 = vpack.c.b16 %v1968, %v1949
    %v2596 = vpack.c.b16 %v1969, %v1950
    %v2597 = vpack.c.b16 %v1970, %v1951
    %v2598 = vpack.c.b16 %v1971, %v1952
    %v2599 = vpack.c.b16 %v1972, %v1953
    %v2600 = vpack.c.b16 %v1973, %v1954
    %v2601 = vpack.c.b16 %v1974, %v1955
    %v2602 = vpack.c.b16 %v1975, %v1956
    %v2603 = vpack.c.b16 %v1976, %v1957
    %v2604 = vpack.c.b16 %v1977, %v1958
    %v2605 = vpack.c.b16 %v1978, %v1959
    %v2606 = vpack.c.b16 %v1979, %v1960
    %v2607 = vpack.c.b16 %v1980, %v1961
    %v2608 = vpack.c.b16 %v1981, %v1962
    %v2609 = vpack.c.b16 %v1982, %v1963
    %v2610 = vpack.c.b16 %v1983, %v1964
    %v2611 = vpack.c.b16 %v1984, %v1965
    %v2612 = vpack.c.b16 %v1985, %v1966
    %v2613 = vpack.c.b16 %v2005, %v1986
    %v2614 = vpack.c.b16 %v2006, %v1987
    %v2615 = vpack.c.b16 %v2007, %v1988
    %v2616 = vpack.c.b16 %v2008, %v1989
    %v2617 = vpack.c.b16 %v2009, %v1990
    %v2618 = vpack.c.b16 %v2010, %v1991
    %v2619 = vpack.c.b16 %v2011, %v1992
    %v2620 = vpack.c.b16 %v2012, %v1993
    %v2621 = vpack.c.b16 %v2013, %v1994
    %v2622 = vpack.c.b16 %v2014, %v1995
    %v2623 = vpack.c.b16 %v2015, %v1996
    %v2624 = vpack.c.b16 %v2016, %v1997
    %v2625 = vpack.c.b16 %v2017, %v1998
    %v2626 = vpack.c.b16 %v2018, %v1999
    %v2627 = vpack.c.b16 %v2019, %v2000
    %v2628 = vpack.c.b16 %v2020, %v2001
    %v2629 = vpack.c.b16 %v2021, %v2002
    %v2630 = vpack.c.b16 %v2022, %v2003
    %v2631 = vpack.c.b16 %v2023, %v2004
    %v2632 = vpack.c.b16 %v2043, %v2024
    %v2633 = vpack.c.b16 %v2044, %v2025
    %v2634 = vpack.c.b16 %v2045, %v2026
    %v2635 = vpack.c.b16 %v2046, %v2027
    %v2636 = vpack.c.b16 %v2047, %v2028
    %v2637 = vpack.c.b16 %v2048, %v2029
    %v2638 = vpack.c.b16 %v2049, %v2030
    %v2639 = vpack.c.b16 %v2050, %v2031
    %v2640 = vpack.c.b16 %v2051, %v2032
    %v2641 = vpack.c.b16 %v2052, %v2033
    %v2642 = vpack.c.b16 %v2053, %v2034
    %v2643 = vpack.c.b16 %v2054, %v2035
    %v2644 = vpack.c.b16 %v2055, %v2036
    %v2645 = vpack.c.b16 %v2056, %v2037
    %v2646 = vpack.c.b16 %v2057, %v2038
    %v2647 = vpack.c.b16 %v2058, %v2039
    %v2648 = vpack.c.b16 %v2059, %v2040
    %v2649 = vpack.c.b16 %v2060, %v2041
    %v2650 = vpack.c.b16 %v2061, %v2042
    %v2651 = vpack.c.b16 %v2081, %v2062
    %v2652 = vpack.c.b16 %v2082, %v2063
    %v2653 = vpack.c.b16 %v2083, %v2064
    %v2654 = vpack.c.b16 %v2084, %v2065
    %v2655 = vpack.c.b16 %v2085, %v2066
    %v2656 = vpack.c.b16 %v2086, %v2067
    %v2657 = vpack.c.b16 %v2087, %v2068
    %v2658 = vpack.c.b16 %v2088, %v2069
    %v2659 = vpack.c.b16 %v2089, %v2070
    %v2660 = vpack.c.b16 %v2090, %v2071
    %v2661 = vpack.c.b16 %v2091, %v2072
    %v2662 = vpack.c.b16 %v2092, %v2073
    %v2663 = vpack.c.b16 %v2093, %v2074
    %v2664 = vpack.c.b16 %v2094, %v2075
    %v2665 = vpack.c.b16 %v2095, %v2076
    %v2666 = vpack.c.b16 %v2096, %v2077
    %v2667 = vpack.c.b16 %v2097, %v2078
    %v2668 = vpack.c.b16 %v2098, %v2079
    %v2669 = vpack.c.b16 %v2099, %v2080
    %v2670 = vpack.c.b16 %v2119, %v2100
    %v2671 = vpack.c.b16 %v2120, %v2101
    %v2672 = vpack.c.b16 %v2121, %v2102
    %v2673 = vpack.c.b16 %v2122, %v2103
    %v2674 = vpack.c.b16 %v2123, %v2104
    %v2675 = vpack.c.b16 %v2124, %v2105
    %v2676 = vpack.c.b16 %v2125, %v2106
    %v2677 = vpack.c.b16 %v2126, %v2107
    %v2678 = vpack.c.b16 %v2127, %v2108
    %v2679 = vpack.c.b16 %v2128, %v2109
    %v2680 = vpack.c.b16 %v2129, %v2110
    %v2681 = vpack.c.b16 %v2130, %v2111
    %v2682 = vpack.c.b16 %v2131, %v2112
    %v2683 = vpack.c.b16 %v2132, %v2113
    %v2684 = vpack.c.b16 %v2133, %v2114
    %v2685 = vpack.c.b16 %v2134, %v2115
    %v2686 = vpack.c.b16 %v2135, %v2116
    %v2687 = vpack.c.b16 %v2136, %v2117
    %v2688 = vpack.c.b16 %v2137, %v2118
    %v2689 = vpack.c.b16 %v2157, %v2138
    %v2690 = vpack.c.b16 %v2158, %v2139
    %v2691 = vpack.c.b16 %v2159, %v2140
    %v2692 = vpack.c.b16 %v2160, %v2141
    %v2693 = vpack.c.b16 %v2161, %v2142
    %v2694 = vpack.c.b16 %v2162, %v2143
    %v2695 = vpack.c.b16 %v2163, %v2144
    %v2696 = vpack.c.b16 %v2164, %v2145
    %v2697 = vpack.c.b16 %v2165, %v2146
    %v2698 = vpack.c.b16 %v2166, %v2147
    %v2699 = vpack.c.b16 %v2167, %v2148
    %v2700 = vpack.c.b16 %v2168, %v2149
    %v2701 = vpack.c.b16 %v2169, %v2150
    %v2702 = vpack.c.b16 %v2170, %v2151
    %v2703 = vpack.c.b16 %v2171, %v2152
    %v2704 = vpack.c.b16 %v2172, %v2153
    %v2705 = vpack.c.b16 %v2173, %v2154
    %v2706 = vpack.c.b16 %v2174, %v2155
    %v2707 = vpack.c.b16 %v2175, %v2156
    %v2708 = vpack.c.b16 %v2195, %v2176
    %v2709 = vpack.c.b16 %v2196, %v2177
    %v2710 = vpack.c.b16 %v2197, %v2178
    %v2711 = vpack.c.b16 %v2198, %v2179
    %v2712 = vpack.c.b16 %v2199, %v2180
    %v2713 = vpack.c.b16 %v2200, %v2181
    %v2714 = vpack.c.b16 %v2201, %v2182
    %v2715 = vpack.c.b16 %v2202, %v2183
    %v2716 = vpack.c.b16 %v2203, %v2184
    %v2717 = vpack.c.b16 %v2204, %v2185
    %v2718 = vpack.c.b16 %v2205, %v2186
    %v2719 = vpack.c.b16 %v2206, %v2187
    %v2720 = vpack.c.b16 %v2207, %v2188
    %v2721 = vpack.c.b16 %v2208, %v2189
    %v2722 = vpack.c.b16 %v2209, %v2190
    %v2723 = vpack.c.b16 %v2210, %v2191
    %v2724 = vpack.c.b16 %v2211, %v2192
    %v2725 = vpack.c.b16 %v2212, %v2193
    %v2726 = vpack.c.b16 %v2213, %v2194
    %v2727 = vpack.c.b16 %v2233, %v2214
    %v2728 = vpack.c.b16 %v2234, %v2215
    %v2729 = vpack.c.b16 %v2235, %v2216
    %v2730 = vpack.c.b16 %v2236, %v2217
    %v2731 = vpack.c.b16 %v2237, %v2218
    %v2732 = vpack.c.b16 %v2238, %v2219
    %v2733 = vpack.c.b16 %v2239, %v2220
    %v2734 = vpack.c.b16 %v2240, %v2221
    %v2735 = vpack.c.b16 %v2241, %v2222
    %v2736 = vpack.c.b16 %v2242, %v2223
    %v2737 = vpack.c.b16 %v2243, %v2224
    %v2738 = vpack.c.b16 %v2244, %v2225
    %v2739 = vpack.c.b16 %v2245, %v2226
    %v2740 = vpack.c.b16 %v2246, %v2227
    %v2741 = vpack.c.b16 %v2247, %v2228
    %v2742 = vpack.c.b16 %v2248, %v2229
    %v2743 = vpack.c.b16 %v2249, %v2230
    %v2744 = vpack.c.b16 %v2250, %v2231
    %v2745 = vpack.c.b16 %v2251, %v2232
    %v2746 = vpack.c.b16 %v2271, %v2252
    %v2747 = vpack.c.b16 %v2272, %v2253
    %v2748 = vpack.c.b16 %v2273, %v2254
    %v2749 = vpack.c.b16 %v2274, %v2255
    %v2750 = vpack.c.b16 %v2275, %v2256
    %v2751 = vpack.c.b16 %v2276, %v2257
    %v2752 = vpack.c.b16 %v2277, %v2258
    %v2753 = vpack.c.b16 %v2278, %v2259
    %v2754 = vpack.c.b16 %v2279, %v2260
    %v2755 = vpack.c.b16 %v2280, %v2261
    %v2756 = vpack.c.b16 %v2281, %v2262
    %v2757 = vpack.c.b16 %v2282, %v2263
    %v2758 = vpack.c.b16 %v2283, %v2264
    %v2759 = vpack.c.b16 %v2284, %v2265
    %v2760 = vpack.c.b16 %v2285, %v2266
    %v2761 = vpack.c.b16 %v2286, %v2267
    %v2762 = vpack.c.b16 %v2287, %v2268
    %v2763 = vpack.c.b16 %v2288, %v2269
    %v2764 = vpack.c.b16 %v2289, %v2270
    %v2765 = vpack.c.b16 %v2309, %v2290
    %v2766 = vpack.c.b16 %v2310, %v2291
    %v2767 = vpack.c.b16 %v2311, %v2292
    %v2768 = vpack.c.b16 %v2312, %v2293
    %v2769 = vpack.c.b16 %v2313, %v2294
    %v2770 = vpack.c.b16 %v2314, %v2295
    %v2771 = vpack.c.b16 %v2315, %v2296
    %v2772 = vpack.c.b16 %v2316, %v2297
    %v2773 = vpack.c.b16 %v2317, %v2298
    %v2774 = vpack.c.b16 %v2318, %v2299
    %v2775 = vpack.c.b16 %v2319, %v2300
    %v2776 = vpack.c.b16 %v2320, %v2301
    %v2777 = vpack.c.b16 %v2321, %v2302
    %v2778 = vpack.c.b16 %v2322, %v2303
    %v2779 = vpack.c.b16 %v2323, %v2304
    %v2780 = vpack.c.b16 %v2324, %v2305
    %v2781 = vpack.c.b16 %v2325, %v2306
    %v2782 = vpack.c.b16 %v2326, %v2307
    %v2783 = vpack.c.b16 %v2327, %v2308
    %3240 = vmatprep.subr.bf16.mxu0 %v2329
    %3241 = vmatpush1.bf16.msra.mxu0 %v2328
    %3242 = vmatprep.subr.bf16.mxu0 %v2348
    %3243 = vmatpush1.bf16.msra.mxu0 %v2347
    %3244 = vmatprep.subr.bf16.mxu0 %v2367
    %3245 = vmatpush1.bf16.msra.mxu0 %v2366
    %3246 = vmatprep.subr.bf16.mxu0 %v2386
    %3247 = vmatpush1.bf16.msra.mxu0 %v2385
    %3248 = vmatprep.subr.bf16.mxu0 %v2405
    %3249 = vmatpush1.bf16.msra.mxu0 %v2404
    %3250 = vmatprep.subr.bf16.mxu0 %v2424
    %3251 = vmatpush1.bf16.msra.mxu0 %v2423
    %3252 = vmatprep.subr.bf16.mxu0 %v2443
    %3253 = vmatpush1.bf16.msra.mxu0 %v2442
    %3254 = vmatprep.subr.bf16.mxu0 %v2462
    %3255 = vmatpush1.bf16.msra.mxu0 %v2461
    %3256 = vmatprep.subr.bf16.mxu0 %v2481
    %3257 = vmatpush1.bf16.msra.mxu0 %v2480
    %3258 = vmatprep.subr.bf16.mxu0 %v2500
    %3259 = vmatpush1.bf16.msra.mxu0 %v2499
    %3260 = vmatprep.subr.bf16.mxu0 %v2519
    %3261 = vmatpush1.bf16.msra.mxu0 %v2518
    %3262 = vmatprep.subr.bf16.mxu0 %v2538
    %3263 = vmatpush1.bf16.msra.mxu0 %v2537
    %3264 = vmatprep.subr.bf16.mxu0 %v2557
    %3265 = vmatpush1.bf16.msra.mxu0 %v2556
    %3266 = vmatprep.subr.bf16.mxu0 %v2576
    %3267 = vmatpush1.bf16.msra.mxu0 %v2575
    %3268 = vmatprep.subr.bf16.mxu0 %v2595
    %3269 = vmatpush1.bf16.msra.mxu0 %v2594
    %3270 = vmatprep.subr.bf16.mxu0 %v2614
    %3271 = vmatpush1.bf16.msra.mxu0 %v2613
    %3272 = vmatprep.mubr.bf16.mxu0 %v353
    %3273 = vmatmul.mubr.bf16.gmra.mrb[0].mxu0 %v352
    %v3274 = vpop.f32.mrb[0].mxu0
    %v3275 = vadd.f32 %v844, %v3274
    %v3276 = vpop.f32.mrb[0].mxu0
    %v3277 = vadd.f32 %v848, %v3276
    %v3278 = vpop.f32.mrb[0].mxu0
    %v3279 = vpop.f32.mrb[0].mxu0
    %3280 = vdwg.mxu0
    %3281 = vmatprep.subr.bf16.mxu0 %v2633
    %3282 = vmatpush1.bf16.msra.mxu0 %v2632
    %3283 = vmatprep.subr.bf16.mxu0 %v2652
    %3284 = vmatpush1.bf16.msra.mxu0 %v2651
    %3285 = vmatprep.subr.bf16.mxu0 %v2671
    %3286 = vmatpush1.bf16.msra.mxu0 %v2670
    %3287 = vmatprep.subr.bf16.mxu0 %v2690
    %3288 = vmatpush1.bf16.msra.mxu0 %v2689
    %3289 = vmatprep.subr.bf16.mxu0 %v2709
    %3290 = vmatpush1.bf16.msra.mxu0 %v2708
    %3291 = vmatprep.subr.bf16.mxu0 %v2728
    %3292 = vmatpush1.bf16.msra.mxu0 %v2727
    %3293 = vmatprep.subr.bf16.mxu0 %v2747
    %3294 = vmatpush1.bf16.msra.mxu0 %v2746
    %3295 = vmatprep.subr.bf16.mxu0 %v2766
    %3296 = vmatpush1.bf16.msra.mxu0 %v2765
    %3297 = vmatprep.subr.bf16.mxu0 0
    %3298 = vmatpush1.bf16.msra.mxu0 0
    %3299 = vmatprep.subr.bf16.mxu0 0
    %3300 = vmatpush1.bf16.msra.mxu0 0
    %3301 = vmatprep.subr.bf16.mxu0 0
    %3302 = vmatpush1.bf16.msra.mxu0 0
    %3303 = vmatprep.subr.bf16.mxu0 0
    %3304 = vmatpush1.bf16.msra.mxu0 0
    %3305 = vmatprep.subr.bf16.mxu0 0
    %3306 = vmatpush1.bf16.msra.mxu0 0
    %3307 = vmatprep.subr.bf16.mxu0 0
    %3308 = vmatpush1.bf16.msra.mxu0 0
    %3309 = vmatprep.subr.bf16.mxu0 0
    %3310 = vmatpush1.bf16.msra.mxu0 0
    %3311 = vmatprep.subr.bf16.mxu0 0
    %3312 = vmatpush1.bf16.msra.mxu0 0
    %3313 = vmatprep.mubr.bf16.mxu0 0
    %3314 = vmatmul.mubr.bf16.gmra.mrb[0].mxu0 %v354
    %v3315 = vpop.f32.mrb[0].mxu0
    %v3316 = vadd.f32 %v3275, %v3315
    %v3317 = vpop.f32.mrb[0].mxu0
    %v3318 = vadd.f32 %v3277, %v3317
    %v3319 = vpop.f32.mrb[0].mxu0
    %v3320 = vpop.f32.mrb[0].mxu0
    %3321 = vdwg.mxu0
    %3322 = vmatprep.subr.bf16.mxu0 %v2331
    %3323 = vmatpush1.bf16.msra.mxu0 %v2330
    %3324 = vmatprep.subr.bf16.mxu0 %v2350
    %3325 = vmatpush1.bf16.msra.mxu0 %v2349
    %3326 = vmatprep.subr.bf16.mxu0 %v2369
    %3327 = vmatpush1.bf16.msra.mxu0 %v2368
    %3328 = vmatprep.subr.bf16.mxu0 %v2388
    %3329 = vmatpush1.bf16.msra.mxu0 %v2387
    %3330 = vmatprep.subr.bf16.mxu0 %v2407
    %3331 = vmatpush1.bf16.msra.mxu0 %v2406
    %3332 = vmatprep.subr.bf16.mxu0 %v2426
    %3333 = vmatpush1.bf16.msra.mxu0 %v2425
    %3334 = vmatprep.subr.bf16.mxu0 %v2445
    %3335 = vmatpush1.bf16.msra.mxu0 %v2444
    %3336 = vmatprep.subr.bf16.mxu0 %v2464
    %3337 = vmatpush1.bf16.msra.mxu0 %v2463
    %3338 = vmatprep.subr.bf16.mxu0 %v2483
    %3339 = vmatpush1.bf16.msra.mxu0 %v2482
    %3340 = vmatprep.subr.bf16.mxu0 %v2502
    %3341 = vmatpush1.bf16.msra.mxu0 %v2501
    %3342 = vmatprep.subr.bf16.mxu0 %v2521
    %3343 = vmatpush1.bf16.msra.mxu0 %v2520
    %3344 = vmatprep.subr.bf16.mxu0 %v2540
    %3345 = vmatpush1.bf16.msra.mxu0 %v2539
    %3346 = vmatprep.subr.bf16.mxu0 %v2559
    %3347 = vmatpush1.bf16.msra.mxu0 %v2558
    %3348 = vmatprep.subr.bf16.mxu0 %v2578
    %3349 = vmatpush1.bf16.msra.mxu0 %v2577
    %3350 = vmatprep.subr.bf16.mxu0 %v2597
    %3351 = vmatpush1.bf16.msra.mxu0 %v2596
    %3352 = vmatprep.subr.bf16.mxu0 %v2616
    %3353 = vmatpush1.bf16.msra.mxu0 %v2615
    %3354 = vmatprep.mubr.bf16.mxu0 %v353
    %3355 = vmatmul.mubr.bf16.gmra.mrb[0].mxu0 %v352
    %v3356 = vpop.f32.mrb[0].mxu0
    %v3357 = vadd.f32 %v852, %v3356
    %v3358 = vpop.f32.mrb[0].mxu0
    %v3359 = vadd.f32 %v856, %v3358
    %v3360 = vpop.f32.mrb[0].mxu0
    %v3361 = vpop.f32.mrb[0].mxu0
    %3362 = vdwg.mxu0
    %3363 = vmatprep.subr.bf16.mxu0 %v2635
    %3364 = vmatpush1.bf16.msra.mxu0 %v2634
    %3365 = vmatprep.subr.bf16.mxu0 %v2654
    %3366 = vmatpush1.bf16.msra.mxu0 %v2653
    %3367 = vmatprep.subr.bf16.mxu0 %v2673
    %3368 = vmatpush1.bf16.msra.mxu0 %v2672
    %3369 = vmatprep.subr.bf16.mxu0 %v2692
    %3370 = vmatpush1.bf16.msra.mxu0 %v2691
    %3371 = vmatprep.subr.bf16.mxu0 %v2711
    %3372 = vmatpush1.bf16.msra.mxu0 %v2710
    %3373 = vmatprep.subr.bf16.mxu0 %v2730
    %3374 = vmatpush1.bf16.msra.mxu0 %v2729
    %3375 = vmatprep.subr.bf16.mxu0 %v2749
    %3376 = vmatpush1.bf16.msra.mxu0 %v2748
    %3377 = vmatprep.subr.bf16.mxu0 %v2768
    %3378 = vmatpush1.bf16.msra.mxu0 %v2767
    %3379 = vmatprep.subr.bf16.mxu0 0
    %3380 = vmatpush1.bf16.msra.mxu0 0
    %3381 = vmatprep.subr.bf16.mxu0 0
    %3382 = vmatpush1.bf16.msra.mxu0 0
    %3383 = vmatprep.subr.bf16.mxu0 0
    %3384 = vmatpush1.bf16.msra.mxu0 0
    %3385 = vmatprep.subr.bf16.mxu0 0
    %3386 = vmatpush1.bf16.msra.mxu0 0
    %3387 = vmatprep.subr.bf16.mxu0 0
    %3388 = vmatpush1.bf16.msra.mxu0 0
    %3389 = vmatprep.subr.bf16.mxu0 0
    %3390 = vmatpush1.bf16.msra.mxu0 0
    %3391 = vmatprep.subr.bf16.mxu0 0
    %3392 = vmatpush1.bf16.msra.mxu0 0
    %3393 = vmatprep.subr.bf16.mxu0 0
    %3394 = vmatpush1.bf16.msra.mxu0 0
    %3395 = vmatprep.mubr.bf16.mxu0 0
    %3396 = vmatmul.mubr.bf16.gmra.mrb[0].mxu0 %v354
    %v3397 = vpop.f32.mrb[0].mxu0
    %v3398 = vadd.f32 %v3357, %v3397
    %v3399 = vpop.f32.mrb[0].mxu0
    %v3400 = vadd.f32 %v3359, %v3399
    %v3401 = vpop.f32.mrb[0].mxu0
    %v3402 = vpop.f32.mrb[0].mxu0
    %3403 = vdwg.mxu0
    %3404 = vmatprep.subr.bf16.mxu0 %v2333
    %3405 = vmatpush1.bf16.msra.mxu0 %v2332
    %3406 = vmatprep.subr.bf16.mxu0 %v2352
    %3407 = vmatpush1.bf16.msra.mxu0 %v2351
    %3408 = vmatprep.subr.bf16.mxu0 %v2371
    %3409 = vmatpush1.bf16.msra.mxu0 %v2370
    %3410 = vmatprep.subr.bf16.mxu0 %v2390
    %3411 = vmatpush1.bf16.msra.mxu0 %v2389
    %3412 = vmatprep.subr.bf16.mxu0 %v2409
    %3413 = vmatpush1.bf16.msra.mxu0 %v2408
    %3414 = vmatprep.subr.bf16.mxu0 %v2428
    %3415 = vmatpush1.bf16.msra.mxu0 %v2427
    %3416 = vmatprep.subr.bf16.mxu0 %v2447
    %3417 = vmatpush1.bf16.msra.mxu0 %v2446
    %3418 = vmatprep.subr.bf16.mxu0 %v2466
    %3419 = vmatpush1.bf16.msra.mxu0 %v2465
    %3420 = vmatprep.subr.bf16.mxu0 %v2485
    %3421 = vmatpush1.bf16.msra.mxu0 %v2484
    %3422 = vmatprep.subr.bf16.mxu0 %v2504
    %3423 = vmatpush1.bf16.msra.mxu0 %v2503
    %3424 = vmatprep.subr.bf16.mxu0 %v2523
    %3425 = vmatpush1.bf16.msra.mxu0 %v2522
    %3426 = vmatprep.subr.bf16.mxu0 %v2542
    %3427 = vmatpush1.bf16.msra.mxu0 %v2541
    %3428 = vmatprep.subr.bf16.mxu0 %v2561
    %3429 = vmatpush1.bf16.msra.mxu0 %v2560
    %3430 = vmatprep.subr.bf16.mxu0 %v2580
    %3431 = vmatpush1.bf16.msra.mxu0 %v2579
    %3432 = vmatprep.subr.bf16.mxu0 %v2599
    %3433 = vmatpush1.bf16.msra.mxu0 %v2598
    %3434 = vmatprep.subr.bf16.mxu0 %v2618
    %3435 = vmatpush1.bf16.msra.mxu0 %v2617
    %3436 = vmatprep.mubr.bf16.mxu0 %v353
    %3437 = vmatmul.mubr.bf16.gmra.mrb[0].mxu0 %v352
    %v3438 = vpop.f32.mrb[0].mxu0
    %v3439 = vadd.f32 %v860, %v3438
    %v3440 = vpop.f32.mrb[0].mxu0
    %v3441 = vadd.f32 %v864, %v3440
    %v3442 = vpop.f32.mrb[0].mxu0
    %v3443 = vpop.f32.mrb[0].mxu0
    %3444 = vdwg.mxu0
    %3445 = vmatprep.subr.bf16.mxu0 %v2637
    %3446 = vmatpush1.bf16.msra.mxu0 %v2636
    %3447 = vmatprep.subr.bf16.mxu0 %v2656
    %3448 = vmatpush1.bf16.msra.mxu0 %v2655
    %3449 = vmatprep.subr.bf16.mxu0 %v2675
    %3450 = vmatpush1.bf16.msra.mxu0 %v2674
    %3451 = vmatprep.subr.bf16.mxu0 %v2694
    %3452 = vmatpush1.bf16.msra.mxu0 %v2693
    %3453 = vmatprep.subr.bf16.mxu0 %v2713
    %3454 = vmatpush1.bf16.msra.mxu0 %v2712
    %3455 = vmatprep.subr.bf16.mxu0 %v2732
    %3456 = vmatpush1.bf16.msra.mxu0 %v2731
    %3457 = vmatprep.subr.bf16.mxu0 %v2751
    %3458 = vmatpush1.bf16.msra.mxu0 %v2750
    %3459 = vmatprep.subr.bf16.mxu0 %v2770
    %3460 = vmatpush1.bf16.msra.mxu0 %v2769
    %3461 = vmatprep.subr.bf16.mxu0 0
    %3462 = vmatpush1.bf16.msra.mxu0 0
    %3463 = vmatprep.subr.bf16.mxu0 0
    %3464 = vmatpush1.bf16.msra.mxu0 0
    %3465 = vmatprep.subr.bf16.mxu0 0
    %3466 = vmatpush1.bf16.msra.mxu0 0
    %3467 = vmatprep.subr.bf16.mxu0 0
    %3468 = vmatpush1.bf16.msra.mxu0 0
    %3469 = vmatprep.subr.bf16.mxu0 0
    %3470 = vmatpush1.bf16.msra.mxu0 0
    %3471 = vmatprep.subr.bf16.mxu0 0
    %3472 = vmatpush1.bf16.msra.mxu0 0
    %3473 = vmatprep.subr.bf16.mxu0 0
    %3474 = vmatpush1.bf16.msra.mxu0 0
    %3475 = vmatprep.subr.bf16.mxu0 0
    %3476 = vmatpush1.bf16.msra.mxu0 0
    %3477 = vmatprep.mubr.bf16.mxu0 0
    %3478 = vmatmul.mubr.bf16.gmra.mrb[0].mxu0 %v354
    %v3479 = vpop.f32.mrb[0].mxu0
    %v3480 = vadd.f32 %v3439, %v3479
    %v3481 = vpop.f32.mrb[0].mxu0
    %v3482 = vadd.f32 %v3441, %v3481
    %v3483 = vpop.f32.mrb[0].mxu0
    %v3484 = vpop.f32.mrb[0].mxu0
    %3485 = vdwg.mxu0
    %3486 = vmatprep.subr.bf16.mxu0 %v2335
    %3487 = vmatpush1.bf16.msra.mxu0 %v2334
    %3488 = vmatprep.subr.bf16.mxu0 %v2354
    %3489 = vmatpush1.bf16.msra.mxu0 %v2353
    %3490 = vmatprep.subr.bf16.mxu0 %v2373
    %3491 = vmatpush1.bf16.msra.mxu0 %v2372
    %3492 = vmatprep.subr.bf16.mxu0 %v2392
    %3493 = vmatpush1.bf16.msra.mxu0 %v2391
    %3494 = vmatprep.subr.bf16.mxu0 %v2411
    %3495 = vmatpush1.bf16.msra.mxu0 %v2410
    %3496 = vmatprep.subr.bf16.mxu0 %v2430
    %3497 = vmatpush1.bf16.msra.mxu0 %v2429
    %3498 = vmatprep.subr.bf16.mxu0 %v2449
    %3499 = vmatpush1.bf16.msra.mxu0 %v2448
    %3500 = vmatprep.subr.bf16.mxu0 %v2468
    %3501 = vmatpush1.bf16.msra.mxu0 %v2467
    %3502 = vmatprep.subr.bf16.mxu0 %v2487
    %3503 = vmatpush1.bf16.msra.mxu0 %v2486
    %3504 = vmatprep.subr.bf16.mxu0 %v2506
    %3505 = vmatpush1.bf16.msra.mxu0 %v2505
    %3506 = vmatprep.subr.bf16.mxu0 %v2525
    %3507 = vmatpush1.bf16.msra.mxu0 %v2524
    %3508 = vmatprep.subr.bf16.mxu0 %v2544
    %3509 = vmatpush1.bf16.msra.mxu0 %v2543
    %3510 = vmatprep.subr.bf16.mxu0 %v2563
    %3511 = vmatpush1.bf16.msra.mxu0 %v2562
    %3512 = vmatprep.subr.bf16.mxu0 %v2582
    %3513 = vmatpush1.bf16.msra.mxu0 %v2581
    %3514 = vmatprep.subr.bf16.mxu0 %v2601
    %3515 = vmatpush1.bf16.msra.mxu0 %v2600
    %3516 = vmatprep.subr.bf16.mxu0 %v2620
    %3517 = vmatpush1.bf16.msra.mxu0 %v2619
    %3518 = vmatprep.mubr.bf16.mxu0 %v353
    %3519 = vmatmul.mubr.bf16.gmra.mrb[0].mxu0 %v352
    %v3520 = vpop.f32.mrb[0].mxu0
    %v3521 = vadd.f32 %v868, %v3520
    %v3522 = vpop.f32.mrb[0].mxu0
    %v3523 = vadd.f32 %v872, %v3522
    %v3524 = vpop.f32.mrb[0].mxu0
    %v3525 = vpop.f32.mrb[0].mxu0
    %3526 = vdwg.mxu0
    %3527 = vmatprep.subr.bf16.mxu0 %v2639
    %3528 = vmatpush1.bf16.msra.mxu0 %v2638
    %3529 = vmatprep.subr.bf16.mxu0 %v2658
    %3530 = vmatpush1.bf16.msra.mxu0 %v2657
    %3531 = vmatprep.subr.bf16.mxu0 %v2677
    %3532 = vmatpush1.bf16.msra.mxu0 %v2676
    %3533 = vmatprep.subr.bf16.mxu0 %v2696
    %3534 = vmatpush1.bf16.msra.mxu0 %v2695
    %3535 = vmatprep.subr.bf16.mxu0 %v2715
    %3536 = vmatpush1.bf16.msra.mxu0 %v2714
    %3537 = vmatprep.subr.bf16.mxu0 %v2734
    %3538 = vmatpush1.bf16.msra.mxu0 %v2733
    %3539 = vmatprep.subr.bf16.mxu0 %v2753
    %3540 = vmatpush1.bf16.msra.mxu0 %v2752
    %3541 = vmatprep.subr.bf16.mxu0 %v2772
    %3542 = vmatpush1.bf16.msra.mxu0 %v2771
    %3543 = vmatprep.subr.bf16.mxu0 0
    %3544 = vmatpush1.bf16.msra.mxu0 0
    %3545 = vmatprep.subr.bf16.mxu0 0
    %3546 = vmatpush1.bf16.msra.mxu0 0
    %3547 = vmatprep.subr.bf16.mxu0 0
    %3548 = vmatpush1.bf16.msra.mxu0 0
    %3549 = vmatprep.subr.bf16.mxu0 0
    %3550 = vmatpush1.bf16.msra.mxu0 0
    %3551 = vmatprep.subr.bf16.mxu0 0
    %3552 = vmatpush1.bf16.msra.mxu0 0
    %3553 = vmatprep.subr.bf16.mxu0 0
    %3554 = vmatpush1.bf16.msra.mxu0 0
    %3555 = vmatprep.subr.bf16.mxu0 0
    %3556 = vmatpush1.bf16.msra.mxu0 0
    %3557 = vmatprep.subr.bf16.mxu0 0
    %3558 = vmatpush1.bf16.msra.mxu0 0
    %3559 = vmatprep.mubr.bf16.mxu0 0
    %3560 = vmatmul.mubr.bf16.gmra.mrb[0].mxu0 %v354
    %v3561 = vpop.f32.mrb[0].mxu0
    %v3562 = vadd.f32 %v3521, %v3561
    %v3563 = vpop.f32.mrb[0].mxu0
    %v3564 = vadd.f32 %v3523, %v3563
    %v3565 = vpop.f32.mrb[0].mxu0
    %v3566 = vpop.f32.mrb[0].mxu0
    %3567 = vdwg.mxu0
    %3568 = vmatprep.subr.bf16.mxu0 %v2337
    %3569 = vmatpush1.bf16.msra.mxu0 %v2336
    %3570 = vmatprep.subr.bf16.mxu0 %v2356
    %3571 = vmatpush1.bf16.msra.mxu0 %v2355
    %3572 = vmatprep.subr.bf16.mxu0 %v2375
    %3573 = vmatpush1.bf16.msra.mxu0 %v2374
    %3574 = vmatprep.subr.bf16.mxu0 %v2394
    %3575 = vmatpush1.bf16.msra.mxu0 %v2393
    %3576 = vmatprep.subr.bf16.mxu0 %v2413
    %3577 = vmatpush1.bf16.msra.mxu0 %v2412
    %3578 = vmatprep.subr.bf16.mxu0 %v2432
    %3579 = vmatpush1.bf16.msra.mxu0 %v2431
    %3580 = vmatprep.subr.bf16.mxu0 %v2451
    %3581 = vmatpush1.bf16.msra.mxu0 %v2450
    %3582 = vmatprep.subr.bf16.mxu0 %v2470
    %3583 = vmatpush1.bf16.msra.mxu0 %v2469
    %3584 = vmatprep.subr.bf16.mxu0 %v2489
    %3585 = vmatpush1.bf16.msra.mxu0 %v2488
    %3586 = vmatprep.subr.bf16.mxu0 %v2508
    %3587 = vmatpush1.bf16.msra.mxu0 %v2507
    %3588 = vmatprep.subr.bf16.mxu0 %v2527
    %3589 = vmatpush1.bf16.msra.mxu0 %v2526
    %3590 = vmatprep.subr.bf16.mxu0 %v2546
    %3591 = vmatpush1.bf16.msra.mxu0 %v2545
    %3592 = vmatprep.subr.bf16.mxu0 %v2565
    %3593 = vmatpush1.bf16.msra.mxu0 %v2564
    %3594 = vmatprep.subr.bf16.mxu0 %v2584
    %3595 = vmatpush1.bf16.msra.mxu0 %v2583
    %3596 = vmatprep.subr.bf16.mxu0 %v2603
    %3597 = vmatpush1.bf16.msra.mxu0 %v2602
    %3598 = vmatprep.subr.bf16.mxu0 %v2622
    %3599 = vmatpush1.bf16.msra.mxu0 %v2621
    %3600 = vmatprep.mubr.bf16.mxu0 %v353
    %3601 = vmatmul.mubr.bf16.gmra.mrb[0].mxu0 %v352
    %v3602 = vpop.f32.mrb[0].mxu0
    %v3603 = vadd.f32 %v876, %v3602
    %v3604 = vpop.f32.mrb[0].mxu0
    %v3605 = vadd.f32 %v880, %v3604
    %v3606 = vpop.f32.mrb[0].mxu0
    %v3607 = vpop.f32.mrb[0].mxu0
    %3608 = vdwg.mxu0
    %3609 = vmatprep.subr.bf16.mxu0 %v2641
    %3610 = vmatpush1.bf16.msra.mxu0 %v2640
    %3611 = vmatprep.subr.bf16.mxu0 %v2660
    %3612 = vmatpush1.bf16.msra.mxu0 %v2659
    %3613 = vmatprep.subr.bf16.mxu0 %v2679
    %3614 = vmatpush1.bf16.msra.mxu0 %v2678
    %3615 = vmatprep.subr.bf16.mxu0 %v2698
    %3616 = vmatpush1.bf16.msra.mxu0 %v2697
    %3617 = vmatprep.subr.bf16.mxu0 %v2717
    %3618 = vmatpush1.bf16.msra.mxu0 %v2716
    %3619 = vmatprep.subr.bf16.mxu0 %v2736
    %3620 = vmatpush1.bf16.msra.mxu0 %v2735
    %3621 = vmatprep.subr.bf16.mxu0 %v2755
    %3622 = vmatpush1.bf16.msra.mxu0 %v2754
    %3623 = vmatprep.subr.bf16.mxu0 %v2774
    %3624 = vmatpush1.bf16.msra.mxu0 %v2773
    %3625 = vmatprep.subr.bf16.mxu0 0
    %3626 = vmatpush1.bf16.msra.mxu0 0
    %3627 = vmatprep.subr.bf16.mxu0 0
    %3628 = vmatpush1.bf16.msra.mxu0 0
    %3629 = vmatprep.subr.bf16.mxu0 0
    %3630 = vmatpush1.bf16.msra.mxu0 0
    %3631 = vmatprep.subr.bf16.mxu0 0
    %3632 = vmatpush1.bf16.msra.mxu0 0
    %3633 = vmatprep.subr.bf16.mxu0 0
    %3634 = vmatpush1.bf16.msra.mxu0 0
    %3635 = vmatprep.subr.bf16.mxu0 0
    %3636 = vmatpush1.bf16.msra.mxu0 0
    %3637 = vmatprep.subr.bf16.mxu0 0
    %3638 = vmatpush1.bf16.msra.mxu0 0
    %3639 = vmatprep.subr.bf16.mxu0 0
    %3640 = vmatpush1.bf16.msra.mxu0 0
    %3641 = vmatprep.mubr.bf16.mxu0 0
    %3642 = vmatmul.mubr.bf16.gmra.mrb[0].mxu0 %v354
    %v3643 = vpop.f32.mrb[0].mxu0
    %v3644 = vadd.f32 %v3603, %v3643
    %v3645 = vpop.f32.mrb[0].mxu0
    %v3646 = vadd.f32 %v3605, %v3645
    %v3647 = vpop.f32.mrb[0].mxu0
    %v3648 = vpop.f32.mrb[0].mxu0
    %3649 = vdwg.mxu0
    %3650 = vmatprep.subr.bf16.mxu0 %v2339
    %3651 = vmatpush1.bf16.msra.mxu0 %v2338
    %3652 = vmatprep.subr.bf16.mxu0 %v2358
    %3653 = vmatpush1.bf16.msra.mxu0 %v2357
    %3654 = vmatprep.subr.bf16.mxu0 %v2377
    %3655 = vmatpush1.bf16.msra.mxu0 %v2376
    %3656 = vmatprep.subr.bf16.mxu0 %v2396
    %3657 = vmatpush1.bf16.msra.mxu0 %v2395
    %3658 = vmatprep.subr.bf16.mxu0 %v2415
    %3659 = vmatpush1.bf16.msra.mxu0 %v2414
    %3660 = vmatprep.subr.bf16.mxu0 %v2434
    %3661 = vmatpush1.bf16.msra.mxu0 %v2433
    %3662 = vmatprep.subr.bf16.mxu0 %v2453
    %3663 = vmatpush1.bf16.msra.mxu0 %v2452
    %3664 = vmatprep.subr.bf16.mxu0 %v2472
    %3665 = vmatpush1.bf16.msra.mxu0 %v2471
    %3666 = vmatprep.subr.bf16.mxu0 %v2491
    %3667 = vmatpush1.bf16.msra.mxu0 %v2490
    %3668 = vmatprep.subr.bf16.mxu0 %v2510
    %3669 = vmatpush1.bf16.msra.mxu0 %v2509
    %3670 = vmatprep.subr.bf16.mxu0 %v2529
    %3671 = vmatpush1.bf16.msra.mxu0 %v2528
    %3672 = vmatprep.subr.bf16.mxu0 %v2548
    %3673 = vmatpush1.bf16.msra.mxu0 %v2547
    %3674 = vmatprep.subr.bf16.mxu0 %v2567
    %3675 = vmatpush1.bf16.msra.mxu0 %v2566
    %3676 = vmatprep.subr.bf16.mxu0 %v2586
    %3677 = vmatpush1.bf16.msra.mxu0 %v2585
    %3678 = vmatprep.subr.bf16.mxu0 %v2605
    %3679 = vmatpush1.bf16.msra.mxu0 %v2604
    %3680 = vmatprep.subr.bf16.mxu0 %v2624
    %3681 = vmatpush1.bf16.msra.mxu0 %v2623
    %3682 = vmatprep.mubr.bf16.mxu0 %v353
    %3683 = vmatmul.mubr.bf16.gmra.mrb[0].mxu0 %v352
    %v3684 = vpop.f32.mrb[0].mxu0
    %v3685 = vadd.f32 %v884, %v3684
    %v3686 = vpop.f32.mrb[0].mxu0
    %v3687 = vadd.f32 %v888, %v3686
    %v3688 = vpop.f32.mrb[0].mxu0
    %v3689 = vpop.f32.mrb[0].mxu0
    %3690 = vdwg.mxu0
    %3691 = vmatprep.subr.bf16.mxu0 %v2643
    %3692 = vmatpush1.bf16.msra.mxu0 %v2642
    %3693 = vmatprep.subr.bf16.mxu0 %v2662
    %3694 = vmatpush1.bf16.msra.mxu0 %v2661
    %3695 = vmatprep.subr.bf16.mxu0 %v2681
    %3696 = vmatpush1.bf16.msra.mxu0 %v2680
    %3697 = vmatprep.subr.bf16.mxu0 %v2700
    %3698 = vmatpush1.bf16.msra.mxu0 %v2699
    %3699 = vmatprep.subr.bf16.mxu0 %v2719
    %3700 = vmatpush1.bf16.msra.mxu0 %v2718
    %3701 = vmatprep.subr.bf16.mxu0 %v2738
    %3702 = vmatpush1.bf16.msra.mxu0 %v2737
    %3703 = vmatprep.subr.bf16.mxu0 %v2757
    %3704 = vmatpush1.bf16.msra.mxu0 %v2756
    %3705 = vmatprep.subr.bf16.mxu0 %v2776
    %3706 = vmatpush1.bf16.msra.mxu0 %v2775
    %3707 = vmatprep.subr.bf16.mxu0 0
    %3708 = vmatpush1.bf16.msra.mxu0 0
    %3709 = vmatprep.subr.bf16.mxu0 0
    %3710 = vmatpush1.bf16.msra.mxu0 0
    %3711 = vmatprep.subr.bf16.mxu0 0
    %3712 = vmatpush1.bf16.msra.mxu0 0
    %3713 = vmatprep.subr.bf16.mxu0 0
    %3714 = vmatpush1.bf16.msra.mxu0 0
    %3715 = vmatprep.subr.bf16.mxu0 0
    %3716 = vmatpush1.bf16.msra.mxu0 0
    %3717 = vmatprep.subr.bf16.mxu0 0
    %3718 = vmatpush1.bf16.msra.mxu0 0
    %3719 = vmatprep.subr.bf16.mxu0 0
    %3720 = vmatpush1.bf16.msra.mxu0 0
    %3721 = vmatprep.subr.bf16.mxu0 0
    %3722 = vmatpush1.bf16.msra.mxu0 0
    %3723 = vmatprep.mubr.bf16.mxu0 0
    %3724 = vmatmul.mubr.bf16.gmra.mrb[0].mxu0 %v354
    %v3725 = vpop.f32.mrb[0].mxu0
    %v3726 = vadd.f32 %v3685, %v3725
    %v3727 = vpop.f32.mrb[0].mxu0
    %v3728 = vadd.f32 %v3687, %v3727
    %v3729 = vpop.f32.mrb[0].mxu0
    %v3730 = vpop.f32.mrb[0].mxu0
    %3731 = vdwg.mxu0
    %3732 = vmatprep.subr.bf16.mxu0 %v2341
    %3733 = vmatpush1.bf16.msra.mxu0 %v2340
    %3734 = vmatprep.subr.bf16.mxu0 %v2360
    %3735 = vmatpush1.bf16.msra.mxu0 %v2359
    %3736 = vmatprep.subr.bf16.mxu0 %v2379
    %3737 = vmatpush1.bf16.msra.mxu0 %v2378
    %3738 = vmatprep.subr.bf16.mxu0 %v2398
    %3739 = vmatpush1.bf16.msra.mxu0 %v2397
    %3740 = vmatprep.subr.bf16.mxu0 %v2417
    %3741 = vmatpush1.bf16.msra.mxu0 %v2416
    %3742 = vmatprep.subr.bf16.mxu0 %v2436
    %3743 = vmatpush1.bf16.msra.mxu0 %v2435
    %3744 = vmatprep.subr.bf16.mxu0 %v2455
    %3745 = vmatpush1.bf16.msra.mxu0 %v2454
    %3746 = vmatprep.subr.bf16.mxu0 %v2474
    %3747 = vmatpush1.bf16.msra.mxu0 %v2473
    %3748 = vmatprep.subr.bf16.mxu0 %v2493
    %3749 = vmatpush1.bf16.msra.mxu0 %v2492
    %3750 = vmatprep.subr.bf16.mxu0 %v2512
    %3751 = vmatpush1.bf16.msra.mxu0 %v2511
    %3752 = vmatprep.subr.bf16.mxu0 %v2531
    %3753 = vmatpush1.bf16.msra.mxu0 %v2530
    %3754 = vmatprep.subr.bf16.mxu0 %v2550
    %3755 = vmatpush1.bf16.msra.mxu0 %v2549
    %3756 = vmatprep.subr.bf16.mxu0 %v2569
    %3757 = vmatpush1.bf16.msra.mxu0 %v2568
    %3758 = vmatprep.subr.bf16.mxu0 %v2588
    %3759 = vmatpush1.bf16.msra.mxu0 %v2587
    %3760 = vmatprep.subr.bf16.mxu0 %v2607
    %3761 = vmatpush1.bf16.msra.mxu0 %v2606
    %3762 = vmatprep.subr.bf16.mxu0 %v2626
    %3763 = vmatpush1.bf16.msra.mxu0 %v2625
    %3764 = vmatprep.mubr.bf16.mxu0 %v353
    %3765 = vmatmul.mubr.bf16.gmra.mrb[0].mxu0 %v352
    %v3766 = vpop.f32.mrb[0].mxu0
    %v3767 = vadd.f32 %v892, %v3766
    %v3768 = vpop.f32.mrb[0].mxu0
    %v3769 = vadd.f32 %v896, %v3768
    %v3770 = vpop.f32.mrb[0].mxu0
    %v3771 = vpop.f32.mrb[0].mxu0
    %3772 = vdwg.mxu0
    %3773 = vmatprep.subr.bf16.mxu0 %v2645
    %3774 = vmatpush1.bf16.msra.mxu0 %v2644
    %3775 = vmatprep.subr.bf16.mxu0 %v2664
    %3776 = vmatpush1.bf16.msra.mxu0 %v2663
    %3777 = vmatprep.subr.bf16.mxu0 %v2683
    %3778 = vmatpush1.bf16.msra.mxu0 %v2682
    %3779 = vmatprep.subr.bf16.mxu0 %v2702
    %3780 = vmatpush1.bf16.msra.mxu0 %v2701
    %3781 = vmatprep.subr.bf16.mxu0 %v2721
    %3782 = vmatpush1.bf16.msra.mxu0 %v2720
    %3783 = vmatprep.subr.bf16.mxu0 %v2740
    %3784 = vmatpush1.bf16.msra.mxu0 %v2739
    %3785 = vmatprep.subr.bf16.mxu0 %v2759
    %3786 = vmatpush1.bf16.msra.mxu0 %v2758
    %3787 = vmatprep.subr.bf16.mxu0 %v2778
    %3788 = vmatpush1.bf16.msra.mxu0 %v2777
    %3789 = vmatprep.subr.bf16.mxu0 0
    %3790 = vmatpush1.bf16.msra.mxu0 0
    %3791 = vmatprep.subr.bf16.mxu0 0
    %3792 = vmatpush1.bf16.msra.mxu0 0
    %3793 = vmatprep.subr.bf16.mxu0 0
    %3794 = vmatpush1.bf16.msra.mxu0 0
    %3795 = vmatprep.subr.bf16.mxu0 0
    %3796 = vmatpush1.bf16.msra.mxu0 0
    %3797 = vmatprep.subr.bf16.mxu0 0
    %3798 = vmatpush1.bf16.msra.mxu0 0
    %3799 = vmatprep.subr.bf16.mxu0 0
    %3800 = vmatpush1.bf16.msra.mxu0 0
    %3801 = vmatprep.subr.bf16.mxu0 0
    %3802 = vmatpush1.bf16.msra.mxu0 0
    %3803 = vmatprep.subr.bf16.mxu0 0
    %3804 = vmatpush1.bf16.msra.mxu0 0
    %3805 = vmatprep.mubr.bf16.mxu0 0
    %3806 = vmatmul.mubr.bf16.gmra.mrb[0].mxu0 %v354
    %v3807 = vpop.f32.mrb[0].mxu0
    %v3808 = vadd.f32 %v3767, %v3807
    %v3809 = vpop.f32.mrb[0].mxu0
    %v3810 = vadd.f32 %v3769, %v3809
    %v3811 = vpop.f32.mrb[0].mxu0
    %v3812 = vpop.f32.mrb[0].mxu0
    %3813 = vdwg.mxu0
    %3814 = vmatprep.subr.bf16.mxu0 %v2343
    %3815 = vmatpush1.bf16.msra.mxu0 %v2342
    %3816 = vmatprep.subr.bf16.mxu0 %v2362
    %3817 = vmatpush1.bf16.msra.mxu0 %v2361
    %3818 = vmatprep.subr.bf16.mxu0 %v2381
    %3819 = vmatpush1.bf16.msra.mxu0 %v2380
    %3820 = vmatprep.subr.bf16.mxu0 %v2400
    %3821 = vmatpush1.bf16.msra.mxu0 %v2399
    %3822 = vmatprep.subr.bf16.mxu0 %v2419
    %3823 = vmatpush1.bf16.msra.mxu0 %v2418
    %3824 = vmatprep.subr.bf16.mxu0 %v2438
    %3825 = vmatpush1.bf16.msra.mxu0 %v2437
    %3826 = vmatprep.subr.bf16.mxu0 %v2457
    %3827 = vmatpush1.bf16.msra.mxu0 %v2456
    %3828 = vmatprep.subr.bf16.mxu0 %v2476
    %3829 = vmatpush1.bf16.msra.mxu0 %v2475
    %3830 = vmatprep.subr.bf16.mxu0 %v2495
    %3831 = vmatpush1.bf16.msra.mxu0 %v2494
    %3832 = vmatprep.subr.bf16.mxu0 %v2514
    %3833 = vmatpush1.bf16.msra.mxu0 %v2513
    %3834 = vmatprep.subr.bf16.mxu0 %v2533
    %3835 = vmatpush1.bf16.msra.mxu0 %v2532
    %3836 = vmatprep.subr.bf16.mxu0 %v2552
    %3837 = vmatpush1.bf16.msra.mxu0 %v2551
    %3838 = vmatprep.subr.bf16.mxu0 %v2571
    %3839 = vmatpush1.bf16.msra.mxu0 %v2570
    %3840 = vmatprep.subr.bf16.mxu0 %v2590
    %3841 = vmatpush1.bf16.msra.mxu0 %v2589
    %3842 = vmatprep.subr.bf16.mxu0 %v2609
    %3843 = vmatpush1.bf16.msra.mxu0 %v2608
    %3844 = vmatprep.subr.bf16.mxu0 %v2628
    %3845 = vmatpush1.bf16.msra.mxu0 %v2627
    %3846 = vmatprep.mubr.bf16.mxu0 %v353
    %3847 = vmatmul.mubr.bf16.gmra.mrb[0].mxu0 %v352
    %v3848 = vpop.f32.mrb[0].mxu0
    %v3849 = vadd.f32 %v900, %v3848
    %v3850 = vpop.f32.mrb[0].mxu0
    %v3851 = vadd.f32 %v904, %v3850
    %v3852 = vpop.f32.mrb[0].mxu0
    %v3853 = vpop.f32.mrb[0].mxu0
    %3854 = vdwg.mxu0
    %3855 = vmatprep.subr.bf16.mxu0 %v2647
    %3856 = vmatpush1.bf16.msra.mxu0 %v2646
    %3857 = vmatprep.subr.bf16.mxu0 %v2666
    %3858 = vmatpush1.bf16.msra.mxu0 %v2665
    %3859 = vmatprep.subr.bf16.mxu0 %v2685
    %3860 = vmatpush1.bf16.msra.mxu0 %v2684
    %3861 = vmatprep.subr.bf16.mxu0 %v2704
    %3862 = vmatpush1.bf16.msra.mxu0 %v2703
    %3863 = vmatprep.subr.bf16.mxu0 %v2723
    %3864 = vmatpush1.bf16.msra.mxu0 %v2722
    %3865 = vmatprep.subr.bf16.mxu0 %v2742
    %3866 = vmatpush1.bf16.msra.mxu0 %v2741
    %3867 = vmatprep.subr.bf16.mxu0 %v2761
    %3868 = vmatpush1.bf16.msra.mxu0 %v2760
    %3869 = vmatprep.subr.bf16.mxu0 %v2780
    %3870 = vmatpush1.bf16.msra.mxu0 %v2779
    %3871 = vmatprep.subr.bf16.mxu0 0
    %3872 = vmatpush1.bf16.msra.mxu0 0
    %3873 = vmatprep.subr.bf16.mxu0 0
    %3874 = vmatpush1.bf16.msra.mxu0 0
    %3875 = vmatprep.subr.bf16.mxu0 0
    %3876 = vmatpush1.bf16.msra.mxu0 0
    %3877 = vmatprep.subr.bf16.mxu0 0
    %3878 = vmatpush1.bf16.msra.mxu0 0
    %3879 = vmatprep.subr.bf16.mxu0 0
    %3880 = vmatpush1.bf16.msra.mxu0 0
    %3881 = vmatprep.subr.bf16.mxu0 0
    %3882 = vmatpush1.bf16.msra.mxu0 0
    %3883 = vmatprep.subr.bf16.mxu0 0
    %3884 = vmatpush1.bf16.msra.mxu0 0
    %3885 = vmatprep.subr.bf16.mxu0 0
    %3886 = vmatpush1.bf16.msra.mxu0 0
    %3887 = vmatprep.mubr.bf16.mxu0 0
    %3888 = vmatmul.mubr.bf16.gmra.mrb[0].mxu0 %v354
    %v3889 = vpop.f32.mrb[0].mxu0
    %v3890 = vadd.f32 %v3849, %v3889
    %v3891 = vpop.f32.mrb[0].mxu0
    %v3892 = vadd.f32 %v3851, %v3891
    %v3893 = vpop.f32.mrb[0].mxu0
    %v3894 = vpop.f32.mrb[0].mxu0
    %3895 = vdwg.mxu0
    %3896 = vmatprep.subr.bf16.mxu0 %v2345
    %3897 = vmatpush1.bf16.msra.mxu0 %v2344
    %3898 = vmatprep.subr.bf16.mxu0 %v2364
    %3899 = vmatpush1.bf16.msra.mxu0 %v2363
    %3900 = vmatprep.subr.bf16.mxu0 %v2383
    %3901 = vmatpush1.bf16.msra.mxu0 %v2382
    %3902 = vmatprep.subr.bf16.mxu0 %v2402
    %3903 = vmatpush1.bf16.msra.mxu0 %v2401
    %3904 = vmatprep.subr.bf16.mxu0 %v2421
    %3905 = vmatpush1.bf16.msra.mxu0 %v2420
    %3906 = vmatprep.subr.bf16.mxu0 %v2440
    %3907 = vmatpush1.bf16.msra.mxu0 %v2439
    %3908 = vmatprep.subr.bf16.mxu0 %v2459
    %3909 = vmatpush1.bf16.msra.mxu0 %v2458
    %3910 = vmatprep.subr.bf16.mxu0 %v2478
    %3911 = vmatpush1.bf16.msra.mxu0 %v2477
    %3912 = vmatprep.subr.bf16.mxu0 %v2497
    %3913 = vmatpush1.bf16.msra.mxu0 %v2496
    %3914 = vmatprep.subr.bf16.mxu0 %v2516
    %3915 = vmatpush1.bf16.msra.mxu0 %v2515
    %3916 = vmatprep.subr.bf16.mxu0 %v2535
    %3917 = vmatpush1.bf16.msra.mxu0 %v2534
    %3918 = vmatprep.subr.bf16.mxu0 %v2554
    %3919 = vmatpush1.bf16.msra.mxu0 %v2553
    %3920 = vmatprep.subr.bf16.mxu0 %v2573
    %3921 = vmatpush1.bf16.msra.mxu0 %v2572
    %3922 = vmatprep.subr.bf16.mxu0 %v2592
    %3923 = vmatpush1.bf16.msra.mxu0 %v2591
    %3924 = vmatprep.subr.bf16.mxu0 %v2611
    %3925 = vmatpush1.bf16.msra.mxu0 %v2610
    %3926 = vmatprep.subr.bf16.mxu0 %v2630
    %3927 = vmatpush1.bf16.msra.mxu0 %v2629
    %3928 = vmatprep.mubr.bf16.mxu0 %v353
    %3929 = vmatmul.mubr.bf16.gmra.mrb[0].mxu0 %v352
    %v3930 = vpop.f32.mrb[0].mxu0
    %v3931 = vadd.f32 %v908, %v3930
    %v3932 = vpop.f32.mrb[0].mxu0
    %v3933 = vadd.f32 %v912, %v3932
    %v3934 = vpop.f32.mrb[0].mxu0
    %v3935 = vpop.f32.mrb[0].mxu0
    %3936 = vdwg.mxu0
    %3937 = vmatprep.subr.bf16.mxu0 %v2649
    %3938 = vmatpush1.bf16.msra.mxu0 %v2648
    %3939 = vmatprep.subr.bf16.mxu0 %v2668
    %3940 = vmatpush1.bf16.msra.mxu0 %v2667
    %3941 = vmatprep.subr.bf16.mxu0 %v2687
    %3942 = vmatpush1.bf16.msra.mxu0 %v2686
    %3943 = vmatprep.subr.bf16.mxu0 %v2706
    %3944 = vmatpush1.bf16.msra.mxu0 %v2705
    %3945 = vmatprep.subr.bf16.mxu0 %v2725
    %3946 = vmatpush1.bf16.msra.mxu0 %v2724
    %3947 = vmatprep.subr.bf16.mxu0 %v2744
    %3948 = vmatpush1.bf16.msra.mxu0 %v2743
    %3949 = vmatprep.subr.bf16.mxu0 %v2763
    %3950 = vmatpush1.bf16.msra.mxu0 %v2762
    %3951 = vmatprep.subr.bf16.mxu0 %v2782
    %3952 = vmatpush1.bf16.msra.mxu0 %v2781
    %3953 = vmatprep.subr.bf16.mxu0 0
    %3954 = vmatpush1.bf16.msra.mxu0 0
    %3955 = vmatprep.subr.bf16.mxu0 0
    %3956 = vmatpush1.bf16.msra.mxu0 0
    %3957 = vmatprep.subr.bf16.mxu0 0
    %3958 = vmatpush1.bf16.msra.mxu0 0
    %3959 = vmatprep.subr.bf16.mxu0 0
    %3960 = vmatpush1.bf16.msra.mxu0 0
    %3961 = vmatprep.subr.bf16.mxu0 0
    %3962 = vmatpush1.bf16.msra.mxu0 0
    %3963 = vmatprep.subr.bf16.mxu0 0
    %3964 = vmatpush1.bf16.msra.mxu0 0
    %3965 = vmatprep.subr.bf16.mxu0 0
    %3966 = vmatpush1.bf16.msra.mxu0 0
    %3967 = vmatprep.subr.bf16.mxu0 0
    %3968 = vmatpush1.bf16.msra.mxu0 0
    %3969 = vmatprep.mubr.bf16.mxu0 0
    %3970 = vmatmul.mubr.bf16.gmra.mrb[0].mxu0 %v354
    %v3971 = vpop.f32.mrb[0].mxu0
    %v3972 = vadd.f32 %v3931, %v3971
    %v3973 = vpop.f32.mrb[0].mxu0
    %v3974 = vadd.f32 %v3933, %v3973
    %v3975 = vpop.f32.mrb[0].mxu0
    %v3976 = vpop.f32.mrb[0].mxu0
    %3977 = vdwg.mxu0
    %3978 = vmatprep.subr.bf16.mxu0 0
    %3979 = vmatpush1.bf16.msra.mxu0 %v2346
    %3980 = vmatprep.subr.bf16.mxu0 0
    %3981 = vmatpush1.bf16.msra.mxu0 %v2365
    %3982 = vmatprep.subr.bf16.mxu0 0
    %3983 = vmatpush1.bf16.msra.mxu0 %v2384
    %3984 = vmatprep.subr.bf16.mxu0 0
    %3985 = vmatpush1.bf16.msra.mxu0 %v2403
    %3986 = vmatprep.subr.bf16.mxu0 0
    %3987 = vmatpush1.bf16.msra.mxu0 %v2422
    %3988 = vmatprep.subr.bf16.mxu0 0
    %3989 = vmatpush1.bf16.msra.mxu0 %v2441
    %3990 = vmatprep.subr.bf16.mxu0 0
    %3991 = vmatpush1.bf16.msra.mxu0 %v2460
    %3992 = vmatprep.subr.bf16.mxu0 0
    %3993 = vmatpush1.bf16.msra.mxu0 %v2479
    %3994 = vmatprep.subr.bf16.mxu0 0
    %3995 = vmatpush1.bf16.msra.mxu0 %v2498
    %3996 = vmatprep.subr.bf16.mxu0 0
    %3997 = vmatpush1.bf16.msra.mxu0 %v2517
    %3998 = vmatprep.subr.bf16.mxu0 0
    %3999 = vmatpush1.bf16.msra.mxu0 %v2536
    %4000 = vmatprep.subr.bf16.mxu0 0
    %4001 = vmatpush1.bf16.msra.mxu0 %v2555
    %4002 = vmatprep.subr.bf16.mxu0 0
    %4003 = vmatpush1.bf16.msra.mxu0 %v2574
    %4004 = vmatprep.subr.bf16.mxu0 0
    %4005 = vmatpush1.bf16.msra.mxu0 %v2593
    %4006 = vmatprep.subr.bf16.mxu0 0
    %4007 = vmatpush1.bf16.msra.mxu0 %v2612
    %4008 = vmatprep.subr.bf16.mxu0 0
    %4009 = vmatpush1.bf16.msra.mxu0 %v2631
    %4010 = vmatprep.mubr.bf16.mxu0 %v353
    %4011 = vmatmul.mubr.bf16.gmra.mrb[0].mxu0 %v352
    %v4012 = vpop.f32.mrb[0].mxu0
    %v4013 = vadd.f32 %v916, %v4012
    %v4014 = vpop.f32.mrb[0].mxu0
    %v4015 = vpop.f32.mrb[0].mxu0
    %v4016 = vpop.f32.mrb[0].mxu0
    %4017 = vdwg.mxu0
    %4018 = vmatprep.subr.bf16.mxu0 0
    %4019 = vmatpush1.bf16.msra.mxu0 %v2650
    %4020 = vmatprep.subr.bf16.mxu0 0
    %4021 = vmatpush1.bf16.msra.mxu0 %v2669
    %4022 = vmatprep.subr.bf16.mxu0 0
    %4023 = vmatpush1.bf16.msra.mxu0 %v2688
    %4024 = vmatprep.subr.bf16.mxu0 0
    %4025 = vmatpush1.bf16.msra.mxu0 %v2707
    %4026 = vmatprep.subr.bf16.mxu0 0
    %4027 = vmatpush1.bf16.msra.mxu0 %v2726
    %4028 = vmatprep.subr.bf16.mxu0 0
    %4029 = vmatpush1.bf16.msra.mxu0 %v2745
    %4030 = vmatprep.subr.bf16.mxu0 0
    %4031 = vmatpush1.bf16.msra.mxu0 %v2764
    %4032 = vmatprep.subr.bf16.mxu0 0
    %4033 = vmatpush1.bf16.msra.mxu0 %v2783
    %4034 = vmatprep.subr.bf16.mxu0 0
    %4035 = vmatpush1.bf16.msra.mxu0 0
    %4036 = vmatprep.subr.bf16.mxu0 0
    %4037 = vmatpush1.bf16.msra.mxu0 0
    %4038 = vmatprep.subr.bf16.mxu0 0
    %4039 = vmatpush1.bf16.msra.mxu0 0
    %4040 = vmatprep.subr.bf16.mxu0 0
    %4041 = vmatpush1.bf16.msra.mxu0 0
    %4042 = vmatprep.subr.bf16.mxu0 0
    %4043 = vmatpush1.bf16.msra.mxu0 0
    %4044 = vmatprep.subr.bf16.mxu0 0
    %4045 = vmatpush1.bf16.msra.mxu0 0
    %4046 = vmatprep.subr.bf16.mxu0 0
    %4047 = vmatpush1.bf16.msra.mxu0 0
    %4048 = vmatprep.subr.bf16.mxu0 0
    %4049 = vmatpush1.bf16.msra.mxu0 0
    %4050 = vmatprep.mubr.bf16.mxu0 0
    %4051 = vmatmul.mubr.bf16.gmra.mrb[0].mxu0 %v354
    %v4052 = vpop.f32.mrb[0].mxu0
    %v4053 = vadd.f32 %v4013, %v4052
    %v4054 = vpop.f32.mrb[0].mxu0
    %v4055 = vpop.f32.mrb[0].mxu0
    %v4056 = vpop.f32.mrb[0].mxu0
    %4057 = vdwg.mxu0
    %v4058 = vmax.f32 %v3316, 0.0
    %v4059 = vmax.f32 %v3318, 0.0
    %v4060 = vmax.f32 %v3398, 0.0
    %v4061 = vmax.f32 %v3400, 0.0
    %v4062 = vmax.f32 %v3480, 0.0
    %v4063 = vmax.f32 %v3482, 0.0
    %v4064 = vmax.f32 %v3562, 0.0
    %v4065 = vmax.f32 %v3564, 0.0
    %v4066 = vmax.f32 %v3644, 0.0
    %v4067 = vmax.f32 %v3646, 0.0
    %v4068 = vmax.f32 %v3726, 0.0
    %v4069 = vmax.f32 %v3728, 0.0
    %v4070 = vmax.f32 %v3808, 0.0
    %v4071 = vmax.f32 %v3810, 0.0
    %v4072 = vmax.f32 %v3890, 0.0
    %v4073 = vmax.f32 %v3892, 0.0
    %v4074 = vmax.f32 %v3972, 0.0
    %v4075 = vmax.f32 %v3974, 0.0
    %v4076 = vmax.f32 %v4053, 0.0
    %v4077 = vld [vmem:[#allocation10] sm:$0xff]
    %v4078 = vld [vmem:[#allocation10 + $0x8] sm:$0xff]
    %v4079 = vld [vmem:[#allocation10 + $0x10] sm:$0x7]
    %v4083 = vlaneseq
    %v4084 = vshrl.u32 %v4083, 7
    %v4085 = vsub.s32 0, %v4084
    %v4086 = vrot.slane %v4077, %v4085
    %v4087 = vlaneseq
    %v4088 = vshrl.u32 %v4087, 7
    %v4089 = vsub.s32 1, %v4088
    %v4090 = vrot.slane %v4077, %v4089
    %v4091 = vlaneseq
    %v4092 = vshrl.u32 %v4091, 7
    %v4093 = vsub.s32 2, %v4092
    %v4094 = vrot.slane %v4077, %v4093
    %v4095 = vlaneseq
    %v4096 = vshrl.u32 %v4095, 7
    %v4097 = vsub.s32 3, %v4096
    %v4098 = vrot.slane %v4077, %v4097
    %v4099 = vlaneseq
    %v4100 = vshrl.u32 %v4099, 7
    %v4101 = vsub.s32 4, %v4100
    %v4102 = vrot.slane %v4077, %v4101
    %v4103 = vlaneseq
    %v4104 = vshrl.u32 %v4103, 7
    %v4105 = vsub.s32 5, %v4104
    %v4106 = vrot.slane %v4077, %v4105
    %v4107 = vlaneseq
    %v4108 = vshrl.u32 %v4107, 7
    %v4109 = vsub.s32 6, %v4108
    %v4110 = vrot.slane %v4077, %v4109
    %v4111 = vlaneseq
    %v4112 = vshrl.u32 %v4111, 7
    %v4113 = vsub.s32 7, %v4112
    %v4114 = vrot.slane %v4077, %v4113
    %v4115 = vlaneseq
    %v4116 = vshrl.u32 %v4115, 7
    %v4117 = vsub.s32 0, %v4116
    %v4118 = vrot.slane %v4078, %v4117
    %v4119 = vlaneseq
    %v4120 = vshrl.u32 %v4119, 7
    %v4121 = vsub.s32 1, %v4120
    %v4122 = vrot.slane %v4078, %v4121
    %v4123 = vlaneseq
    %v4124 = vshrl.u32 %v4123, 7
    %v4125 = vsub.s32 2, %v4124
    %v4126 = vrot.slane %v4078, %v4125
    %v4127 = vlaneseq
    %v4128 = vshrl.u32 %v4127, 7
    %v4129 = vsub.s32 3, %v4128
    %v4130 = vrot.slane %v4078, %v4129
    %v4131 = vlaneseq
    %v4132 = vshrl.u32 %v4131, 7
    %v4133 = vsub.s32 4, %v4132
    %v4134 = vrot.slane %v4078, %v4133
    %v4135 = vlaneseq
    %v4136 = vshrl.u32 %v4135, 7
    %v4137 = vsub.s32 5, %v4136
    %v4138 = vrot.slane %v4078, %v4137
    %v4139 = vlaneseq
    %v4140 = vshrl.u32 %v4139, 7
    %v4141 = vsub.s32 6, %v4140
    %v4142 = vrot.slane %v4078, %v4141
    %v4143 = vlaneseq
    %v4144 = vshrl.u32 %v4143, 7
    %v4145 = vsub.s32 7, %v4144
    %v4146 = vrot.slane %v4078, %v4145
    %v4147 = vlaneseq
    %v4148 = vshrl.u32 %v4147, 7
    %v4149 = vsub.s32 0, %v4148
    %v4150 = vrot.slane %v4079, %v4149
    %v4151 = vlaneseq
    %v4152 = vshrl.u32 %v4151, 7
    %v4153 = vsub.s32 1, %v4152
    %v4154 = vrot.slane %v4079, %v4153
    %v4155 = vlaneseq
    %v4156 = vshrl.u32 %v4155, 7
    %v4157 = vsub.s32 2, %v4156
    %v4158 = vrot.slane %v4079, %v4157
    %v4178 = vmul.f32 %v4058, %v4086
    %v4179 = vmul.f32 %v4059, %v4090
    %v4180 = vmul.f32 %v4060, %v4094
    %v4181 = vmul.f32 %v4061, %v4098
    %v4182 = vmul.f32 %v4062, %v4102
    %v4183 = vmul.f32 %v4063, %v4106
    %v4184 = vmul.f32 %v4064, %v4110
    %v4185 = vmul.f32 %v4065, %v4114
    %v4186 = vmul.f32 %v4066, %v4118
    %v4187 = vmul.f32 %v4067, %v4122
    %v4188 = vmul.f32 %v4068, %v4126
    %v4189 = vmul.f32 %v4069, %v4130
    %v4190 = vmul.f32 %v4070, %v4134
    %v4191 = vmul.f32 %v4071, %v4138
    %v4192 = vmul.f32 %v4072, %v4142
    %v4193 = vmul.f32 %v4073, %v4146
    %v4194 = vmul.f32 %v4074, %v4150
    %v4195 = vmul.f32 %v4075, %v4154
    %v4196 = vmul.f32 %v4076, %v4158
    %v4197 = vadd.f32 %v4178, %v4179
    %v4198 = vadd.f32 %v4197, %v4180
    %v4199 = vadd.f32 %v4198, %v4181
    %v4200 = vadd.f32 %v4199, %v4182
    %v4201 = vadd.f32 %v4200, %v4183
    %v4202 = vadd.f32 %v4201, %v4184
    %v4203 = vadd.f32 %v4202, %v4185
    %v4204 = vadd.f32 %v4203, %v4186
    %v4205 = vadd.f32 %v4204, %v4187
    %v4206 = vadd.f32 %v4205, %v4188
    %v4207 = vadd.f32 %v4206, %v4189
    %v4208 = vadd.f32 %v4207, %v4190
    %v4209 = vadd.f32 %v4208, %v4191
    %v4210 = vadd.f32 %v4209, %v4192
    %v4211 = vadd.f32 %v4210, %v4193
    %v4212 = vadd.f32 %v4211, %v4194
    %v4213 = vadd.f32 %v4212, %v4195
    %v4214 = vadd.f32 %v4213, %v4196
    %4215 = vadd.xlane.f32.xlu0 %v4214
    %v4216 = vpop.xlane.xlu0 %4215
    %s4217 = sld [smem:[#allocation2]]
    %v4218 = vstv %s4217
    %v4219 = vadd.f32 %v4216, %v4218
    %vm4220 = vcmask 7168
    %4221 = vst.msk [vmem:[%s7] sm:$0xff] %vm4220, %v4219
    // Predicated region
    $region50: #{critic_forward.1} parent=1 // pred_check
      _
    $region51: #{critic_forward.1} parent=1 // pred_check_branch
      %4223 = sbr.rel (0) target = $region53
    $region52: #{critic_forward.1} parent=1 // pred_region
      _
    $region53: #{critic_forward.1} parent=1 // pred_fallthru
      _
    // Predicated region
    $region54: #{critic_forward.1} parent=1 // pred_check
      _
    $region55: #{critic_forward.1} parent=1 // pred_check_branch
      %4225 = sbr.rel (0) target = $region57
    $region56: #{critic_forward.1} parent=1 // pred_region
      _
    $region57: #{critic_forward.1} parent=1 // pred_fallthru
      _
    %4226 = vsyncpa [#allocation4], 1
    %4227 = vsyncpa [#allocation6], 1
    %4228 = vsyncpa [#allocation9], 1

</llo_original>
